<compile_context>
chip_gen: v6e
topology: v6e:2x2x1
jax: 0.10.0
libtpu: 0.0.40
codegen_flags: <defaults>
</compile_context>

<pallas_src>
import functools

import jax
import jax.numpy as jnp
import numpy as np
from jax.experimental import pallas as pl
from jax.experimental.pallas import tpu as pltpu


def _residual_attention_kernel(
    x_ref,        # (L, D)   input block (batch dim squeezed), input dtype
    wqkv_ref,     # (3D, D)  in_proj weight, PyTorch layout, bf16, q-rows pre-scaled
    bqkv_ref,     # (1, 3D)  f32, q-part pre-scaled
    wo_ref,       # (D, D)   out_proj weight, PyTorch layout, bf16
    bo_ref,       # (1, D)   f32
    g1_ref,       # (1, D)   ln_1 gamma (f32)
    b1_ref,       # (1, D)   ln_1 beta  (f32)
    g2_ref,       # (1, D)   ln_2 gamma (f32)
    b2_ref,       # (1, D)   ln_2 beta  (f32)
    wfc_ref,      # (4D, D)  c_fc weight, PyTorch layout, bf16
    bfc_ref,      # (1, 4D)  f32
    wproj_ref,    # (D, 4D)  c_proj weight, PyTorch layout, bf16
    bproj_ref,    # (1, D)   f32
    o_ref,        # (L, D)   output block
    *,
    d_model: int,
    n_head: int,
    eps: float = 1e-5,
):
    D = d_model
    H = n_head
    hd = D // H
    L = x_ref.shape[0]

    def matmul_t(a_f32, w_ref):
        # y = a @ W.T with W in PyTorch (out, in) layout: contract last dims.
        # bf16 operands on the MXU, f32 accumulation.
        return jax.lax.dot_general(
            a_f32.astype(jnp.bfloat16),
            w_ref[...],
            dimension_numbers=(((1,), (1,)), ((), ())),
            preferred_element_type=jnp.float32,
        )

    def layer_norm(v, g_ref, b_ref):
        # fp32 LayerNorm (matches the fp16-safe LayerNorm subclass).
        mu = jnp.mean(v, axis=-1, keepdims=True)
        var = jnp.mean(jnp.square(v - mu), axis=-1, keepdims=True)
        return (v - mu) * jax.lax.rsqrt(var + eps) * g_ref[...] + b_ref[...]

    x = x_ref[...].astype(jnp.float32)                      # (L, D)

    # ---- LayerNorm 1 ----
    x1 = layer_norm(x, g1_ref, b1_ref)

    # ---- Multi-head self-attention (attn_mask = None) ----
    qkv = matmul_t(x1, wqkv_ref) + bqkv_ref[...]            # (L, 3D) f32
    # Head-batched layout: (L, 3D) -> (L, 3H, hd) -> (3H, L, hd), heads leading.
    qkv_h = pltpu.einshape(
        "lhd->hld", qkv.astype(jnp.bfloat16).reshape(L, 3 * H, hd)
    )                                                       # (3H, L, hd) bf16
    q = qkv_h[:H]                                           # (H, L, hd), pre-scaled
    k = qkv_h[H:2 * H]
    v = qkv_h[2 * H:]

    # Scores (scale already folded into q projection in the wrapper).
    s = jnp.einsum("hqd,hkd->hqk", q, k,
                   preferred_element_type=jnp.float32)      # (H, L, L) f32
    s = s - jnp.max(s, axis=-1, keepdims=True)
    p = jnp.exp(s)                                          # unnormalized probs
    denom = jnp.sum(p, axis=-1, keepdims=True)              # (H, L, 1)

    ctx = jnp.einsum("hqk,hkd->hqd", p.astype(jnp.bfloat16), v,
                     preferred_element_type=jnp.float32)    # (H, L, hd) f32
    # Deferred softmax normalization: scale ctx (L*hd) instead of p (L*L).
    ctx = ctx * pl.reciprocal(denom, approx=True)
    ctx = pltpu.einshape("hld->lhd", ctx).reshape(L, D)     # (L, D) f32

    attn_out = matmul_t(ctx, wo_ref) + bo_ref[...]
    x = x + attn_out                                        # residual 1

    # ---- LayerNorm 2 ----
    x2 = layer_norm(x, g2_ref, b2_ref)

    # ---- MLP: c_fc -> QuickGELU -> c_proj ----
    h = matmul_t(x2, wfc_ref) + bfc_ref[...]                # (L, 4D) f32
    h = h * jax.nn.sigmoid(1.702 * h)                       # QuickGELU (f32)
    mlp_out = matmul_t(h, wproj_ref) + bproj_ref[...]

    o_ref[...] = (x + mlp_out).astype(o_ref.dtype)          # residual 2


def residual_attention_block(x_lnd, params, *, d_model: int, n_head: int):
    """x_lnd: (L, N, D) like PyTorch nn.MultiheadAttention input."""
    L, N, D = x_lnd.shape
    assert D == d_model
    H = n_head
    hd = D // H
    scale = 1.0 / float(np.sqrt(hd))

    # NOTE: in production this weight prep (scale fold + bf16 cast) would be
    # done once at load time, not per call.
    q_scale = jnp.concatenate(
        [jnp.full((D,), scale, jnp.float32), jnp.ones((2 * D,), jnp.float32)]
    )
    wqkv = (params["in_proj_weight"].astype(jnp.float32) * q_scale[:, None]
            ).astype(jnp.bfloat16)                          # (3D, D)
    bqkv = (params["in_proj_bias"].astype(jnp.float32) * q_scale).reshape(1, 3 * D)

    wo = params["out_proj_weight"].astype(jnp.bfloat16)     # (D, D)
    bo = params["out_proj_bias"].astype(jnp.float32).reshape(1, D)
    wfc = params["c_fc_weight"].astype(jnp.bfloat16)        # (4D, D)
    bfc = params["c_fc_bias"].astype(jnp.float32).reshape(1, 4 * D)
    wproj = params["c_proj_weight"].astype(jnp.bfloat16)    # (D, 4D)
    bproj = params["c_proj_bias"].astype(jnp.float32).reshape(1, D)
    g1 = params["ln1_gamma"].astype(jnp.float32).reshape(1, D)
    b1 = params["ln1_beta"].astype(jnp.float32).reshape(1, D)
    g2 = params["ln2_gamma"].astype(jnp.float32).reshape(1, D)
    b2 = params["ln2_beta"].astype(jnp.float32).reshape(1, D)

    x_nld = jnp.transpose(x_lnd, (1, 0, 2))                 # (N, L, D)

    # Constant index_maps -> weights stay resident in VMEM across the batch grid.
    full = lambda arr: pl.BlockSpec(arr.shape, lambda n: (0,) * arr.ndim)

    kernel = functools.partial(
        _residual_attention_kernel, d_model=d_model, n_head=n_head
    )

    out_nld = pl.pallas_call(
        kernel,
        out_shape=jax.ShapeDtypeStruct((N, L, D), x_lnd.dtype),
        grid=(N,),
        in_specs=[
            pl.BlockSpec((None, L, D), lambda n: (n, 0, 0)),  # x (batch squeezed)
            full(wqkv), full(bqkv),
            full(wo), full(bo),
            full(g1), full(b1),
            full(g2), full(b2),
            full(wfc), full(bfc),
            full(wproj), full(bproj),
        ],
        out_specs=pl.BlockSpec((None, L, D), lambda n: (n, 0, 0)),
        compiler_params=pltpu.CompilerParams(
            dimension_semantics=("parallel",),
            vmem_limit_bytes=48 * 1024 * 1024,
        ),
    )(x_nld, wqkv, bqkv, wo, bo, g1, b1, g2, b2, wfc, bfc, wproj, bproj)

    return jnp.transpose(out_nld, (1, 0, 2))                # back to (L, N, D)


# ---------------- pure-JAX reference (for correctness check) ----------------
def _reference(x_lnd, params, *, d_model, n_head, eps=1e-5):
    def ln(x, g, b):
        mu = jnp.mean(x, axis=-1, keepdims=True)
        var = jnp.mean((x - mu) ** 2, axis=-1, keepdims=True)
        return (x - mu) * jax.lax.rsqrt(var + eps) * g + b

    L, N, D = x_lnd.shape
    hd = d_model // n_head
    x = x_lnd.astype(jnp.float32)

    x1 = ln(x, params["ln1_gamma"], params["ln1_beta"])
    qkv = x1 @ params["in_proj_weight"].T + params["in_proj_bias"]
    q, k, v = jnp.split(qkv, 3, axis=-1)

    def heads(t):  # (L, N, D) -> (N, H, L, hd)
        return jnp.transpose(t.reshape(L, N, n_head, hd), (1, 2, 0, 3))

    qh, kh, vh = heads(q), heads(k), heads(v)
    s = jnp.einsum("bhqd,bhkd->bhqk", qh, kh) / np.sqrt(hd)
    p = jax.nn.softmax(s, axis=-1)
    ctx = jnp.einsum("bhqk,bhkd->bhqd", p, vh)              # (N, H, L, hd)
    ctx = jnp.transpose(ctx, (2, 0, 1, 3)).reshape(L, N, D)
    attn = ctx @ params["out_proj_weight"].T + params["out_proj_bias"]
    x = x + attn

    x2 = ln(x, params["ln2_gamma"], params["ln2_beta"])
    h = x2 @ params["c_fc_weight"].T + params["c_fc_bias"]
    h = h * jax.nn.sigmoid(1.702 * h)
    mlp = h @ params["c_proj_weight"].T + params["c_proj_bias"]
    return x + mlp


if __name__ == "__main__":
    # Small, tile-friendly demo config: head_dim == 128 keeps all in-kernel
    # reshapes aligned to lane boundaries.
    d_model, n_head = 256, 2
    L, N = 8, 2

    key = jax.random.PRNGKey(0)
    ks = jax.random.split(key, 8)
    params = {
        "in_proj_weight": 0.05 * jax.random.normal(ks[0], (3 * d_model, d_model), jnp.float32),
        "in_proj_bias": 0.01 * jax.random.normal(ks[1], (3 * d_model,), jnp.float32),
        "out_proj_weight": 0.05 * jax.random.normal(ks[2], (d_model, d_model), jnp.float32),
        "out_proj_bias": 0.01 * jax.random.normal(ks[3], (d_model,), jnp.float32),
        "ln1_gamma": jnp.ones((d_model,), jnp.float32),
        "ln1_beta": jnp.zeros((d_model,), jnp.float32),
        "ln2_gamma": jnp.ones((d_model,), jnp.float32),
        "ln2_beta": jnp.zeros((d_model,), jnp.float32),
        "c_fc_weight": 0.05 * jax.random.normal(ks[4], (4 * d_model, d_model), jnp.float32),
        "c_fc_bias": 0.01 * jax.random.normal(ks[5], (4 * d_model,), jnp.float32),
        "c_proj_weight": 0.05 * jax.random.normal(ks[6], (d_model, 4 * d_model), jnp.float32),
        "c_proj_bias": 0.01 * jax.random.normal(ks[7], (d_model,), jnp.float32),
    }

    x = jax.random.normal(jax.random.PRNGKey(42), (L, N, d_model), jnp.float32)

    out = residual_attention_block(x, params, d_model=d_model, n_head=n_head)
    out = jax.block_until_ready(out)

    ref = _reference(x, params, d_model=d_model, n_head=n_head)
    # bf16 matmul operands (f32 accumulation) + approx reciprocal -> looser tol.
    np.testing.assert_allclose(np.asarray(out), np.asarray(ref), rtol=3e-2, atol=3e-2)

    print("KERNEL_OK")
</pallas_src>

<mosaic_0001>
module attributes {stable_mosaic.version = 11 : i64} {
  func.func @_residual_attention_kernel(%arg0: i32, %arg1: memref<1x8x256xf32, #tpu.memory_space<vmem>>, %arg2: memref<768x256xbf16, #tpu.memory_space<vmem>>, %arg3: memref<1x768xf32, #tpu.memory_space<vmem>>, %arg4: memref<256x256xbf16, #tpu.memory_space<vmem>>, %arg5: memref<1x256xf32, #tpu.memory_space<vmem>>, %arg6: memref<1x256xf32, #tpu.memory_space<vmem>>, %arg7: memref<1x256xf32, #tpu.memory_space<vmem>>, %arg8: memref<1x256xf32, #tpu.memory_space<vmem>>, %arg9: memref<1x256xf32, #tpu.memory_space<vmem>>, %arg10: memref<1024x256xbf16, #tpu.memory_space<vmem>>, %arg11: memref<1x1024xf32, #tpu.memory_space<vmem>>, %arg12: memref<256x1024xbf16, #tpu.memory_space<vmem>>, %arg13: memref<1x256xf32, #tpu.memory_space<vmem>>, %arg14: memref<1x8x256xf32, #tpu.memory_space<vmem>>) attributes {dimension_semantics = [#tpu.dimension_semantics<parallel>], iteration_bounds = array<i64: 2>, scalar_prefetch = 0 : i64, scratch_operands = 0 : i64, tpu.core_type = #tpu.core_type<tc>, window_params = [{transform_indices = @transform_0, window_bounds = array<i64: 1, 8, 256>}, {pipeline_mode = #tpu.pipeline_mode<synchronous>, transform_indices = @transform_1, window_bounds = array<i64: 768, 256>}, {pipeline_mode = #tpu.pipeline_mode<synchronous>, transform_indices = @transform_2, window_bounds = array<i64: 1, 768>}, {pipeline_mode = #tpu.pipeline_mode<synchronous>, transform_indices = @transform_3, window_bounds = array<i64: 256, 256>}, {pipeline_mode = #tpu.pipeline_mode<synchronous>, transform_indices = @transform_4, window_bounds = array<i64: 1, 256>}, {pipeline_mode = #tpu.pipeline_mode<synchronous>, transform_indices = @transform_5, window_bounds = array<i64: 1, 256>}, {pipeline_mode = #tpu.pipeline_mode<synchronous>, transform_indices = @transform_6, window_bounds = array<i64: 1, 256>}, {pipeline_mode = #tpu.pipeline_mode<synchronous>, transform_indices = @transform_7, window_bounds = array<i64: 1, 256>}, {pipeline_mode = #tpu.pipeline_mode<synchronous>, transform_indices = @transform_8, window_bounds = array<i64: 1, 256>}, {pipeline_mode = #tpu.pipeline_mode<synchronous>, transform_indices = @transform_9, window_bounds = array<i64: 1024, 256>}, {pipeline_mode = #tpu.pipeline_mode<synchronous>, transform_indices = @transform_10, window_bounds = array<i64: 1, 1024>}, {pipeline_mode = #tpu.pipeline_mode<synchronous>, transform_indices = @transform_11, window_bounds = array<i64: 256, 1024>}, {pipeline_mode = #tpu.pipeline_mode<synchronous>, transform_indices = @transform_12, window_bounds = array<i64: 1, 256>}, {transform_indices = @transform_13, window_bounds = array<i64: 1, 8, 256>}]} {
    %c0 = arith.constant 0 : index
    %c0_0 = arith.constant 0 : index
    %c0_1 = arith.constant 0 : index
    %0 = vector.load %arg1[%c0, %c0_0, %c0_1] : memref<1x8x256xf32, #tpu.memory_space<vmem>>, vector<1x8x256xf32>
    %1 = vector.shape_cast %0 : vector<1x8x256xf32> to vector<8x256xf32>
    %cst = arith.constant dense<0.000000e+00> : vector<8xf32>
    %2 = vector.multi_reduction <add>, %1, %cst [1] : vector<8x256xf32> to vector<8xf32>
    %3 = vector.shape_cast %2 : vector<8xf32> to vector<8x1xf32>
    %cst_2 = arith.constant 2.560000e+02 : f32
    %4 = vector.broadcast %cst_2 : f32 to vector<8x1xf32>
    %5 = arith.divf %3, %4 : vector<8x1xf32>
    %6 = vector.broadcast %5 : vector<8x1xf32> to vector<8x256xf32>
    %7 = arith.subf %1, %6 : vector<8x256xf32>
    %8 = arith.mulf %7, %7 : vector<8x256xf32>
    %cst_3 = arith.constant dense<0.000000e+00> : vector<8xf32>
    %9 = vector.multi_reduction <add>, %8, %cst_3 [1] : vector<8x256xf32> to vector<8xf32>
    %10 = vector.shape_cast %9 : vector<8xf32> to vector<8x1xf32>
    %cst_4 = arith.constant 2.560000e+02 : f32
    %11 = vector.broadcast %cst_4 : f32 to vector<8x1xf32>
    %12 = arith.divf %10, %11 : vector<8x1xf32>
    %13 = vector.broadcast %5 : vector<8x1xf32> to vector<8x256xf32>
    %14 = arith.subf %1, %13 : vector<8x256xf32>
    %cst_5 = arith.constant 9.99999974E-6 : f32
    %15 = vector.broadcast %cst_5 : f32 to vector<8x1xf32>
    %16 = arith.addf %12, %15 : vector<8x1xf32>
    %17 = math.rsqrt %16 : vector<8x1xf32>
    %18 = vector.broadcast %17 : vector<8x1xf32> to vector<8x256xf32>
    %19 = arith.mulf %14, %18 : vector<8x256xf32>
    %c0_6 = arith.constant 0 : index
    %c0_7 = arith.constant 0 : index
    %20 = vector.load %arg6[%c0_6, %c0_7] : memref<1x256xf32, #tpu.memory_space<vmem>>, vector<1x256xf32>
    %21 = vector.broadcast %20 : vector<1x256xf32> to vector<8x256xf32>
    %22 = arith.mulf %19, %21 : vector<8x256xf32>
    %c0_8 = arith.constant 0 : index
    %c0_9 = arith.constant 0 : index
    %23 = vector.load %arg7[%c0_8, %c0_9] : memref<1x256xf32, #tpu.memory_space<vmem>>, vector<1x256xf32>
    %24 = vector.broadcast %23 : vector<1x256xf32> to vector<8x256xf32>
    %25 = arith.addf %22, %24 : vector<8x256xf32>
    %26 = arith.truncf %25 : vector<8x256xf32> to vector<8x256xbf16>
    %c0_10 = arith.constant 0 : index
    %c0_11 = arith.constant 0 : index
    %27 = vector.load %arg2[%c0_10, %c0_11] : memref<768x256xbf16, #tpu.memory_space<vmem>>, vector<768x256xbf16>
    %cst_12 = arith.constant dense<0.000000e+00> : vector<8x768xf32>
    %28 = tpu.matmul %26, %27, %cst_12 {dimension_numbers = #tpu.dot_dimension_numbers<[1], [1], [0], [0], [0, 0, 1, 0], [], []>} : vector<8x256xbf16>, vector<768x256xbf16>, vector<8x768xf32> -> vector<8x768xf32>
    %c0_13 = arith.constant 0 : index
    %c0_14 = arith.constant 0 : index
    %29 = vector.load %arg3[%c0_13, %c0_14] : memref<1x768xf32, #tpu.memory_space<vmem>>, vector<1x768xf32>
    %30 = vector.broadcast %29 : vector<1x768xf32> to vector<8x768xf32>
    %31 = arith.addf %28, %30 : vector<8x768xf32>
    %32 = arith.truncf %31 : vector<8x768xf32> to vector<8x768xbf16>
    %33 = vector.shape_cast %32 : vector<8x768xbf16> to vector<8x6x128xbf16>
    %34 = tpu.transpose %33, [1, 0, 2] : vector<8x6x128xbf16> -> vector<6x8x128xbf16>
    %35 = vector.extract_strided_slice %34 {offsets = [0, 0, 0], sizes = [2, 8, 128], strides = [1, 1, 1]} : vector<6x8x128xbf16> to vector<2x8x128xbf16>
    %36 = vector.extract_strided_slice %34 {offsets = [2, 0, 0], sizes = [2, 8, 128], strides = [1, 1, 1]} : vector<6x8x128xbf16> to vector<2x8x128xbf16>
    %37 = vector.extract_strided_slice %34 {offsets = [4, 0, 0], sizes = [2, 8, 128], strides = [1, 1, 1]} : vector<6x8x128xbf16> to vector<2x8x128xbf16>
    "tpu.trace_start"() <{level = 10 : i32, message = "hqd,hkd->hqk"}> : () -> ()
    %cst_15 = arith.constant dense<0.000000e+00> : vector<2x8x8xf32>
    %38 = tpu.matmul %35, %36, %cst_15 {dimension_numbers = #tpu.dot_dimension_numbers<[2], [2], [1], [1], [0, 0, 0, 1, 1, 1], [0], [0]>} : vector<2x8x128xbf16>, vector<2x8x128xbf16>, vector<2x8x8xf32> -> vector<2x8x8xf32>
    "tpu.trace_stop"() : () -> ()
    %cst_16 = arith.constant dense<0xFF800000> : vector<2x8xf32>
    %39 = vector.multi_reduction <maximumf>, %38, %cst_16 [2] : vector<2x8x8xf32> to vector<2x8xf32>
    %40 = vector.shape_cast %39 : vector<2x8xf32> to vector<2x8x1xf32>
    %41 = vector.broadcast %40 : vector<2x8x1xf32> to vector<2x8x8xf32>
    %42 = arith.subf %38, %41 : vector<2x8x8xf32>
    %43 = math.exp %42 : vector<2x8x8xf32>
    %cst_17 = arith.constant dense<0.000000e+00> : vector<2x8xf32>
    %44 = vector.multi_reduction <add>, %43, %cst_17 [2] : vector<2x8x8xf32> to vector<2x8xf32>
    %45 = vector.shape_cast %44 : vector<2x8xf32> to vector<2x8x1xf32>
    %46 = arith.truncf %43 : vector<2x8x8xf32> to vector<2x8x8xbf16>
    "tpu.trace_start"() <{level = 10 : i32, message = "hqk,hkd->hqd"}> : () -> ()
    %cst_18 = arith.constant dense<0.000000e+00> : vector<2x8x128xf32>
    %47 = tpu.matmul %46, %37, %cst_18 {dimension_numbers = #tpu.dot_dimension_numbers<[2], [1], [1], [2], [0, 0, 0, 1, 1, 2], [0], [0]>} : vector<2x8x8xbf16>, vector<2x8x128xbf16>, vector<2x8x128xf32> -> vector<2x8x128xf32>
    "tpu.trace_stop"() : () -> ()
    %48 = tpu.reciprocal %45 {approx = true} : vector<2x8x1xf32> -> vector<2x8x1xf32>
    %49 = vector.broadcast %48 : vector<2x8x1xf32> to vector<2x8x128xf32>
    %50 = arith.mulf %47, %49 : vector<2x8x128xf32>
    %51 = tpu.transpose %50, [1, 0, 2] : vector<2x8x128xf32> -> vector<8x2x128xf32>
    %52 = vector.shape_cast %51 : vector<8x2x128xf32> to vector<8x256xf32>
    %53 = arith.truncf %52 : vector<8x256xf32> to vector<8x256xbf16>
    %c0_19 = arith.constant 0 : index
    %c0_20 = arith.constant 0 : index
    %54 = vector.load %arg4[%c0_19, %c0_20] : memref<256x256xbf16, #tpu.memory_space<vmem>>, vector<256x256xbf16>
    %cst_21 = arith.constant dense<0.000000e+00> : vector<8x256xf32>
    %55 = tpu.matmul %53, %54, %cst_21 {dimension_numbers = #tpu.dot_dimension_numbers<[1], [1], [0], [0], [0, 0, 1, 0], [], []>} : vector<8x256xbf16>, vector<256x256xbf16>, vector<8x256xf32> -> vector<8x256xf32>
    %c0_22 = arith.constant 0 : index
    %c0_23 = arith.constant 0 : index
    %56 = vector.load %arg5[%c0_22, %c0_23] : memref<1x256xf32, #tpu.memory_space<vmem>>, vector<1x256xf32>
    %57 = vector.broadcast %56 : vector<1x256xf32> to vector<8x256xf32>
    %58 = arith.addf %55, %57 : vector<8x256xf32>
    %59 = arith.addf %1, %58 : vector<8x256xf32>
    %cst_24 = arith.constant dense<0.000000e+00> : vector<8xf32>
    %60 = vector.multi_reduction <add>, %59, %cst_24 [1] : vector<8x256xf32> to vector<8xf32>
    %61 = vector.shape_cast %60 : vector<8xf32> to vector<8x1xf32>
    %cst_25 = arith.constant 2.560000e+02 : f32
    %62 = vector.broadcast %cst_25 : f32 to vector<8x1xf32>
    %63 = arith.divf %61, %62 : vector<8x1xf32>
    %64 = vector.broadcast %63 : vector<8x1xf32> to vector<8x256xf32>
    %65 = arith.subf %59, %64 : vector<8x256xf32>
    %66 = arith.mulf %65, %65 : vector<8x256xf32>
    %cst_26 = arith.constant dense<0.000000e+00> : vector<8xf32>
    %67 = vector.multi_reduction <add>, %66, %cst_26 [1] : vector<8x256xf32> to vector<8xf32>
    %68 = vector.shape_cast %67 : vector<8xf32> to vector<8x1xf32>
    %cst_27 = arith.constant 2.560000e+02 : f32
    %69 = vector.broadcast %cst_27 : f32 to vector<8x1xf32>
    %70 = arith.divf %68, %69 : vector<8x1xf32>
    %71 = vector.broadcast %63 : vector<8x1xf32> to vector<8x256xf32>
    %72 = arith.subf %59, %71 : vector<8x256xf32>
    %cst_28 = arith.constant 9.99999974E-6 : f32
    %73 = vector.broadcast %cst_28 : f32 to vector<8x1xf32>
    %74 = arith.addf %70, %73 : vector<8x1xf32>
    %75 = math.rsqrt %74 : vector<8x1xf32>
    %76 = vector.broadcast %75 : vector<8x1xf32> to vector<8x256xf32>
    %77 = arith.mulf %72, %76 : vector<8x256xf32>
    %c0_29 = arith.constant 0 : index
    %c0_30 = arith.constant 0 : index
    %78 = vector.load %arg8[%c0_29, %c0_30] : memref<1x256xf32, #tpu.memory_space<vmem>>, vector<1x256xf32>
    %79 = vector.broadcast %78 : vector<1x256xf32> to vector<8x256xf32>
    %80 = arith.mulf %77, %79 : vector<8x256xf32>
    %c0_31 = arith.constant 0 : index
    %c0_32 = arith.constant 0 : index
    %81 = vector.load %arg9[%c0_31, %c0_32] : memref<1x256xf32, #tpu.memory_space<vmem>>, vector<1x256xf32>
    %82 = vector.broadcast %81 : vector<1x256xf32> to vector<8x256xf32>
    %83 = arith.addf %80, %82 : vector<8x256xf32>
    %84 = arith.truncf %83 : vector<8x256xf32> to vector<8x256xbf16>
    %c0_33 = arith.constant 0 : index
    %c0_34 = arith.constant 0 : index
    %85 = vector.load %arg10[%c0_33, %c0_34] : memref<1024x256xbf16, #tpu.memory_space<vmem>>, vector<1024x256xbf16>
    %cst_35 = arith.constant dense<0.000000e+00> : vector<8x1024xf32>
    %86 = tpu.matmul %84, %85, %cst_35 {dimension_numbers = #tpu.dot_dimension_numbers<[1], [1], [0], [0], [0, 0, 1, 0], [], []>} : vector<8x256xbf16>, vector<1024x256xbf16>, vector<8x1024xf32> -> vector<8x1024xf32>
    %c0_36 = arith.constant 0 : index
    %c0_37 = arith.constant 0 : index
    %87 = vector.load %arg11[%c0_36, %c0_37] : memref<1x1024xf32, #tpu.memory_space<vmem>>, vector<1x1024xf32>
    %88 = vector.broadcast %87 : vector<1x1024xf32> to vector<8x1024xf32>
    %89 = arith.addf %86, %88 : vector<8x1024xf32>
    %cst_38 = arith.constant 1.702000e+00 : f32
    %90 = vector.broadcast %cst_38 : f32 to vector<8x1024xf32>
    %91 = arith.mulf %90, %89 : vector<8x1024xf32>
    %92 = arith.negf %91 : vector<8x1024xf32>
    %93 = math.exp %92 : vector<8x1024xf32>
    %cst_39 = arith.constant 1.000000e+00 : f32
    %94 = vector.broadcast %cst_39 : f32 to vector<8x1024xf32>
    %95 = arith.addf %94, %93 : vector<8x1024xf32>
    %96 = arith.divf %94, %95 : vector<8x1024xf32>
    %97 = arith.mulf %89, %96 : vector<8x1024xf32>
    %98 = arith.truncf %97 : vector<8x1024xf32> to vector<8x1024xbf16>
    %c0_40 = arith.constant 0 : index
    %c0_41 = arith.constant 0 : index
    %99 = vector.load %arg12[%c0_40, %c0_41] : memref<256x1024xbf16, #tpu.memory_space<vmem>>, vector<256x1024xbf16>
    %cst_42 = arith.constant dense<0.000000e+00> : vector<8x256xf32>
    %100 = tpu.matmul %98, %99, %cst_42 {dimension_numbers = #tpu.dot_dimension_numbers<[1], [1], [0], [0], [0, 0, 1, 0], [], []>} : vector<8x1024xbf16>, vector<256x1024xbf16>, vector<8x256xf32> -> vector<8x256xf32>
    %c0_43 = arith.constant 0 : index
    %c0_44 = arith.constant 0 : index
    %101 = vector.load %arg13[%c0_43, %c0_44] : memref<1x256xf32, #tpu.memory_space<vmem>>, vector<1x256xf32>
    %102 = vector.broadcast %101 : vector<1x256xf32> to vector<8x256xf32>
    %103 = arith.addf %100, %102 : vector<8x256xf32>
    %104 = arith.addf %59, %103 : vector<8x256xf32>
    %c0_45 = arith.constant 0 : index
    %c0_46 = arith.constant 0 : index
    %c0_47 = arith.constant 0 : index
    %105 = vector.load %arg14[%c0_45, %c0_46, %c0_47] : memref<1x8x256xf32, #tpu.memory_space<vmem>>, vector<1x8x256xf32>
    %106 = vector.shape_cast %105 : vector<1x8x256xf32> to vector<8x256xf32>
    %107 = vector.shape_cast %104 : vector<8x256xf32> to vector<1x8x256xf32>
    tpu.vector_store %arg14[%c0_45, %c0_46, %c0_47], %107 {strides = array<i32>} : memref<1x8x256xf32, #tpu.memory_space<vmem>>, vector<1x8x256xf32>,
    return
  }
  func.func @transform_0(%arg0: i32) -> (i32, i32, i32) {
    %c0_i32 = arith.constant 0 : i32
    %c0_i32_0 = arith.constant 0 : i32
    %c0_i32_1 = arith.constant 0 : i32
    return %arg0, %c0_i32, %c0_i32_0 : i32, i32, i32
  }
  func.func @transform_1(%arg0: i32) -> (i32, i32) {
    %c0_i32 = arith.constant 0 : i32
    %c0_i32_0 = arith.constant 0 : i32
    %c0_i32_1 = arith.constant 0 : i32
    return %c0_i32, %c0_i32_0 : i32, i32
  }
  func.func @transform_2(%arg0: i32) -> (i32, i32) {
    %c0_i32 = arith.constant 0 : i32
    %c0_i32_0 = arith.constant 0 : i32
    %c0_i32_1 = arith.constant 0 : i32
    return %c0_i32, %c0_i32_0 : i32, i32
  }
  func.func @transform_3(%arg0: i32) -> (i32, i32) {
    %c0_i32 = arith.constant 0 : i32
    %c0_i32_0 = arith.constant 0 : i32
    %c0_i32_1 = arith.constant 0 : i32
    return %c0_i32, %c0_i32_0 : i32, i32
  }
  func.func @transform_4(%arg0: i32) -> (i32, i32) {
    %c0_i32 = arith.constant 0 : i32
    %c0_i32_0 = arith.constant 0 : i32
    %c0_i32_1 = arith.constant 0 : i32
    return %c0_i32, %c0_i32_0 : i32, i32
  }
  func.func @transform_5(%arg0: i32) -> (i32, i32) {
    %c0_i32 = arith.constant 0 : i32
    %c0_i32_0 = arith.constant 0 : i32
    %c0_i32_1 = arith.constant 0 : i32
    return %c0_i32, %c0_i32_0 : i32, i32
  }
  func.func @transform_6(%arg0: i32) -> (i32, i32) {
    %c0_i32 = arith.constant 0 : i32
    %c0_i32_0 = arith.constant 0 : i32
    %c0_i32_1 = arith.constant 0 : i32
    return %c0_i32, %c0_i32_0 : i32, i32
  }
  func.func @transform_7(%arg0: i32) -> (i32, i32) {
    %c0_i32 = arith.constant 0 : i32
    %c0_i32_0 = arith.constant 0 : i32
    %c0_i32_1 = arith.constant 0 : i32
    return %c0_i32, %c0_i32_0 : i32, i32
  }
  func.func @transform_8(%arg0: i32) -> (i32, i32) {
    %c0_i32 = arith.constant 0 : i32
    %c0_i32_0 = arith.constant 0 : i32
    %c0_i32_1 = arith.constant 0 : i32
    return %c0_i32, %c0_i32_0 : i32, i32
  }
  func.func @transform_9(%arg0: i32) -> (i32, i32) {
    %c0_i32 = arith.constant 0 : i32
    %c0_i32_0 = arith.constant 0 : i32
    %c0_i32_1 = arith.constant 0 : i32
    return %c0_i32, %c0_i32_0 : i32, i32
  }
  func.func @transform_10(%arg0: i32) -> (i32, i32) {
    %c0_i32 = arith.constant 0 : i32
    %c0_i32_0 = arith.constant 0 : i32
    %c0_i32_1 = arith.constant 0 : i32
    return %c0_i32, %c0_i32_0 : i32, i32
  }
  func.func @transform_11(%arg0: i32) -> (i32, i32) {
    %c0_i32 = arith.constant 0 : i32
    %c0_i32_0 = arith.constant 0 : i32
    %c0_i32_1 = arith.constant 0 : i32
    return %c0_i32, %c0_i32_0 : i32, i32
  }
  func.func @transform_12(%arg0: i32) -> (i32, i32) {
    %c0_i32 = arith.constant 0 : i32
    %c0_i32_0 = arith.constant 0 : i32
    %c0_i32_1 = arith.constant 0 : i32
    return %c0_i32, %c0_i32_0 : i32, i32
  }
  func.func @transform_13(%arg0: i32) -> (i32, i32, i32) {
    %c0_i32 = arith.constant 0 : i32
    %c0_i32_0 = arith.constant 0 : i32
    %c0_i32_1 = arith.constant 0 : i32
    return %arg0, %c0_i32, %c0_i32_0 : i32, i32, i32
  }
}

</mosaic_0001>

<llo_original>
// kernel: tpu_custom_call.1
$region0: #{tpu_custom_call.1}
  #allocation0 [shape = 'u32[]', space=smem, size = 0x4, offset = 0x4, fixed_abs, tag = 'smem constant byte address 0x4 - core index']
  #allocation1 [shape = 'u32[144,128]{1,0:T(1,128)}', space=vmem, size = 0x12000, scoped, tag = 'internal scratch']
  %s0 = inlined_call_operand.hbm [shape: f32[2,8,256], index: 0, kind: input, shape index: {}]
  %s1 = inlined_call_operand.hbm [shape: bf16[768,256], index: 1, kind: input, shape index: {}]
  %s2 = inlined_call_operand.hbm [shape: f32[1,768], index: 2, kind: input, shape index: {}]
  %s3 = inlined_call_operand.hbm [shape: bf16[256,256], index: 3, kind: input, shape index: {}]
  %s4 = inlined_call_operand.vmem [shape: f32[1,256], index: 4, kind: input, shape index: {}]
  %s5 = inlined_call_operand.vmem [shape: f32[1,256], index: 5, kind: input, shape index: {}]
  %s6 = inlined_call_operand.vmem [shape: f32[1,256], index: 6, kind: input, shape index: {}]
  %s7 = inlined_call_operand.vmem [shape: f32[1,256], index: 7, kind: input, shape index: {}]
  %s8 = inlined_call_operand.hbm [shape: f32[1,256], index: 8, kind: input, shape index: {}]
  %s9 = inlined_call_operand.hbm [shape: bf16[1024,256], index: 9, kind: input, shape index: {}]
  %s10 = inlined_call_operand.vmem [shape: f32[1,1024], index: 10, kind: input, shape index: {}]
  %s11 = inlined_call_operand.hbm [shape: bf16[256,1024], index: 11, kind: input, shape index: {}]
  %s12 = inlined_call_operand.vmem [shape: f32[1,256], index: 12, kind: input, shape index: {}]
  %s13 = inlined_call_operand.hbm [shape: f32[2,8,256], index: 13, kind: output, shape index: {}]
  %s14 = sld [smem:[#allocation0]]
  $region113: #{tpu_custom_call.1} parent=0
    _
  %s16 = ssub.s32 1, %s14
  %s17 = scalar_select 0, %s16, %s14
  $region1: #{tpu_custom_call.1} parent=0
    #allocation2 [shape = 'u8[16384]{0}', space=vmem, size = 0x4000, scoped, tag = 'input window, operand 0']
    #allocation3 [shape = 's32[2]{0}', space=sflag, size = 0x8, scoped, tag = 'scoped memory for tpu_custom_call.1']
    #allocation4 [shape = 's32[2]{0}', space=sflag, size = 0x8, scoped, tag = 'scoped memory for tpu_custom_call.1']
    #allocation5 [shape = 'u8[393216]{0}', space=vmem, size = 0x60000, scoped, tag = 'input window, operand 1, single buffered']
    #allocation6 [shape = 's32[1]{0}', space=sflag, size = 0x4, scoped, tag = 'scoped memory for tpu_custom_call.1']
    #allocation7 [shape = 'u8[3072]{0}', space=vmem, size = 0xc00, scoped, tag = 'input window, operand 2, single buffered']
    #allocation8 [shape = 'u8[131072]{0}', space=vmem, size = 0x20000, scoped, tag = 'input window, operand 3, single buffered']
    #allocation9 [shape = 's32[1]{0}', space=sflag, size = 0x4, scoped, tag = 'scoped memory for tpu_custom_call.1']
    #allocation10 [shape = 'u8[1024]{0}', space=vmem, size = 0x400, scoped, tag = 'input window, operand 8, single buffered']
    #allocation11 [shape = 'u8[524288]{0}', space=vmem, size = 0x80000, scoped, tag = 'input window, operand 9, single buffered']
    #allocation12 [shape = 's32[1]{0}', space=sflag, size = 0x4, scoped, tag = 'scoped memory for tpu_custom_call.1']
    #allocation13 [shape = 'u8[524288]{0}', space=vmem, size = 0x80000, scoped, tag = 'input window, operand 11, single buffered']
    #allocation14 [shape = 'u8[16384]{0}', space=vmem, size = 0x4000, scoped, tag = 'output window, operand 0']
    %18 = vsyncpa [#allocation3], 0
    %s19 = scalar_lea.sflag [#allocation3], 1
    %20 = vsyncpa %s19, 0
    %21 = vsyncpa [#allocation6], 0
    %22 = vsyncpa [#allocation9], 0
    %23 = vsyncpa [#allocation12], 0
    %24 = vsyncpa [#allocation4], 0
    %s25 = scalar_lea.sflag [#allocation4], 1
    %26 = vsyncpa %s25, 0
    loop: start=0, step=1, limit=4
    $region2: #{tpu_custom_call.1} parent=1 // loop_pre_header
      _
    $region3: #{tpu_custom_call.1} parent=1 // loop_header
      %s28 = sphi 0, %s32
      %p29 = scmp.ge.s32.totalorder %s28, 4
      %s38 = sphi 0, %s40
      %s41 = sphi 0, %s38
      %s42 = sphi 0, %s41
      %s58 = sphi 0, %s42
      %s62 = sphi 0, %s62
      %s64 = sphi 0, %s62
      %s65 = sphi 0, %s64
      %s79 = sphi 0, %s65
      %s83 = sphi 0, %s83
      %s85 = sphi 0, %s83
      %s86 = sphi 0, %s85
      %s100 = sphi 0, %s86
      %s104 = sphi 0, %s104
      %s106 = sphi 0, %s104
      %s107 = sphi 0, %s106
      %s121 = sphi 0, %s107
      %s125 = sphi 0, %s125
      %s127 = sphi 0, %s125
      %s128 = sphi 0, %s127
      %s142 = sphi 0, %s128
      %s146 = sphi 0, %s146
      %s148 = sphi 0, %s146
      %s149 = sphi 0, %s148
      %s163 = sphi 0, %s149
      %s167 = sphi 0, %s167
      %s169 = sphi 0, %s167
      %s170 = sphi 0, %s169
      %s184 = sphi 0, %s170
      %s188 = sphi 0, %s188
      %s190 = sphi 0, %s188
      %s191 = sphi 0, %s190
      %s205 = sphi 0, %s191
      %s209 = sphi 0, %s209
      %s211 = sphi 0, %s209
      %s212 = sphi 0, %s211
      %s226 = sphi 0, %s212
      %s230 = sphi 0, %s230
      %s232 = sphi 0, %s230
      %s233 = sphi 0, %s232
      %s247 = sphi 0, %s233
      %s251 = sphi 0, %s251
      %s253 = sphi 0, %s251
      %s254 = sphi 0, %s253
      %s268 = sphi 0, %s254
      %s272 = sphi 0, %s272
      %s274 = sphi 0, %s272
      %s275 = sphi 0, %s274
      %s289 = sphi 0, %s275
      %s293 = sphi 0, %s293
      %s295 = sphi 0, %s293
      %s296 = sphi 0, %s295
      %s310 = sphi 0, %s296
      %s316 = sphi 0, %s318
      %s319 = sphi 0, %s316
      %s320 = sphi 0, %s319
      %s336 = sphi 0, %s320
    $region4: #{tpu_custom_call.1} parent=1 // loop_header_branch
      %31 = sbr.rel (%p29) target = $region8
    $region5: #{tpu_custom_call.1} parent=1 // loop_body
      %s33 = ssub.s32 %s28, 1
      %s34 = ssub.s32 %s28, 2
      %s35 = sadd.s32 %s28, 1
      %s36 = ssub.s32 %s28, %s35
      %p37 = scmp.eq.s32.totalorder %s36, 0
      %s39 = sadd.s32 %s38, 1
      %s40 = scalar_select %p37, %s38, %s39
      %p43 = pneg %p37
      %p44 = scmp.eq.s32.totalorder %s28, 1
      %p45 = por %p43, %p44
      %p46 = scmp.ne.s32.totalorder %s38, %s41
      %p47 = scmp.eq.s32.totalorder %s28, 0
      %p48 = por %p46, %p47
      %p49 = scmp.ne.s32.totalorder %s38, %s41
      %p50 = scmp.eq.s32.totalorder %s33, 1
      %p51 = por %p49, %p50
      %p52 = scmp.ne.s32.totalorder %s41, %s42
      %p53 = scmp.eq.s32.totalorder %s33, 0
      %p54 = por %p52, %p53
      %p55 = scmp.ne.s32.totalorder %s41, %s42
      %p56 = scmp.eq.s32.totalorder %s34, 1
      %p57 = por %p55, %p56
      %p59 = scmp.ne.s32.totalorder %s42, %s58
      %p60 = scmp.eq.s32.totalorder %s34, 0
      %p61 = por %p59, %p60
      %s63 = sadd.s32 %s62, 1
      %p66 = scmp.eq.s32.totalorder %s28, 1
      %p67 = scmp.ne.s32.totalorder %s62, %s64
      %p68 = scmp.eq.s32.totalorder %s28, 0
      %p69 = por %p67, %p68
      %p70 = scmp.ne.s32.totalorder %s62, %s64
      %p71 = scmp.eq.s32.totalorder %s33, 1
      %p72 = por %p70, %p71
      %p73 = scmp.ne.s32.totalorder %s64, %s65
      %p74 = scmp.eq.s32.totalorder %s33, 0
      %p75 = por %p73, %p74
      %p76 = scmp.ne.s32.totalorder %s64, %s65
      %p77 = scmp.eq.s32.totalorder %s34, 1
      %p78 = por %p76, %p77
      %p80 = scmp.ne.s32.totalorder %s65, %s79
      %p81 = scmp.eq.s32.totalorder %s34, 0
      %p82 = por %p80, %p81
      %s84 = sadd.s32 %s83, 1
      %p87 = scmp.eq.s32.totalorder %s28, 1
      %p88 = scmp.ne.s32.totalorder %s83, %s85
      %p89 = scmp.eq.s32.totalorder %s28, 0
      %p90 = por %p88, %p89
      %p91 = scmp.ne.s32.totalorder %s83, %s85
      %p92 = scmp.eq.s32.totalorder %s33, 1
      %p93 = por %p91, %p92
      %p94 = scmp.ne.s32.totalorder %s85, %s86
      %p95 = scmp.eq.s32.totalorder %s33, 0
      %p96 = por %p94, %p95
      %p97 = scmp.ne.s32.totalorder %s85, %s86
      %p98 = scmp.eq.s32.totalorder %s34, 1
      %p99 = por %p97, %p98
      %p101 = scmp.ne.s32.totalorder %s86, %s100
      %p102 = scmp.eq.s32.totalorder %s34, 0
      %p103 = por %p101, %p102
      %s105 = sadd.s32 %s104, 1
      %p108 = scmp.eq.s32.totalorder %s28, 1
      %p109 = scmp.ne.s32.totalorder %s104, %s106
      %p110 = scmp.eq.s32.totalorder %s28, 0
      %p111 = por %p109, %p110
      %p112 = scmp.ne.s32.totalorder %s104, %s106
      %p113 = scmp.eq.s32.totalorder %s33, 1
      %p114 = por %p112, %p113
      %p115 = scmp.ne.s32.totalorder %s106, %s107
      %p116 = scmp.eq.s32.totalorder %s33, 0
      %p117 = por %p115, %p116
      %p118 = scmp.ne.s32.totalorder %s106, %s107
      %p119 = scmp.eq.s32.totalorder %s34, 1
      %p120 = por %p118, %p119
      %p122 = scmp.ne.s32.totalorder %s107, %s121
      %p123 = scmp.eq.s32.totalorder %s34, 0
      %p124 = por %p122, %p123
      %s126 = sadd.s32 %s125, 1
      %p129 = scmp.eq.s32.totalorder %s28, 1
      %p130 = scmp.ne.s32.totalorder %s125, %s127
      %p131 = scmp.eq.s32.totalorder %s28, 0
      %p132 = por %p130, %p131
      %p133 = scmp.ne.s32.totalorder %s125, %s127
      %p134 = scmp.eq.s32.totalorder %s33, 1
      %p135 = por %p133, %p134
      %p136 = scmp.ne.s32.totalorder %s127, %s128
      %p137 = scmp.eq.s32.totalorder %s33, 0
      %p138 = por %p136, %p137
      %p139 = scmp.ne.s32.totalorder %s127, %s128
      %p140 = scmp.eq.s32.totalorder %s34, 1
      %p141 = por %p139, %p140
      %p143 = scmp.ne.s32.totalorder %s128, %s142
      %p144 = scmp.eq.s32.totalorder %s34, 0
      %p145 = por %p143, %p144
      %s147 = sadd.s32 %s146, 1
      %p150 = scmp.eq.s32.totalorder %s28, 1
      %p151 = scmp.ne.s32.totalorder %s146, %s148
      %p152 = scmp.eq.s32.totalorder %s28, 0
      %p153 = por %p151, %p152
      %p154 = scmp.ne.s32.totalorder %s146, %s148
      %p155 = scmp.eq.s32.totalorder %s33, 1
      %p156 = por %p154, %p155
      %p157 = scmp.ne.s32.totalorder %s148, %s149
      %p158 = scmp.eq.s32.totalorder %s33, 0
      %p159 = por %p157, %p158
      %p160 = scmp.ne.s32.totalorder %s148, %s149
      %p161 = scmp.eq.s32.totalorder %s34, 1
      %p162 = por %p160, %p161
      %p164 = scmp.ne.s32.totalorder %s149, %s163
      %p165 = scmp.eq.s32.totalorder %s34, 0
      %p166 = por %p164, %p165
      %s168 = sadd.s32 %s167, 1
      %p171 = scmp.eq.s32.totalorder %s28, 1
      %p172 = scmp.ne.s32.totalorder %s167, %s169
      %p173 = scmp.eq.s32.totalorder %s28, 0
      %p174 = por %p172, %p173
      %p175 = scmp.ne.s32.totalorder %s167, %s169
      %p176 = scmp.eq.s32.totalorder %s33, 1
      %p177 = por %p175, %p176
      %p178 = scmp.ne.s32.totalorder %s169, %s170
      %p179 = scmp.eq.s32.totalorder %s33, 0
      %p180 = por %p178, %p179
      %p181 = scmp.ne.s32.totalorder %s169, %s170
      %p182 = scmp.eq.s32.totalorder %s34, 1
      %p183 = por %p181, %p182
      %p185 = scmp.ne.s32.totalorder %s170, %s184
      %p186 = scmp.eq.s32.totalorder %s34, 0
      %p187 = por %p185, %p186
      %s189 = sadd.s32 %s188, 1
      %p192 = scmp.eq.s32.totalorder %s28, 1
      %p193 = scmp.ne.s32.totalorder %s188, %s190
      %p194 = scmp.eq.s32.totalorder %s28, 0
      %p195 = por %p193, %p194
      %p196 = scmp.ne.s32.totalorder %s188, %s190
      %p197 = scmp.eq.s32.totalorder %s33, 1
      %p198 = por %p196, %p197
      %p199 = scmp.ne.s32.totalorder %s190, %s191
      %p200 = scmp.eq.s32.totalorder %s33, 0
      %p201 = por %p199, %p200
      %p202 = scmp.ne.s32.totalorder %s190, %s191
      %p203 = scmp.eq.s32.totalorder %s34, 1
      %p204 = por %p202, %p203
      %p206 = scmp.ne.s32.totalorder %s191, %s205
      %p207 = scmp.eq.s32.totalorder %s34, 0
      %p208 = por %p206, %p207
      %s210 = sadd.s32 %s209, 1
      %p213 = scmp.eq.s32.totalorder %s28, 1
      %p214 = scmp.ne.s32.totalorder %s209, %s211
      %p215 = scmp.eq.s32.totalorder %s28, 0
      %p216 = por %p214, %p215
      %p217 = scmp.ne.s32.totalorder %s209, %s211
      %p218 = scmp.eq.s32.totalorder %s33, 1
      %p219 = por %p217, %p218
      %p220 = scmp.ne.s32.totalorder %s211, %s212
      %p221 = scmp.eq.s32.totalorder %s33, 0
      %p222 = por %p220, %p221
      %p223 = scmp.ne.s32.totalorder %s211, %s212
      %p224 = scmp.eq.s32.totalorder %s34, 1
      %p225 = por %p223, %p224
      %p227 = scmp.ne.s32.totalorder %s212, %s226
      %p228 = scmp.eq.s32.totalorder %s34, 0
      %p229 = por %p227, %p228
      %s231 = sadd.s32 %s230, 1
      %p234 = scmp.eq.s32.totalorder %s28, 1
      %p235 = scmp.ne.s32.totalorder %s230, %s232
      %p236 = scmp.eq.s32.totalorder %s28, 0
      %p237 = por %p235, %p236
      %p238 = scmp.ne.s32.totalorder %s230, %s232
      %p239 = scmp.eq.s32.totalorder %s33, 1
      %p240 = por %p238, %p239
      %p241 = scmp.ne.s32.totalorder %s232, %s233
      %p242 = scmp.eq.s32.totalorder %s33, 0
      %p243 = por %p241, %p242
      %p244 = scmp.ne.s32.totalorder %s232, %s233
      %p245 = scmp.eq.s32.totalorder %s34, 1
      %p246 = por %p244, %p245
      %p248 = scmp.ne.s32.totalorder %s233, %s247
      %p249 = scmp.eq.s32.totalorder %s34, 0
      %p250 = por %p248, %p249
      %s252 = sadd.s32 %s251, 1
      %p255 = scmp.eq.s32.totalorder %s28, 1
      %p256 = scmp.ne.s32.totalorder %s251, %s253
      %p257 = scmp.eq.s32.totalorder %s28, 0
      %p258 = por %p256, %p257
      %p259 = scmp.ne.s32.totalorder %s251, %s253
      %p260 = scmp.eq.s32.totalorder %s33, 1
      %p261 = por %p259, %p260
      %p262 = scmp.ne.s32.totalorder %s253, %s254
      %p263 = scmp.eq.s32.totalorder %s33, 0
      %p264 = por %p262, %p263
      %p265 = scmp.ne.s32.totalorder %s253, %s254
      %p266 = scmp.eq.s32.totalorder %s34, 1
      %p267 = por %p265, %p266
      %p269 = scmp.ne.s32.totalorder %s254, %s268
      %p270 = scmp.eq.s32.totalorder %s34, 0
      %p271 = por %p269, %p270
      %s273 = sadd.s32 %s272, 1
      %p276 = scmp.eq.s32.totalorder %s28, 1
      %p277 = scmp.ne.s32.totalorder %s272, %s274
      %p278 = scmp.eq.s32.totalorder %s28, 0
      %p279 = por %p277, %p278
      %p280 = scmp.ne.s32.totalorder %s272, %s274
      %p281 = scmp.eq.s32.totalorder %s33, 1
      %p282 = por %p280, %p281
      %p283 = scmp.ne.s32.totalorder %s274, %s275
      %p284 = scmp.eq.s32.totalorder %s33, 0
      %p285 = por %p283, %p284
      %p286 = scmp.ne.s32.totalorder %s274, %s275
      %p287 = scmp.eq.s32.totalorder %s34, 1
      %p288 = por %p286, %p287
      %p290 = scmp.ne.s32.totalorder %s275, %s289
      %p291 = scmp.eq.s32.totalorder %s34, 0
      %p292 = por %p290, %p291
      %s294 = sadd.s32 %s293, 1
      %p297 = scmp.eq.s32.totalorder %s28, 1
      %p298 = scmp.ne.s32.totalorder %s293, %s295
      %p299 = scmp.eq.s32.totalorder %s28, 0
      %p300 = por %p298, %p299
      %p301 = scmp.ne.s32.totalorder %s293, %s295
      %p302 = scmp.eq.s32.totalorder %s33, 1
      %p303 = por %p301, %p302
      %p304 = scmp.ne.s32.totalorder %s295, %s296
      %p305 = scmp.eq.s32.totalorder %s33, 0
      %p306 = por %p304, %p305
      %p307 = scmp.ne.s32.totalorder %s295, %s296
      %p308 = scmp.eq.s32.totalorder %s34, 1
      %p309 = por %p307, %p308
      %p311 = scmp.ne.s32.totalorder %s296, %s310
      %p312 = scmp.eq.s32.totalorder %s34, 0
      %p313 = por %p311, %p312
      %s314 = ssub.s32 %s28, %s35
      %p315 = scmp.eq.s32.totalorder %s314, 0
      %s317 = sadd.s32 %s316, 1
      %s318 = scalar_select %p315, %s316, %s317
      %p321 = pneg %p315
      %p322 = scmp.eq.s32.totalorder %s28, 1
      %p323 = por %p321, %p322
      %p324 = scmp.ne.s32.totalorder %s316, %s319
      %p325 = scmp.eq.s32.totalorder %s28, 0
      %p326 = por %p324, %p325
      %p327 = scmp.ne.s32.totalorder %s316, %s319
      %p328 = scmp.eq.s32.totalorder %s33, 1
      %p329 = por %p327, %p328
      %p330 = scmp.ne.s32.totalorder %s319, %s320
      %p331 = scmp.eq.s32.totalorder %s33, 0
      %p332 = por %p330, %p331
      %p333 = scmp.ne.s32.totalorder %s319, %s320
      %p334 = scmp.eq.s32.totalorder %s34, 1
      %p335 = por %p333, %p334
      %p337 = scmp.ne.s32.totalorder %s320, %s336
      %p338 = scmp.eq.s32.totalorder %s34, 0
      %p339 = por %p337, %p338
      %p340 = scmp.le.s32.totalorder 1, %s28
      %p341 = scmp.lt.s32.totalorder %s28, 3
      %p342 = pnand %p340, %p341
      %p343 = pneg %p342
      // Predicated region
      $region9: #{tpu_custom_call.1} parent=5 // pred_check
        _
      $region10: #{tpu_custom_call.1} parent=5 // pred_check_branch
        %345 = sbr.rel (%p342) target = $region12
      $region11: #{tpu_custom_call.1} parent=5 // pred_region
        %s346 = ssub.s32 %s28, 1
        // Predicated region
        $region13: #{tpu_custom_call.1} parent=11 // pred_check
          %p347 = pneg %p75
        $region14: #{tpu_custom_call.1} parent=11 // pred_check_branch
          %349 = sbr.rel (%p347) target = $region16
        $region15: #{tpu_custom_call.1} parent=11 // pred_region
          %s351 = ssub.s32 12288, 12288
          %352 = vsyncadd [#allocation6], %s351
          %s353 = sshll.u32 [#allocation5], 4
          %s354 = int_to_ptr.vmem [resolvable:$true] %s353
          %359 = dma.hbm_to_vmem [thread:$0]  %s1, 12288, %s354, [#allocation6], 128, 128, 8
        $region16: #{tpu_custom_call.1} parent=11 // pred_fallthru
          _
        // Predicated region
        $region17: #{tpu_custom_call.1} parent=11 // pred_check
          %p360 = pneg %p96
        $region18: #{tpu_custom_call.1} parent=11 // pred_check_branch
          %362 = sbr.rel (%p360) target = $region20
        $region19: #{tpu_custom_call.1} parent=11 // pred_region
          %s364 = ssub.s32 96, 96
          %365 = vsyncadd [#allocation6], %s364
          %s367 = sshll.u32 [#allocation7], 4
          %s368 = int_to_ptr.vmem [resolvable:$true] %s367
          %370 = dma.hbm_to_vmem [thread:$0]  %s2, 96, %s368, [#allocation6]
        $region20: #{tpu_custom_call.1} parent=11 // pred_fallthru
          _
        // Predicated region
        $region21: #{tpu_custom_call.1} parent=11 // pred_check
          %p371 = pneg %p117
        $region22: #{tpu_custom_call.1} parent=11 // pred_check_branch
          %373 = sbr.rel (%p371) target = $region24
        $region23: #{tpu_custom_call.1} parent=11 // pred_region
          %s375 = ssub.s32 4096, 4096
          %376 = vsyncadd [#allocation9], %s375
          %s377 = sshll.u32 [#allocation8], 4
          %s378 = int_to_ptr.vmem [resolvable:$true] %s377
          %383 = dma.hbm_to_vmem [thread:$0]  %s3, 4096, %s378, [#allocation9], 128, 128, 8
        $region24: #{tpu_custom_call.1} parent=11 // pred_fallthru
          _
        // Predicated region
        $region25: #{tpu_custom_call.1} parent=11 // pred_check
          %p384 = pneg %p138
        $region26: #{tpu_custom_call.1} parent=11 // pred_check_branch
          %386 = sbr.rel (%p384) target = $region28
        $region27: #{tpu_custom_call.1} parent=11 // pred_region
          _
        $region28: #{tpu_custom_call.1} parent=11 // pred_fallthru
          _
        // Predicated region
        $region29: #{tpu_custom_call.1} parent=11 // pred_check
          %p387 = pneg %p159
        $region30: #{tpu_custom_call.1} parent=11 // pred_check_branch
          %389 = sbr.rel (%p387) target = $region32
        $region31: #{tpu_custom_call.1} parent=11 // pred_region
          _
        $region32: #{tpu_custom_call.1} parent=11 // pred_fallthru
          _
        // Predicated region
        $region33: #{tpu_custom_call.1} parent=11 // pred_check
          %p390 = pneg %p180
        $region34: #{tpu_custom_call.1} parent=11 // pred_check_branch
          %392 = sbr.rel (%p390) target = $region36
        $region35: #{tpu_custom_call.1} parent=11 // pred_region
          _
        $region36: #{tpu_custom_call.1} parent=11 // pred_fallthru
          _
        // Predicated region
        $region37: #{tpu_custom_call.1} parent=11 // pred_check
          %p393 = pneg %p201
        $region38: #{tpu_custom_call.1} parent=11 // pred_check_branch
          %395 = sbr.rel (%p393) target = $region40
        $region39: #{tpu_custom_call.1} parent=11 // pred_region
          _
        $region40: #{tpu_custom_call.1} parent=11 // pred_fallthru
          _
        // Predicated region
        $region41: #{tpu_custom_call.1} parent=11 // pred_check
          %p396 = pneg %p222
        $region42: #{tpu_custom_call.1} parent=11 // pred_check_branch
          %398 = sbr.rel (%p396) target = $region44
        $region43: #{tpu_custom_call.1} parent=11 // pred_region
          %s400 = ssub.s32 32, 32
          %401 = vsyncadd [#allocation9], %s400
          %s403 = sshll.u32 [#allocation10], 4
          %s404 = int_to_ptr.vmem [resolvable:$true] %s403
          %406 = dma.hbm_to_vmem [thread:$0]  %s8, 32, %s404, [#allocation9]
        $region44: #{tpu_custom_call.1} parent=11 // pred_fallthru
          _
        // Predicated region
        $region45: #{tpu_custom_call.1} parent=11 // pred_check
          %p407 = pneg %p243
        $region46: #{tpu_custom_call.1} parent=11 // pred_check_branch
          %409 = sbr.rel (%p407) target = $region48
        $region47: #{tpu_custom_call.1} parent=11 // pred_region
          %s411 = ssub.s32 16384, 16384
          %412 = vsyncadd [#allocation12], %s411
          %s413 = sshll.u32 [#allocation11], 4
          %s414 = int_to_ptr.vmem [resolvable:$true] %s413
          %419 = dma.hbm_to_vmem [thread:$0]  %s9, 16384, %s414, [#allocation12], 128, 128, 8
        $region48: #{tpu_custom_call.1} parent=11 // pred_fallthru
          _
        // Predicated region
        $region49: #{tpu_custom_call.1} parent=11 // pred_check
          %p420 = pneg %p264
        $region50: #{tpu_custom_call.1} parent=11 // pred_check_branch
          %422 = sbr.rel (%p420) target = $region52
        $region51: #{tpu_custom_call.1} parent=11 // pred_region
          _
        $region52: #{tpu_custom_call.1} parent=11 // pred_fallthru
          _
        // Predicated region
        $region53: #{tpu_custom_call.1} parent=11 // pred_check
          %p423 = pneg %p285
        $region54: #{tpu_custom_call.1} parent=11 // pred_check_branch
          %425 = sbr.rel (%p423) target = $region56
        $region55: #{tpu_custom_call.1} parent=11 // pred_region
          %s427 = ssub.s32 16384, 16384
          %428 = vsyncadd [#allocation12], %s427
          %s429 = sshll.u32 [#allocation13], 4
          %s430 = int_to_ptr.vmem [resolvable:$true] %s429
          %435 = dma.hbm_to_vmem [thread:$0]  %s11, 16384, %s430, [#allocation12], 512, 512, 32
        $region56: #{tpu_custom_call.1} parent=11 // pred_fallthru
          _
        // Predicated region
        $region57: #{tpu_custom_call.1} parent=11 // pred_check
          %p436 = pneg %p306
        $region58: #{tpu_custom_call.1} parent=11 // pred_check_branch
          %438 = sbr.rel (%p436) target = $region60
        $region59: #{tpu_custom_call.1} parent=11 // pred_region
          _
        $region60: #{tpu_custom_call.1} parent=11 // pred_fallthru
          _
      $region12: #{tpu_custom_call.1} parent=5 // pred_fallthru
        _
      %p439 = scmp.lt.s32.totalorder %s28, 2
      // Predicated region
      $region61: #{tpu_custom_call.1} parent=5 // pred_check
        %p440 = pneg %p439
      $region62: #{tpu_custom_call.1} parent=5 // pred_check_branch
        %442 = sbr.rel (%p440) target = $region64
      $region63: #{tpu_custom_call.1} parent=5 // pred_region
        // Predicated region
        $region65: #{tpu_custom_call.1} parent=63 // pred_check
          %p443 = pneg %p48
        $region66: #{tpu_custom_call.1} parent=63 // pred_check_branch
          %445 = sbr.rel (%p443) target = $region68
        $region67: #{tpu_custom_call.1} parent=63 // pred_region
          %s446 = sand.u32 %s38, 1
          %s447 = scalar_lea.sflag [#allocation3], %s446
          %s448 = sand.u32 %s38, 1
          %s449 = smul.addr %s448, 16
          %s450 = scalar_lea.vmem [#allocation2], %s449
          %s452 = ssub.s32 256, 256
          %453 = vsyncadd %s447, %s452
          %s454 = smul.addr %s28, 2
          %s455 = smul.addr %s454, 128
          %s456 = scalar_lea.hbm %s0, %s455
          %s458 = sshll.u32 %s450, 4
          %s459 = int_to_ptr.vmem [resolvable:$true] %s458
          %461 = dma.hbm_to_vmem [thread:$0]  %s456, 256, %s459, %s447
        $region68: #{tpu_custom_call.1} parent=63 // pred_fallthru
          _
      $region64: #{tpu_custom_call.1} parent=5 // pred_fallthru
        _
      %p462 = scmp.le.s32.totalorder 1, %s28
      %p463 = scmp.lt.s32.totalorder %s28, 3
      %p464 = pnand %p462, %p463
      %p465 = pneg %p464
      // Predicated region
      $region69: #{tpu_custom_call.1} parent=5 // pred_check
        _
      $region70: #{tpu_custom_call.1} parent=5 // pred_check_branch
        %467 = sbr.rel (%p464) target = $region72
      $region71: #{tpu_custom_call.1} parent=5 // pred_region
        %s468 = ssub.s32 %s28, 1
        %s469 = sand.u32 %s41, 1
        %s470 = scalar_lea.sflag [#allocation3], %s469
        %s471 = sand.u32 %s41, 1
        %s472 = smul.addr %s471, 16
        %s473 = scalar_lea.vmem [#allocation2], %s472
        // Predicated region
        $region73: #{tpu_custom_call.1} parent=71 // pred_check
          %p474 = pneg %p54
        $region74: #{tpu_custom_call.1} parent=71 // pred_check_branch
          %476 = sbr.rel (%p474) target = $region76
        $region75: #{tpu_custom_call.1} parent=71 // pred_region
          %477 = dma.done %s470, 256
        $region76: #{tpu_custom_call.1} parent=71 // pred_fallthru
          _
        // Predicated region
        $region77: #{tpu_custom_call.1} parent=71 // pred_check
          %p478 = pneg %p75
        $region78: #{tpu_custom_call.1} parent=71 // pred_check_branch
          %480 = sbr.rel (%p478) target = $region80
        $region79: #{tpu_custom_call.1} parent=71 // pred_region
          %481 = dma.done [#allocation6], 12288
        $region80: #{tpu_custom_call.1} parent=71 // pred_fallthru
          _
        // Predicated region
        $region81: #{tpu_custom_call.1} parent=71 // pred_check
          %p482 = pneg %p96
        $region82: #{tpu_custom_call.1} parent=71 // pred_check_branch
          %484 = sbr.rel (%p482) target = $region84
        $region83: #{tpu_custom_call.1} parent=71 // pred_region
          %485 = dma.done [#allocation6], 96
        $region84: #{tpu_custom_call.1} parent=71 // pred_fallthru
          _
        // Predicated region
        $region85: #{tpu_custom_call.1} parent=71 // pred_check
          %p486 = pneg %p117
        $region86: #{tpu_custom_call.1} parent=71 // pred_check_branch
          %488 = sbr.rel (%p486) target = $region88
        $region87: #{tpu_custom_call.1} parent=71 // pred_region
          %489 = dma.done [#allocation9], 4096
        $region88: #{tpu_custom_call.1} parent=71 // pred_fallthru
          _
        // Predicated region
        $region89: #{tpu_custom_call.1} parent=71 // pred_check
          %p490 = pneg %p222
        $region90: #{tpu_custom_call.1} parent=71 // pred_check_branch
          %492 = sbr.rel (%p490) target = $region92
        $region91: #{tpu_custom_call.1} parent=71 // pred_region
          %493 = dma.done [#allocation9], 32
        $region92: #{tpu_custom_call.1} parent=71 // pred_fallthru
          _
        // Predicated region
        $region93: #{tpu_custom_call.1} parent=71 // pred_check
          %p494 = pneg %p243
        $region94: #{tpu_custom_call.1} parent=71 // pred_check_branch
          %496 = sbr.rel (%p494) target = $region96
        $region95: #{tpu_custom_call.1} parent=71 // pred_region
          %497 = dma.done [#allocation12], 16384
        $region96: #{tpu_custom_call.1} parent=71 // pred_fallthru
          _
        // Predicated region
        $region97: #{tpu_custom_call.1} parent=71 // pred_check
          %p498 = pneg %p285
        $region98: #{tpu_custom_call.1} parent=71 // pred_check_branch
          %500 = sbr.rel (%p498) target = $region100
        $region99: #{tpu_custom_call.1} parent=71 // pred_region
          %501 = dma.done [#allocation12], 16384
        $region100: #{tpu_custom_call.1} parent=71 // pred_fallthru
          _
        %s502 = sand.u32 %s41, 1
        %s503 = scalar_lea.sflag [#allocation3], %s502
        %s504 = sand.u32 %s41, 1
        %s505 = smul.addr %s504, 16
        %s506 = scalar_lea.vmem [#allocation2], %s505
        %p507 = pneg %p54
        %p508 = pneg %p51
        %p509 = pneg %p75
        %p510 = pneg %p72
        %p511 = pneg %p96
        %p512 = pneg %p93
        %p513 = pneg %p117
        %p514 = pneg %p114
        %p515 = pneg %p138
        %p516 = pneg %p135
        %p517 = pneg %p159
        %p518 = pneg %p156
        %p519 = pneg %p180
        %p520 = pneg %p177
        %p521 = pneg %p201
        %p522 = pneg %p198
        %p523 = pneg %p222
        %p524 = pneg %p219
        %p525 = pneg %p243
        %p526 = pneg %p240
        %p527 = pneg %p264
        %p528 = pneg %p261
        %p529 = pneg %p285
        %p530 = pneg %p282
        %p531 = pneg %p306
        %p532 = pneg %p303
        %p533 = pneg %p332
        %p534 = pneg %p329
        %s535 = sand.u32 %s319, 1
        %s536 = scalar_lea.sflag [#allocation4], %s535
        %s537 = sand.u32 %s319, 1
        %s538 = smul.addr %s537, 16
        %s539 = scalar_lea.vmem [#allocation14], %s538
        %v541 = vld [vmem:[%s473] sm:$0xff]
        %v542 = vld [vmem:[%s473 + $0x8] sm:$0xff]
        %v543 = vadd.f32 %v541, %v542
        %544 = vadd.xlane.f32.xlu0 %v543
        %v545 = vpop.xlane.xlu0 %544
        %v546 = vrcp.pop 256.0
        %v547 = vmul.f32 %v545, %v546
        %v548 = vsub.f32 %v541, %v547
        %v549 = vsub.f32 %v542, %v547
        %v550 = vmul.f32 %v548, %v548
        %v551 = vmul.f32 %v549, %v549
        %v552 = vadd.f32 %v550, %v551
        %553 = vadd.xlane.f32.xlu0 %v552
        %v554 = vpop.xlane.xlu0 %553
        %v555 = vmul.f32 %v554, %v546
        %v556 = vadd.f32 %v555, 1e-05
        %v557 = vrsqrt.pop %v556
        %v558 = vmul.f32 %v548, %v557
        %v559 = vmul.f32 %v549, %v557
        %v560 = vld [vmem:[%s5] sm:$0x3]
        %v562 = vlaneseq
        %v563 = vshrl.u32 %v562, 7
        %v564 = vsub.s32 0, %v563
        %v565 = vrot.slane %v560, %v564
        %v566 = vlaneseq
        %v567 = vshrl.u32 %v566, 7
        %v568 = vsub.s32 1, %v567
        %v569 = vrot.slane %v560, %v568
        %v572 = vmul.f32 %v558, %v565
        %v573 = vmul.f32 %v559, %v569
        %v574 = vld [vmem:[%s6] sm:$0x3]
        %v576 = vlaneseq
        %v577 = vshrl.u32 %v576, 7
        %v578 = vsub.s32 0, %v577
        %v579 = vrot.slane %v574, %v578
        %v580 = vlaneseq
        %v581 = vshrl.u32 %v580, 7
        %v582 = vsub.s32 1, %v581
        %v583 = vrot.slane %v574, %v582
        %v586 = vadd.f32 %v572, %v579
        %v587 = vadd.f32 %v573, %v583
        %v588 = vpack.c.bf16 %v586, %v586
        %v589 = vpack.c.bf16 %v587, %v587
        %v590 = vld [vmem:[#allocation5] sm:$0xff]
        %v591 = vld [vmem:[#allocation5 + $0x8] sm:$0xff]
        %v592 = vld [vmem:[#allocation5 + $0x10] sm:$0xff]
        %v593 = vld [vmem:[#allocation5 + $0x18] sm:$0xff]
        %v594 = vld [vmem:[#allocation5 + $0x20] sm:$0xff]
        %v595 = vld [vmem:[#allocation5 + $0x28] sm:$0xff]
        %v596 = vld [vmem:[#allocation5 + $0x30] sm:$0xff]
        %v597 = vld [vmem:[#allocation5 + $0x38] sm:$0xff]
        %v598 = vld [vmem:[#allocation5 + $0x40] sm:$0xff]
        %v599 = vld [vmem:[#allocation5 + $0x48] sm:$0xff]
        %v600 = vld [vmem:[#allocation5 + $0x50] sm:$0xff]
        %v601 = vld [vmem:[#allocation5 + $0x58] sm:$0xff]
        %v602 = vld [vmem:[#allocation5 + $0x60] sm:$0xff]
        %v603 = vld [vmem:[#allocation5 + $0x68] sm:$0xff]
        %v604 = vld [vmem:[#allocation5 + $0x70] sm:$0xff]
        %v605 = vld [vmem:[#allocation5 + $0x78] sm:$0xff]
        %v606 = vld [vmem:[#allocation5 + $0x80] sm:$0xff]
        %v607 = vld [vmem:[#allocation5 + $0x88] sm:$0xff]
        %v608 = vld [vmem:[#allocation5 + $0x90] sm:$0xff]
        %v609 = vld [vmem:[#allocation5 + $0x98] sm:$0xff]
        %v610 = vld [vmem:[#allocation5 + $0xa0] sm:$0xff]
        %v611 = vld [vmem:[#allocation5 + $0xa8] sm:$0xff]
        %v612 = vld [vmem:[#allocation5 + $0xb0] sm:$0xff]
        %v613 = vld [vmem:[#allocation5 + $0xb8] sm:$0xff]
        %v614 = vld [vmem:[#allocation5 + $0xc0] sm:$0xff]
        %v615 = vld [vmem:[#allocation5 + $0xc8] sm:$0xff]
        %v616 = vld [vmem:[#allocation5 + $0xd0] sm:$0xff]
        %v617 = vld [vmem:[#allocation5 + $0xd8] sm:$0xff]
        %v618 = vld [vmem:[#allocation5 + $0xe0] sm:$0xff]
        %v619 = vld [vmem:[#allocation5 + $0xe8] sm:$0xff]
        %v620 = vld [vmem:[#allocation5 + $0xf0] sm:$0xff]
        %v621 = vld [vmem:[#allocation5 + $0xf8] sm:$0xff]
        %v622 = vld [vmem:[#allocation5 + $0x100] sm:$0xff]
        %v623 = vld [vmem:[#allocation5 + $0x108] sm:$0xff]
        %v624 = vld [vmem:[#allocation5 + $0x110] sm:$0xff]
        %v625 = vld [vmem:[#allocation5 + $0x118] sm:$0xff]
        %v626 = vld [vmem:[#allocation5 + $0x120] sm:$0xff]
        %v627 = vld [vmem:[#allocation5 + $0x128] sm:$0xff]
        %v628 = vld [vmem:[#allocation5 + $0x130] sm:$0xff]
        %v629 = vld [vmem:[#allocation5 + $0x138] sm:$0xff]
        %v630 = vld [vmem:[#allocation5 + $0x140] sm:$0xff]
        %v631 = vld [vmem:[#allocation5 + $0x148] sm:$0xff]
        %v632 = vld [vmem:[#allocation5 + $0x150] sm:$0xff]
        %v633 = vld [vmem:[#allocation5 + $0x158] sm:$0xff]
        %v634 = vld [vmem:[#allocation5 + $0x160] sm:$0xff]
        %v635 = vld [vmem:[#allocation5 + $0x168] sm:$0xff]
        %v636 = vld [vmem:[#allocation5 + $0x170] sm:$0xff]
        %v637 = vld [vmem:[#allocation5 + $0x178] sm:$0xff]
        %v638 = vld [vmem:[#allocation5 + $0x180] sm:$0xff]
        %v639 = vld [vmem:[#allocation5 + $0x188] sm:$0xff]
        %v640 = vld [vmem:[#allocation5 + $0x190] sm:$0xff]
        %v641 = vld [vmem:[#allocation5 + $0x198] sm:$0xff]
        %v642 = vld [vmem:[#allocation5 + $0x1a0] sm:$0xff]
        %v643 = vld [vmem:[#allocation5 + $0x1a8] sm:$0xff]
        %v644 = vld [vmem:[#allocation5 + $0x1b0] sm:$0xff]
        %v645 = vld [vmem:[#allocation5 + $0x1b8] sm:$0xff]
        %v646 = vld [vmem:[#allocation5 + $0x1c0] sm:$0xff]
        %v647 = vld [vmem:[#allocation5 + $0x1c8] sm:$0xff]
        %v648 = vld [vmem:[#allocation5 + $0x1d0] sm:$0xff]
        %v649 = vld [vmem:[#allocation5 + $0x1d8] sm:$0xff]
        %v650 = vld [vmem:[#allocation5 + $0x1e0] sm:$0xff]
        %v651 = vld [vmem:[#allocation5 + $0x1e8] sm:$0xff]
        %v652 = vld [vmem:[#allocation5 + $0x1f0] sm:$0xff]
        %v653 = vld [vmem:[#allocation5 + $0x1f8] sm:$0xff]
        %v654 = vld [vmem:[#allocation5 + $0x200] sm:$0xff]
        %v655 = vld [vmem:[#allocation5 + $0x208] sm:$0xff]
        %v656 = vld [vmem:[#allocation5 + $0x210] sm:$0xff]
        %v657 = vld [vmem:[#allocation5 + $0x218] sm:$0xff]
        %v658 = vld [vmem:[#allocation5 + $0x220] sm:$0xff]
        %v659 = vld [vmem:[#allocation5 + $0x228] sm:$0xff]
        %v660 = vld [vmem:[#allocation5 + $0x230] sm:$0xff]
        %v661 = vld [vmem:[#allocation5 + $0x238] sm:$0xff]
        %v662 = vld [vmem:[#allocation5 + $0x240] sm:$0xff]
        %v663 = vld [vmem:[#allocation5 + $0x248] sm:$0xff]
        %v664 = vld [vmem:[#allocation5 + $0x250] sm:$0xff]
        %v665 = vld [vmem:[#allocation5 + $0x258] sm:$0xff]
        %v666 = vld [vmem:[#allocation5 + $0x260] sm:$0xff]
        %v667 = vld [vmem:[#allocation5 + $0x268] sm:$0xff]
        %v668 = vld [vmem:[#allocation5 + $0x270] sm:$0xff]
        %v669 = vld [vmem:[#allocation5 + $0x278] sm:$0xff]
        %v670 = vld [vmem:[#allocation5 + $0x280] sm:$0xff]
        %v671 = vld [vmem:[#allocation5 + $0x288] sm:$0xff]
        %v672 = vld [vmem:[#allocation5 + $0x290] sm:$0xff]
        %v673 = vld [vmem:[#allocation5 + $0x298] sm:$0xff]
        %v674 = vld [vmem:[#allocation5 + $0x2a0] sm:$0xff]
        %v675 = vld [vmem:[#allocation5 + $0x2a8] sm:$0xff]
        %v676 = vld [vmem:[#allocation5 + $0x2b0] sm:$0xff]
        %v677 = vld [vmem:[#allocation5 + $0x2b8] sm:$0xff]
        %v678 = vld [vmem:[#allocation5 + $0x2c0] sm:$0xff]
        %v679 = vld [vmem:[#allocation5 + $0x2c8] sm:$0xff]
        %v680 = vld [vmem:[#allocation5 + $0x2d0] sm:$0xff]
        %v681 = vld [vmem:[#allocation5 + $0x2d8] sm:$0xff]
        %v682 = vld [vmem:[#allocation5 + $0x2e0] sm:$0xff]
        %v683 = vld [vmem:[#allocation5 + $0x2e8] sm:$0xff]
        %v684 = vld [vmem:[#allocation5 + $0x2f0] sm:$0xff]
        %v685 = vld [vmem:[#allocation5 + $0x2f8] sm:$0xff]
        %v686 = vld [vmem:[#allocation7] sm:$0x3f]
        %v688 = vlaneseq
        %v689 = vshrl.u32 %v688, 7
        %v690 = vsub.s32 0, %v689
        %v691 = vrot.slane %v686, %v690
        %v692 = vlaneseq
        %v693 = vshrl.u32 %v692, 7
        %v694 = vsub.s32 1, %v693
        %v695 = vrot.slane %v686, %v694
        %v696 = vlaneseq
        %v697 = vshrl.u32 %v696, 7
        %v698 = vsub.s32 2, %v697
        %v699 = vrot.slane %v686, %v698
        %v700 = vlaneseq
        %v701 = vshrl.u32 %v700, 7
        %v702 = vsub.s32 3, %v701
        %v703 = vrot.slane %v686, %v702
        %v704 = vlaneseq
        %v705 = vshrl.u32 %v704, 7
        %v706 = vsub.s32 4, %v705
        %v707 = vrot.slane %v686, %v706
        %v708 = vlaneseq
        %v709 = vshrl.u32 %v708, 7
        %v710 = vsub.s32 5, %v709
        %v711 = vrot.slane %v686, %v710
        %v814 = vunpack.c.l.b16 %v590
        %v815 = vunpack.c.h.b16 %v590
        %v816 = vunpack.c.l.b16 %v591
        %v817 = vunpack.c.h.b16 %v591
        %v818 = vunpack.c.l.b16 %v592
        %v819 = vunpack.c.h.b16 %v592
        %v820 = vunpack.c.l.b16 %v593
        %v821 = vunpack.c.h.b16 %v593
        %v822 = vunpack.c.l.b16 %v594
        %v823 = vunpack.c.h.b16 %v594
        %v824 = vunpack.c.l.b16 %v595
        %v825 = vunpack.c.h.b16 %v595
        %v826 = vunpack.c.l.b16 %v596
        %v827 = vunpack.c.h.b16 %v596
        %v828 = vunpack.c.l.b16 %v597
        %v829 = vunpack.c.h.b16 %v597
        %v830 = vunpack.c.l.b16 %v598
        %v831 = vunpack.c.h.b16 %v598
        %v832 = vunpack.c.l.b16 %v599
        %v833 = vunpack.c.h.b16 %v599
        %v834 = vunpack.c.l.b16 %v600
        %v835 = vunpack.c.h.b16 %v600
        %v836 = vunpack.c.l.b16 %v601
        %v837 = vunpack.c.h.b16 %v601
        %v838 = vunpack.c.l.b16 %v602
        %v839 = vunpack.c.h.b16 %v602
        %v840 = vunpack.c.l.b16 %v603
        %v841 = vunpack.c.h.b16 %v603
        %v842 = vunpack.c.l.b16 %v604
        %v843 = vunpack.c.h.b16 %v604
        %v844 = vunpack.c.l.b16 %v605
        %v845 = vunpack.c.h.b16 %v605
        %v846 = vunpack.c.l.b16 %v606
        %v847 = vunpack.c.h.b16 %v606
        %v848 = vunpack.c.l.b16 %v607
        %v849 = vunpack.c.h.b16 %v607
        %v850 = vunpack.c.l.b16 %v608
        %v851 = vunpack.c.h.b16 %v608
        %v852 = vunpack.c.l.b16 %v609
        %v853 = vunpack.c.h.b16 %v609
        %v854 = vunpack.c.l.b16 %v610
        %v855 = vunpack.c.h.b16 %v610
        %v856 = vunpack.c.l.b16 %v611
        %v857 = vunpack.c.h.b16 %v611
        %v858 = vunpack.c.l.b16 %v612
        %v859 = vunpack.c.h.b16 %v612
        %v860 = vunpack.c.l.b16 %v613
        %v861 = vunpack.c.h.b16 %v613
        %v862 = vunpack.c.l.b16 %v614
        %v863 = vunpack.c.h.b16 %v614
        %v864 = vunpack.c.l.b16 %v615
        %v865 = vunpack.c.h.b16 %v615
        %v866 = vunpack.c.l.b16 %v616
        %v867 = vunpack.c.h.b16 %v616
        %v868 = vunpack.c.l.b16 %v617
        %v869 = vunpack.c.h.b16 %v617
        %v870 = vunpack.c.l.b16 %v618
        %v871 = vunpack.c.h.b16 %v618
        %v872 = vunpack.c.l.b16 %v619
        %v873 = vunpack.c.h.b16 %v619
        %v874 = vunpack.c.l.b16 %v620
        %v875 = vunpack.c.h.b16 %v620
        %v876 = vunpack.c.l.b16 %v621
        %v877 = vunpack.c.h.b16 %v621
        %v878 = vunpack.c.l.b16 %v622
        %v879 = vunpack.c.h.b16 %v622
        %v880 = vunpack.c.l.b16 %v623
        %v881 = vunpack.c.h.b16 %v623
        %v882 = vunpack.c.l.b16 %v624
        %v883 = vunpack.c.h.b16 %v624
        %v884 = vunpack.c.l.b16 %v625
        %v885 = vunpack.c.h.b16 %v625
        %v886 = vunpack.c.l.b16 %v626
        %v887 = vunpack.c.h.b16 %v626
        %v888 = vunpack.c.l.b16 %v627
        %v889 = vunpack.c.h.b16 %v627
        %v890 = vunpack.c.l.b16 %v628
        %v891 = vunpack.c.h.b16 %v628
        %v892 = vunpack.c.l.b16 %v629
        %v893 = vunpack.c.h.b16 %v629
        %v894 = vunpack.c.l.b16 %v630
        %v895 = vunpack.c.h.b16 %v630
        %v896 = vunpack.c.l.b16 %v631
        %v897 = vunpack.c.h.b16 %v631
        %v898 = vunpack.c.l.b16 %v632
        %v899 = vunpack.c.h.b16 %v632
        %v900 = vunpack.c.l.b16 %v633
        %v901 = vunpack.c.h.b16 %v633
        %v902 = vunpack.c.l.b16 %v634
        %v903 = vunpack.c.h.b16 %v634
        %v904 = vunpack.c.l.b16 %v635
        %v905 = vunpack.c.h.b16 %v635
        %v906 = vunpack.c.l.b16 %v636
        %v907 = vunpack.c.h.b16 %v636
        %v908 = vunpack.c.l.b16 %v637
        %v909 = vunpack.c.h.b16 %v637
        %v910 = vunpack.c.l.b16 %v638
        %v911 = vunpack.c.h.b16 %v638
        %v912 = vunpack.c.l.b16 %v639
        %v913 = vunpack.c.h.b16 %v639
        %v914 = vunpack.c.l.b16 %v640
        %v915 = vunpack.c.h.b16 %v640
        %v916 = vunpack.c.l.b16 %v641
        %v917 = vunpack.c.h.b16 %v641
        %v918 = vunpack.c.l.b16 %v642
        %v919 = vunpack.c.h.b16 %v642
        %v920 = vunpack.c.l.b16 %v643
        %v921 = vunpack.c.h.b16 %v643
        %v922 = vunpack.c.l.b16 %v644
        %v923 = vunpack.c.h.b16 %v644
        %v924 = vunpack.c.l.b16 %v645
        %v925 = vunpack.c.h.b16 %v645
        %v926 = vunpack.c.l.b16 %v646
        %v927 = vunpack.c.h.b16 %v646
        %v928 = vunpack.c.l.b16 %v647
        %v929 = vunpack.c.h.b16 %v647
        %v930 = vunpack.c.l.b16 %v648
        %v931 = vunpack.c.h.b16 %v648
        %v932 = vunpack.c.l.b16 %v649
        %v933 = vunpack.c.h.b16 %v649
        %v934 = vunpack.c.l.b16 %v650
        %v935 = vunpack.c.h.b16 %v650
        %v936 = vunpack.c.l.b16 %v651
        %v937 = vunpack.c.h.b16 %v651
        %v938 = vunpack.c.l.b16 %v652
        %v939 = vunpack.c.h.b16 %v652
        %v940 = vunpack.c.l.b16 %v653
        %v941 = vunpack.c.h.b16 %v653
        %v942 = vunpack.c.l.b16 %v654
        %v943 = vunpack.c.h.b16 %v654
        %v944 = vunpack.c.l.b16 %v655
        %v945 = vunpack.c.h.b16 %v655
        %v946 = vunpack.c.l.b16 %v656
        %v947 = vunpack.c.h.b16 %v656
        %v948 = vunpack.c.l.b16 %v657
        %v949 = vunpack.c.h.b16 %v657
        %v950 = vunpack.c.l.b16 %v658
        %v951 = vunpack.c.h.b16 %v658
        %v952 = vunpack.c.l.b16 %v659
        %v953 = vunpack.c.h.b16 %v659
        %v954 = vunpack.c.l.b16 %v660
        %v955 = vunpack.c.h.b16 %v660
        %v956 = vunpack.c.l.b16 %v661
        %v957 = vunpack.c.h.b16 %v661
        %v958 = vunpack.c.l.b16 %v662
        %v959 = vunpack.c.h.b16 %v662
        %v960 = vunpack.c.l.b16 %v663
        %v961 = vunpack.c.h.b16 %v663
        %v962 = vunpack.c.l.b16 %v664
        %v963 = vunpack.c.h.b16 %v664
        %v964 = vunpack.c.l.b16 %v665
        %v965 = vunpack.c.h.b16 %v665
        %v966 = vunpack.c.l.b16 %v666
        %v967 = vunpack.c.h.b16 %v666
        %v968 = vunpack.c.l.b16 %v667
        %v969 = vunpack.c.h.b16 %v667
        %v970 = vunpack.c.l.b16 %v668
        %v971 = vunpack.c.h.b16 %v668
        %v972 = vunpack.c.l.b16 %v669
        %v973 = vunpack.c.h.b16 %v669
        %v974 = vunpack.c.l.b16 %v670
        %v975 = vunpack.c.h.b16 %v670
        %v976 = vunpack.c.l.b16 %v671
        %v977 = vunpack.c.h.b16 %v671
        %v978 = vunpack.c.l.b16 %v672
        %v979 = vunpack.c.h.b16 %v672
        %v980 = vunpack.c.l.b16 %v673
        %v981 = vunpack.c.h.b16 %v673
        %v982 = vunpack.c.l.b16 %v674
        %v983 = vunpack.c.h.b16 %v674
        %v984 = vunpack.c.l.b16 %v675
        %v985 = vunpack.c.h.b16 %v675
        %v986 = vunpack.c.l.b16 %v676
        %v987 = vunpack.c.h.b16 %v676
        %v988 = vunpack.c.l.b16 %v677
        %v989 = vunpack.c.h.b16 %v677
        %v990 = vunpack.c.l.b16 %v678
        %v991 = vunpack.c.h.b16 %v678
        %v992 = vunpack.c.l.b16 %v679
        %v993 = vunpack.c.h.b16 %v679
        %v994 = vunpack.c.l.b16 %v680
        %v995 = vunpack.c.h.b16 %v680
        %v996 = vunpack.c.l.b16 %v681
        %v997 = vunpack.c.h.b16 %v681
        %v998 = vunpack.c.l.b16 %v682
        %v999 = vunpack.c.h.b16 %v682
        %v1000 = vunpack.c.l.b16 %v683
        %v1001 = vunpack.c.h.b16 %v683
        %v1002 = vunpack.c.l.b16 %v684
        %v1003 = vunpack.c.h.b16 %v684
        %v1004 = vunpack.c.l.b16 %v685
        %v1005 = vunpack.c.h.b16 %v685
        %v1006 = vpack.c.b16 %v816, %v814
        %v1007 = vpack.c.b16 %v817, %v815
        %v1008 = vpack.c.b16 %v820, %v818
        %v1009 = vpack.c.b16 %v821, %v819
        %v1010 = vpack.c.b16 %v824, %v822
        %v1011 = vpack.c.b16 %v825, %v823
        %v1012 = vpack.c.b16 %v828, %v826
        %v1013 = vpack.c.b16 %v829, %v827
        %v1014 = vpack.c.b16 %v832, %v830
        %v1015 = vpack.c.b16 %v833, %v831
        %v1016 = vpack.c.b16 %v836, %v834
        %v1017 = vpack.c.b16 %v837, %v835
        %v1018 = vpack.c.b16 %v840, %v838
        %v1019 = vpack.c.b16 %v841, %v839
        %v1020 = vpack.c.b16 %v844, %v842
        %v1021 = vpack.c.b16 %v845, %v843
        %v1022 = vpack.c.b16 %v848, %v846
        %v1023 = vpack.c.b16 %v849, %v847
        %v1024 = vpack.c.b16 %v852, %v850
        %v1025 = vpack.c.b16 %v853, %v851
        %v1026 = vpack.c.b16 %v856, %v854
        %v1027 = vpack.c.b16 %v857, %v855
        %v1028 = vpack.c.b16 %v860, %v858
        %v1029 = vpack.c.b16 %v861, %v859
        %v1030 = vpack.c.b16 %v864, %v862
        %v1031 = vpack.c.b16 %v865, %v863
        %v1032 = vpack.c.b16 %v868, %v866
        %v1033 = vpack.c.b16 %v869, %v867
        %v1034 = vpack.c.b16 %v872, %v870
        %v1035 = vpack.c.b16 %v873, %v871
        %v1036 = vpack.c.b16 %v876, %v874
        %v1037 = vpack.c.b16 %v877, %v875
        %v1038 = vpack.c.b16 %v880, %v878
        %v1039 = vpack.c.b16 %v881, %v879
        %v1040 = vpack.c.b16 %v884, %v882
        %v1041 = vpack.c.b16 %v885, %v883
        %v1042 = vpack.c.b16 %v888, %v886
        %v1043 = vpack.c.b16 %v889, %v887
        %v1044 = vpack.c.b16 %v892, %v890
        %v1045 = vpack.c.b16 %v893, %v891
        %v1046 = vpack.c.b16 %v896, %v894
        %v1047 = vpack.c.b16 %v897, %v895
        %v1048 = vpack.c.b16 %v900, %v898
        %v1049 = vpack.c.b16 %v901, %v899
        %v1050 = vpack.c.b16 %v904, %v902
        %v1051 = vpack.c.b16 %v905, %v903
        %v1052 = vpack.c.b16 %v908, %v906
        %v1053 = vpack.c.b16 %v909, %v907
        %v1054 = vpack.c.b16 %v912, %v910
        %v1055 = vpack.c.b16 %v913, %v911
        %v1056 = vpack.c.b16 %v916, %v914
        %v1057 = vpack.c.b16 %v917, %v915
        %v1058 = vpack.c.b16 %v920, %v918
        %v1059 = vpack.c.b16 %v921, %v919
        %v1060 = vpack.c.b16 %v924, %v922
        %v1061 = vpack.c.b16 %v925, %v923
        %v1062 = vpack.c.b16 %v928, %v926
        %v1063 = vpack.c.b16 %v929, %v927
        %v1064 = vpack.c.b16 %v932, %v930
        %v1065 = vpack.c.b16 %v933, %v931
        %v1066 = vpack.c.b16 %v936, %v934
        %v1067 = vpack.c.b16 %v937, %v935
        %v1068 = vpack.c.b16 %v940, %v938
        %v1069 = vpack.c.b16 %v941, %v939
        %v1070 = vpack.c.b16 %v944, %v942
        %v1071 = vpack.c.b16 %v945, %v943
        %v1072 = vpack.c.b16 %v948, %v946
        %v1073 = vpack.c.b16 %v949, %v947
        %v1074 = vpack.c.b16 %v952, %v950
        %v1075 = vpack.c.b16 %v953, %v951
        %v1076 = vpack.c.b16 %v956, %v954
        %v1077 = vpack.c.b16 %v957, %v955
        %v1078 = vpack.c.b16 %v960, %v958
        %v1079 = vpack.c.b16 %v961, %v959
        %v1080 = vpack.c.b16 %v964, %v962
        %v1081 = vpack.c.b16 %v965, %v963
        %v1082 = vpack.c.b16 %v968, %v966
        %v1083 = vpack.c.b16 %v969, %v967
        %v1084 = vpack.c.b16 %v972, %v970
        %v1085 = vpack.c.b16 %v973, %v971
        %v1086 = vpack.c.b16 %v976, %v974
        %v1087 = vpack.c.b16 %v977, %v975
        %v1088 = vpack.c.b16 %v980, %v978
        %v1089 = vpack.c.b16 %v981, %v979
        %v1090 = vpack.c.b16 %v984, %v982
        %v1091 = vpack.c.b16 %v985, %v983
        %v1092 = vpack.c.b16 %v988, %v986
        %v1093 = vpack.c.b16 %v989, %v987
        %v1094 = vpack.c.b16 %v992, %v990
        %v1095 = vpack.c.b16 %v993, %v991
        %v1096 = vpack.c.b16 %v996, %v994
        %v1097 = vpack.c.b16 %v997, %v995
        %v1098 = vpack.c.b16 %v1000, %v998
        %v1099 = vpack.c.b16 %v1001, %v999
        %v1100 = vpack.c.b16 %v1004, %v1002
        %v1101 = vpack.c.b16 %v1005, %v1003
        %1198 = vmatprep.subr.bf16.mxu0 %v1021
        %1199 = vmatpush1.bf16.xpose.msra.mxu0 %v1020
        %1200 = vmatprep.subr.bf16.mxu0 %v1019
        %1201 = vmatpush1.bf16.xpose.msra.mxu0 %v1018
        %1202 = vmatprep.subr.bf16.mxu0 %v1017
        %1203 = vmatpush1.bf16.xpose.msra.mxu0 %v1016
        %1204 = vmatprep.subr.bf16.mxu0 %v1015
        %1205 = vmatpush1.bf16.xpose.msra.mxu0 %v1014
        %1206 = vmatprep.subr.bf16.mxu0 %v1013
        %1207 = vmatpush1.bf16.xpose.msra.mxu0 %v1012
        %1208 = vmatprep.subr.bf16.mxu0 %v1011
        %1209 = vmatpush1.bf16.xpose.msra.mxu0 %v1010
        %1210 = vmatprep.subr.bf16.mxu0 %v1009
        %1211 = vmatpush1.bf16.xpose.msra.mxu0 %v1008
        %1212 = vmatprep.subr.bf16.mxu0 %v1007
        %1213 = vmatpush1.bf16.xpose.msra.mxu0 %v1006
        %1214 = vmatprep.subr.bf16.mxu0 %v1037
        %1215 = vmatpush2.bf16.xpose.msra.mxu0 %v1036
        %1216 = vmatprep.subr.bf16.mxu0 %v1035
        %1217 = vmatpush2.bf16.xpose.msra.mxu0 %v1034
        %1218 = vmatprep.subr.bf16.mxu0 %v1033
        %1219 = vmatpush2.bf16.xpose.msra.mxu0 %v1032
        %1220 = vmatprep.subr.bf16.mxu0 %v1031
        %1221 = vmatpush2.bf16.xpose.msra.mxu0 %v1030
        %1222 = vmatprep.subr.bf16.mxu0 %v1029
        %1223 = vmatpush2.bf16.xpose.msra.mxu0 %v1028
        %1224 = vmatprep.subr.bf16.mxu0 %v1027
        %1225 = vmatpush2.bf16.xpose.msra.mxu0 %v1026
        %1226 = vmatprep.subr.bf16.mxu0 %v1025
        %1227 = vmatpush2.bf16.xpose.msra.mxu0 %v1024
        %1228 = vmatprep.subr.bf16.mxu0 %v1023
        %1229 = vmatpush2.bf16.xpose.msra.mxu0 %v1022
        %1230 = vmatprep.mubr.bf16.mxu0 %v589
        %1231 = vmatmul.mubr.bf16.gmra.mxu0 %v588
        %v1232 = vpop.f32.mrf.mxu0
        %v1233 = vadd.f32 %v691, %v1232
        %v1234 = vpop.f32.mrf.mxu0
        %v1235 = vadd.f32 %v695, %v1234
        %v1236 = vpop.f32.mrf.mxu0
        %v1237 = vpop.f32.mrf.mxu0
        %1238 = vdwg.mxu0
        %1239 = vmatprep.subr.bf16.mxu0 %v1053
        %1240 = vmatpush1.bf16.xpose.msra.mxu0 %v1052
        %1241 = vmatprep.subr.bf16.mxu0 %v1051
        %1242 = vmatpush1.bf16.xpose.msra.mxu0 %v1050
        %1243 = vmatprep.subr.bf16.mxu0 %v1049
        %1244 = vmatpush1.bf16.xpose.msra.mxu0 %v1048
        %1245 = vmatprep.subr.bf16.mxu0 %v1047
        %1246 = vmatpush1.bf16.xpose.msra.mxu0 %v1046
        %1247 = vmatprep.subr.bf16.mxu0 %v1045
        %1248 = vmatpush1.bf16.xpose.msra.mxu0 %v1044
        %1249 = vmatprep.subr.bf16.mxu0 %v1043
        %1250 = vmatpush1.bf16.xpose.msra.mxu0 %v1042
        %1251 = vmatprep.subr.bf16.mxu0 %v1041
        %1252 = vmatpush1.bf16.xpose.msra.mxu0 %v1040
        %1253 = vmatprep.subr.bf16.mxu0 %v1039
        %1254 = vmatpush1.bf16.xpose.msra.mxu0 %v1038
        %1255 = vmatprep.subr.bf16.mxu0 %v1069
        %1256 = vmatpush2.bf16.xpose.msra.mxu0 %v1068
        %1257 = vmatprep.subr.bf16.mxu0 %v1067
        %1258 = vmatpush2.bf16.xpose.msra.mxu0 %v1066
        %1259 = vmatprep.subr.bf16.mxu0 %v1065
        %1260 = vmatpush2.bf16.xpose.msra.mxu0 %v1064
        %1261 = vmatprep.subr.bf16.mxu0 %v1063
        %1262 = vmatpush2.bf16.xpose.msra.mxu0 %v1062
        %1263 = vmatprep.subr.bf16.mxu0 %v1061
        %1264 = vmatpush2.bf16.xpose.msra.mxu0 %v1060
        %1265 = vmatprep.subr.bf16.mxu0 %v1059
        %1266 = vmatpush2.bf16.xpose.msra.mxu0 %v1058
        %1267 = vmatprep.subr.bf16.mxu0 %v1057
        %1268 = vmatpush2.bf16.xpose.msra.mxu0 %v1056
        %1269 = vmatprep.subr.bf16.mxu0 %v1055
        %1270 = vmatpush2.bf16.xpose.msra.mxu0 %v1054
        %1271 = vmatprep.mubr.bf16.mxu0 %v589
        %1272 = vmatmul.mubr.bf16.gmra.mxu0 %v588
        %v1273 = vpop.f32.mrf.mxu0
        %v1274 = vadd.f32 %v699, %v1273
        %v1275 = vpop.f32.mrf.mxu0
        %v1276 = vadd.f32 %v703, %v1275
        %v1277 = vpop.f32.mrf.mxu0
        %v1278 = vpop.f32.mrf.mxu0
        %1279 = vdwg.mxu0
        %1280 = vmatprep.subr.bf16.mxu0 %v1085
        %1281 = vmatpush1.bf16.xpose.msra.mxu0 %v1084
        %1282 = vmatprep.subr.bf16.mxu0 %v1083
        %1283 = vmatpush1.bf16.xpose.msra.mxu0 %v1082
        %1284 = vmatprep.subr.bf16.mxu0 %v1081
        %1285 = vmatpush1.bf16.xpose.msra.mxu0 %v1080
        %1286 = vmatprep.subr.bf16.mxu0 %v1079
        %1287 = vmatpush1.bf16.xpose.msra.mxu0 %v1078
        %1288 = vmatprep.subr.bf16.mxu0 %v1077
        %1289 = vmatpush1.bf16.xpose.msra.mxu0 %v1076
        %1290 = vmatprep.subr.bf16.mxu0 %v1075
        %1291 = vmatpush1.bf16.xpose.msra.mxu0 %v1074
        %1292 = vmatprep.subr.bf16.mxu0 %v1073
        %1293 = vmatpush1.bf16.xpose.msra.mxu0 %v1072
        %1294 = vmatprep.subr.bf16.mxu0 %v1071
        %1295 = vmatpush1.bf16.xpose.msra.mxu0 %v1070
        %1296 = vmatprep.subr.bf16.mxu0 %v1101
        %1297 = vmatpush2.bf16.xpose.msra.mxu0 %v1100
        %1298 = vmatprep.subr.bf16.mxu0 %v1099
        %1299 = vmatpush2.bf16.xpose.msra.mxu0 %v1098
        %1300 = vmatprep.subr.bf16.mxu0 %v1097
        %1301 = vmatpush2.bf16.xpose.msra.mxu0 %v1096
        %1302 = vmatprep.subr.bf16.mxu0 %v1095
        %1303 = vmatpush2.bf16.xpose.msra.mxu0 %v1094
        %1304 = vmatprep.subr.bf16.mxu0 %v1093
        %1305 = vmatpush2.bf16.xpose.msra.mxu0 %v1092
        %1306 = vmatprep.subr.bf16.mxu0 %v1091
        %1307 = vmatpush2.bf16.xpose.msra.mxu0 %v1090
        %1308 = vmatprep.subr.bf16.mxu0 %v1089
        %1309 = vmatpush2.bf16.xpose.msra.mxu0 %v1088
        %1310 = vmatprep.subr.bf16.mxu0 %v1087
        %1311 = vmatpush2.bf16.xpose.msra.mxu0 %v1086
        %1312 = vmatprep.mubr.bf16.mxu0 %v589
        %1313 = vmatmul.mubr.bf16.gmra.mxu0 %v588
        %v1314 = vpop.f32.mrf.mxu0
        %v1315 = vadd.f32 %v707, %v1314
        %v1316 = vpop.f32.mrf.mxu0
        %v1317 = vadd.f32 %v711, %v1316
        %v1318 = vpop.f32.mrf.mxu0
        %v1319 = vpop.f32.mrf.mxu0
        %1320 = vdwg.mxu0
        %v1321 = vpack.c.bf16 %v1233, %v1233
        %v1322 = vpack.c.bf16 %v1235, %v1235
        %v1323 = vpack.c.bf16 %v1315, %v1315
        %v1324 = vpack.c.bf16 %v1317, %v1317
        %v1325 = vcombine.low %v1321, %v1323
        %v1327 = vunpack.c.l.s4 1983009808
        %v1328 = vunpack.c.0.s8 %v1327
        %v1329 = vlaneseq
        %v1330 = vshrl.u32 %v1329, 7
        %v1331 = vsub.s32 %v1328, %v1330
        %v1332 = vrot.slane %v1325, %v1331
        %v1333 = vpack.c.bf16 %v1274, %v1274
        %v1335 = vunpack.c.l.s4 1983009808
        %v1336 = vunpack.c.0.s8 %v1335
        %v1337 = vlaneseq
        %v1338 = vshrl.u32 %v1337, 7
        %v1339 = vsub.s32 %v1336, %v1338
        %v1340 = vrot.slane %v1333, %v1339
        %v1341 = vcombine.low %v1332, %v1340
        %v1342 = vcombine.high %v1332, %v1340
        %v1344 = vunpack.c.l.s4 1934713408
        %v1345 = vunpack.c.0.s8 %v1344
        %v1346 = vlaneseq
        %v1347 = vshrl.u32 %v1346, 7
        %v1348 = vsub.s32 %v1345, %v1347
        %v1349 = vrot.slane %v1341, %v1348
        %v1351 = vunpack.c.l.s4 1934713408
        %v1352 = vunpack.c.0.s8 %v1351
        %v1353 = vlaneseq
        %v1354 = vshrl.u32 %v1353, 7
        %v1355 = vsub.s32 %v1352, %v1354
        %v1356 = vrot.slane %v1342, %v1355
        %v1357 = vcombine.high %v1349, 0
        %v1358 = vcombine.high %v1356, 0
        %v1359 = vcombine.low %v1322, %v1324
        %v1361 = vunpack.c.l.s4 1983009808
        %v1362 = vunpack.c.0.s8 %v1361
        %v1363 = vlaneseq
        %v1364 = vshrl.u32 %v1363, 7
        %v1365 = vsub.s32 %v1362, %v1364
        %v1366 = vrot.slane %v1359, %v1365
        %v1367 = vpack.c.bf16 %v1276, %v1276
        %v1369 = vunpack.c.l.s4 1983009808
        %v1370 = vunpack.c.0.s8 %v1369
        %v1371 = vlaneseq
        %v1372 = vshrl.u32 %v1371, 7
        %v1373 = vsub.s32 %v1370, %v1372
        %v1374 = vrot.slane %v1367, %v1373
        %v1375 = vcombine.low %v1366, %v1374
        %v1376 = vcombine.high %v1366, %v1374
        %v1378 = vunpack.c.l.s4 1934713408
        %v1379 = vunpack.c.0.s8 %v1378
        %v1380 = vlaneseq
        %v1381 = vshrl.u32 %v1380, 7
        %v1382 = vsub.s32 %v1379, %v1381
        %v1383 = vrot.slane %v1375, %v1382
        %v1385 = vunpack.c.l.s4 1934713408
        %v1386 = vunpack.c.0.s8 %v1385
        %v1387 = vlaneseq
        %v1388 = vshrl.u32 %v1387, 7
        %v1389 = vsub.s32 %v1386, %v1388
        %v1390 = vrot.slane %v1376, %v1389
        %v1391 = vcombine.high %v1383, 0
        %v1392 = vcombine.high %v1390, 0
        %v1395 = vpack.i.b16 %v1383, %v1349
        %v1397 = vshrl.u32 %v1349, 16
        %v1398 = vshrl.u32 %v1383, 16
        %v1399 = vpack.i.b16 %v1398, %v1397
        %v1403 = vpack.i.b16 %v1391, %v1357
        %v1405 = vshrl.u32 %v1357, 16
        %v1406 = vshrl.u32 %v1391, 16
        %v1407 = vpack.i.b16 %v1406, %v1405
        %v1411 = vpack.i.b16 %v1390, %v1356
        %v1413 = vshrl.u32 %v1356, 16
        %v1414 = vshrl.u32 %v1390, 16
        %v1415 = vpack.i.b16 %v1414, %v1413
        %v1419 = vpack.i.b16 %v1392, %v1358
        %v1421 = vshrl.u32 %v1358, 16
        %v1422 = vshrl.u32 %v1392, 16
        %v1423 = vpack.i.b16 %v1422, %v1421
        %v1425 = vcombine.low %v1395, %v1411
        %v1427 = vunpack.c.l.s4 1983009808
        %v1428 = vunpack.c.0.s8 %v1427
        %v1429 = vlaneseq
        %v1430 = vshrl.u32 %v1429, 7
        %v1431 = vsub.s32 %v1428, %v1430
        %v1432 = vrot.slane %v1425, %v1431
        %v1433 = vcombine.low %v1403, %v1419
        %v1435 = vunpack.c.l.s4 1983009808
        %v1436 = vunpack.c.0.s8 %v1435
        %v1437 = vlaneseq
        %v1438 = vshrl.u32 %v1437, 7
        %v1439 = vsub.s32 %v1436, %v1438
        %v1440 = vrot.slane %v1433, %v1439
        %v1441 = vcombine.low %v1432, %v1440
        %v1442 = vcombine.high %v1432, %v1440
        %v1444 = vunpack.c.l.s4 1934713408
        %v1445 = vunpack.c.0.s8 %v1444
        %v1446 = vlaneseq
        %v1447 = vshrl.u32 %v1446, 7
        %v1448 = vsub.s32 %v1445, %v1447
        %v1449 = vrot.slane %v1441, %v1448
        %v1450 = vcombine.high %v1449, 0
        %v1452 = vunpack.c.l.s4 1934713408
        %v1453 = vunpack.c.0.s8 %v1452
        %v1454 = vlaneseq
        %v1455 = vshrl.u32 %v1454, 7
        %v1456 = vsub.s32 %v1453, %v1455
        %v1457 = vrot.slane %v1442, %v1456
        %v1458 = vcombine.low %v1399, %v1415
        %v1460 = vunpack.c.l.s4 1983009808
        %v1461 = vunpack.c.0.s8 %v1460
        %v1462 = vlaneseq
        %v1463 = vshrl.u32 %v1462, 7
        %v1464 = vsub.s32 %v1461, %v1463
        %v1465 = vrot.slane %v1458, %v1464
        %v1466 = vcombine.low %v1407, %v1423
        %v1468 = vunpack.c.l.s4 1983009808
        %v1469 = vunpack.c.0.s8 %v1468
        %v1470 = vlaneseq
        %v1471 = vshrl.u32 %v1470, 7
        %v1472 = vsub.s32 %v1469, %v1471
        %v1473 = vrot.slane %v1466, %v1472
        %v1474 = vcombine.low %v1465, %v1473
        %v1475 = vcombine.high %v1465, %v1473
        %v1477 = vunpack.c.l.s4 1934713408
        %v1478 = vunpack.c.0.s8 %v1477
        %v1479 = vlaneseq
        %v1480 = vshrl.u32 %v1479, 7
        %v1481 = vsub.s32 %v1478, %v1480
        %v1482 = vrot.slane %v1474, %v1481
        %v1483 = vcombine.high %v1482, 0
        %v1485 = vunpack.c.l.s4 1934713408
        %v1486 = vunpack.c.0.s8 %v1485
        %v1487 = vlaneseq
        %v1488 = vshrl.u32 %v1487, 7
        %v1489 = vsub.s32 %v1486, %v1488
        %v1490 = vrot.slane %v1475, %v1489
        %v1493 = vpack.i.b16 %v1482, %v1449
        %v1495 = vshrl.u32 %v1449, 16
        %v1496 = vshrl.u32 %v1482, 16
        %v1497 = vpack.i.b16 %v1496, %v1495
        %v1501 = vpack.i.b16 %v1483, %v1450
        %v1503 = vshrl.u32 %v1450, 16
        %v1504 = vshrl.u32 %v1483, 16
        %v1505 = vpack.i.b16 %v1504, %v1503
        %v1509 = vpack.i.b16 %v1490, %v1457
        %v1510 = vshrl.u32 %v1457, 16
        %v1511 = vshrl.u32 %v1490, 16
        %v1512 = vpack.i.b16 %v1511, %v1510
        %1513 = vmatprep.subr.bf16.mxu0 0
        %1514 = vmatpush1.bf16.xpose.msra.mxu0 0
        %1515 = vmatprep.subr.bf16.mxu0 0
        %1516 = vmatpush1.bf16.xpose.msra.mxu0 0
        %1517 = vmatprep.subr.bf16.mxu0 0
        %1518 = vmatpush1.bf16.xpose.msra.mxu0 0
        %1519 = vmatprep.subr.bf16.mxu0 0
        %1520 = vmatpush1.bf16.xpose.msra.mxu0 0
        %1521 = vmatprep.subr.bf16.mxu0 0
        %1522 = vmatpush1.bf16.xpose.msra.mxu0 0
        %1523 = vmatprep.subr.bf16.mxu0 0
        %1524 = vmatpush1.bf16.xpose.msra.mxu0 0
        %1525 = vmatprep.subr.bf16.mxu0 0
        %1526 = vmatpush1.bf16.xpose.msra.mxu0 0
        %1527 = vmatprep.subr.bf16.mxu0 0
        %1528 = vmatpush1.bf16.xpose.msra.mxu0 %v1501
        %1529 = vmatprep.subr.bf16.mxu0 0
        %1530 = vmatpush2.bf16.xpose.msra.mxu0 0
        %1531 = vmatprep.subr.bf16.mxu0 0
        %1532 = vmatpush2.bf16.xpose.msra.mxu0 0
        %1533 = vmatprep.subr.bf16.mxu0 0
        %1534 = vmatpush2.bf16.xpose.msra.mxu0 0
        %1535 = vmatprep.subr.bf16.mxu0 0
        %1536 = vmatpush2.bf16.xpose.msra.mxu0 0
        %1537 = vmatprep.subr.bf16.mxu0 0
        %1538 = vmatpush2.bf16.xpose.msra.mxu0 0
        %1539 = vmatprep.subr.bf16.mxu0 0
        %1540 = vmatpush2.bf16.xpose.msra.mxu0 0
        %1541 = vmatprep.subr.bf16.mxu0 0
        %1542 = vmatpush2.bf16.xpose.msra.mxu0 0
        %1543 = vmatprep.subr.bf16.mxu0 0
        %1544 = vmatpush2.bf16.xpose.msra.mxu0 0
        %1545 = vmatprep.mubr.bf16.mxu0 0
        %1546 = vmatmul.mubr.bf16.gmra.mxu0 %v1493
        %v1547 = vpop.f32.mrf.mxu0
        %v1548 = vadd.f32 0.0, %v1547
        %v1549 = vpop.f32.mrf.mxu0
        %v1550 = vpop.f32.mrf.mxu0
        %v1551 = vpop.f32.mrf.mxu0
        %1552 = vdwg.mxu0
        %1553 = vmatprep.subr.bf16.mxu0 0
        %1554 = vmatpush1.bf16.xpose.msra.mxu0 0
        %1555 = vmatprep.subr.bf16.mxu0 0
        %1556 = vmatpush1.bf16.xpose.msra.mxu0 0
        %1557 = vmatprep.subr.bf16.mxu0 0
        %1558 = vmatpush1.bf16.xpose.msra.mxu0 0
        %1559 = vmatprep.subr.bf16.mxu0 0
        %1560 = vmatpush1.bf16.xpose.msra.mxu0 0
        %1561 = vmatprep.subr.bf16.mxu0 0
        %1562 = vmatpush1.bf16.xpose.msra.mxu0 0
        %1563 = vmatprep.subr.bf16.mxu0 0
        %1564 = vmatpush1.bf16.xpose.msra.mxu0 0
        %1565 = vmatprep.subr.bf16.mxu0 0
        %1566 = vmatpush1.bf16.xpose.msra.mxu0 0
        %1567 = vmatprep.subr.bf16.mxu0 0
        %1568 = vmatpush1.bf16.xpose.msra.mxu0 %v1505
        %1569 = vmatprep.subr.bf16.mxu0 0
        %1570 = vmatpush2.bf16.xpose.msra.mxu0 0
        %1571 = vmatprep.subr.bf16.mxu0 0
        %1572 = vmatpush2.bf16.xpose.msra.mxu0 0
        %1573 = vmatprep.subr.bf16.mxu0 0
        %1574 = vmatpush2.bf16.xpose.msra.mxu0 0
        %1575 = vmatprep.subr.bf16.mxu0 0
        %1576 = vmatpush2.bf16.xpose.msra.mxu0 0
        %1577 = vmatprep.subr.bf16.mxu0 0
        %1578 = vmatpush2.bf16.xpose.msra.mxu0 0
        %1579 = vmatprep.subr.bf16.mxu0 0
        %1580 = vmatpush2.bf16.xpose.msra.mxu0 0
        %1581 = vmatprep.subr.bf16.mxu0 0
        %1582 = vmatpush2.bf16.xpose.msra.mxu0 0
        %1583 = vmatprep.subr.bf16.mxu0 0
        %1584 = vmatpush2.bf16.xpose.msra.mxu0 0
        %1585 = vmatprep.mubr.bf16.mxu0 0
        %1586 = vmatmul.mubr.bf16.gmra.mxu0 %v1497
        %v1587 = vpop.f32.mrf.mxu0
        %v1588 = vadd.f32 0.0, %v1587
        %v1589 = vpop.f32.mrf.mxu0
        %v1590 = vpop.f32.mrf.mxu0
        %v1591 = vpop.f32.mrf.mxu0
        %1592 = vdwg.mxu0
        %vm1593 = vcmask 64512
        %v1594 = vsel %vm1593, %v1548, -inf
        %1595 = vmax.xlane.f32.xlu0 %v1594
        %v1596 = vpop.xlane.xlu0 %1595
        %v1597 = vsel %vm1593, %v1588, -inf
        %1598 = vmax.xlane.f32.xlu0 %v1597
        %v1599 = vpop.xlane.xlu0 %1598
        %v1600 = vsub.f32 %v1548, %v1596
        %v1601 = vsub.f32 %v1588, %v1599
        %v1602 = vmul.f32 %v1600, 1.442695
        %v1603 = vpow.pop %v1602
        %v1604 = vmul.f32 %v1601, 1.442695
        %v1605 = vpow.pop %v1604
        %v1606 = vsel %vm1593, %v1603, 0.0
        %1607 = vadd.xlane.f32.xlu0 %v1606
        %v1608 = vpop.xlane.xlu0 %1607
        %v1609 = vsel %vm1593, %v1605, 0.0
        %1610 = vadd.xlane.f32.xlu0 %v1609
        %v1611 = vpop.xlane.xlu0 %1610
        %v1612 = vpack.c.bf16 %v1603, %v1603
        %v1613 = vpack.c.bf16 %v1605, %v1605
        %v1615 = vsel %vm1593, %v1612, 0
        %vm1617 = vcmask 1043456
        %v1619 = vsel %vm1617, %v1509, 0
        %1621 = vmatprep.subr.bf16.mxu0 0
        %1622 = vmatpush1.bf16.msra.mxu0 0
        %1623 = vmatprep.subr.bf16.mxu0 0
        %1624 = vmatpush1.bf16.msra.mxu0 0
        %1625 = vmatprep.subr.bf16.mxu0 0
        %1626 = vmatpush1.bf16.msra.mxu0 0
        %1627 = vmatprep.subr.bf16.mxu0 0
        %1628 = vmatpush1.bf16.msra.mxu0 0
        %1629 = vmatprep.subr.bf16.mxu0 0
        %1630 = vmatpush1.bf16.msra.mxu0 0
        %1631 = vmatprep.subr.bf16.mxu0 0
        %1632 = vmatpush1.bf16.msra.mxu0 0
        %1633 = vmatprep.subr.bf16.mxu0 0
        %1634 = vmatpush1.bf16.msra.mxu0 0
        %1635 = vmatprep.subr.bf16.mxu0 0
        %1636 = vmatpush1.bf16.msra.mxu0 %v1619
        %1637 = vmatprep.subr.bf16.mxu0 0
        %1638 = vmatpush2.bf16.msra.mxu0 0
        %1639 = vmatprep.subr.bf16.mxu0 0
        %1640 = vmatpush2.bf16.msra.mxu0 0
        %1641 = vmatprep.subr.bf16.mxu0 0
        %1642 = vmatpush2.bf16.msra.mxu0 0
        %1643 = vmatprep.subr.bf16.mxu0 0
        %1644 = vmatpush2.bf16.msra.mxu0 0
        %1645 = vmatprep.subr.bf16.mxu0 0
        %1646 = vmatpush2.bf16.msra.mxu0 0
        %1647 = vmatprep.subr.bf16.mxu0 0
        %1648 = vmatpush2.bf16.msra.mxu0 0
        %1649 = vmatprep.subr.bf16.mxu0 0
        %1650 = vmatpush2.bf16.msra.mxu0 0
        %1651 = vmatprep.subr.bf16.mxu0 0
        %1652 = vmatpush2.bf16.msra.mxu0 0
        %1653 = vmatprep.mubr.bf16.mxu0 0
        %1654 = vmatmul.mubr.bf16.gmra.mxu0 %v1615
        %v1655 = vpop.f32.mrf.mxu0
        %v1656 = vadd.f32 0.0, %v1655
        %v1657 = vpop.f32.mrf.mxu0
        %v1658 = vpop.f32.mrf.mxu0
        %v1659 = vpop.f32.mrf.mxu0
        %1660 = vdwg.mxu0
        %v1662 = vsel %vm1593, %v1613, 0
        %v1665 = vsel %vm1617, %v1512, 0
        %1667 = vmatprep.subr.bf16.mxu0 0
        %1668 = vmatpush1.bf16.msra.mxu0 0
        %1669 = vmatprep.subr.bf16.mxu0 0
        %1670 = vmatpush1.bf16.msra.mxu0 0
        %1671 = vmatprep.subr.bf16.mxu0 0
        %1672 = vmatpush1.bf16.msra.mxu0 0
        %1673 = vmatprep.subr.bf16.mxu0 0
        %1674 = vmatpush1.bf16.msra.mxu0 0
        %1675 = vmatprep.subr.bf16.mxu0 0
        %1676 = vmatpush1.bf16.msra.mxu0 0
        %1677 = vmatprep.subr.bf16.mxu0 0
        %1678 = vmatpush1.bf16.msra.mxu0 0
        %1679 = vmatprep.subr.bf16.mxu0 0
        %1680 = vmatpush1.bf16.msra.mxu0 0
        %1681 = vmatprep.subr.bf16.mxu0 0
        %1682 = vmatpush1.bf16.msra.mxu0 %v1665
        %1683 = vmatprep.subr.bf16.mxu0 0
        %1684 = vmatpush2.bf16.msra.mxu0 0
        %1685 = vmatprep.subr.bf16.mxu0 0
        %1686 = vmatpush2.bf16.msra.mxu0 0
        %1687 = vmatprep.subr.bf16.mxu0 0
        %1688 = vmatpush2.bf16.msra.mxu0 0
        %1689 = vmatprep.subr.bf16.mxu0 0
        %1690 = vmatpush2.bf16.msra.mxu0 0
        %1691 = vmatprep.subr.bf16.mxu0 0
        %1692 = vmatpush2.bf16.msra.mxu0 0
        %1693 = vmatprep.subr.bf16.mxu0 0
        %1694 = vmatpush2.bf16.msra.mxu0 0
        %1695 = vmatprep.subr.bf16.mxu0 0
        %1696 = vmatpush2.bf16.msra.mxu0 0
        %1697 = vmatprep.subr.bf16.mxu0 0
        %1698 = vmatpush2.bf16.msra.mxu0 0
        %1699 = vmatprep.mubr.bf16.mxu0 0
        %1700 = vmatmul.mubr.bf16.gmra.mxu0 %v1662
        %v1701 = vpop.f32.mrf.mxu0
        %v1702 = vadd.f32 0.0, %v1701
        %v1703 = vpop.f32.mrf.mxu0
        %v1704 = vpop.f32.mrf.mxu0
        %v1705 = vpop.f32.mrf.mxu0
        %1706 = vdwg.mxu0
        %v1707 = vrcp.pop %v1608
        %v1708 = vrcp.pop %v1611
        %v1709 = vmul.f32 %v1656, %v1707
        %v1710 = vmul.f32 %v1702, %v1708
        %v1711 = vcombine.high %v1709, 0.0
        %v1713 = vunpack.c.l.s4 1983009808
        %v1714 = vunpack.c.0.s8 %v1713
        %v1715 = vlaneseq
        %v1716 = vshrl.u32 %v1715, 7
        %v1717 = vsub.s32 %v1714, %v1716
        %v1718 = vrot.slane %v1709, %v1717
        %v1720 = vunpack.c.l.s4 1983009808
        %v1721 = vunpack.c.0.s8 %v1720
        %v1722 = vlaneseq
        %v1723 = vshrl.u32 %v1722, 7
        %v1724 = vsub.s32 %v1721, %v1723
        %v1725 = vrot.slane %v1711, %v1724
        %v1726 = vcombine.high %v1710, 0.0
        %v1728 = vunpack.c.l.s4 1983009808
        %v1729 = vunpack.c.0.s8 %v1728
        %v1730 = vlaneseq
        %v1731 = vshrl.u32 %v1730, 7
        %v1732 = vsub.s32 %v1729, %v1731
        %v1733 = vrot.slane %v1710, %v1732
        %v1735 = vunpack.c.l.s4 1983009808
        %v1736 = vunpack.c.0.s8 %v1735
        %v1737 = vlaneseq
        %v1738 = vshrl.u32 %v1737, 7
        %v1739 = vsub.s32 %v1736, %v1738
        %v1740 = vrot.slane %v1726, %v1739
        %v1741 = vcombine.low %v1718, %v1733
        %v1742 = vcombine.high %v1718, %v1733
        %v1744 = vunpack.c.l.s4 1934713408
        %v1745 = vunpack.c.0.s8 %v1744
        %v1746 = vlaneseq
        %v1747 = vshrl.u32 %v1746, 7
        %v1748 = vsub.s32 %v1745, %v1747
        %v1749 = vrot.slane %v1741, %v1748
        %v1751 = vunpack.c.l.s4 1934713408
        %v1752 = vunpack.c.0.s8 %v1751
        %v1753 = vlaneseq
        %v1754 = vshrl.u32 %v1753, 7
        %v1755 = vsub.s32 %v1752, %v1754
        %v1756 = vrot.slane %v1742, %v1755
        %v1757 = vcombine.low %v1725, %v1740
        %v1758 = vcombine.high %v1725, %v1740
        %v1760 = vunpack.c.l.s4 1934713408
        %v1761 = vunpack.c.0.s8 %v1760
        %v1762 = vlaneseq
        %v1763 = vshrl.u32 %v1762, 7
        %v1764 = vsub.s32 %v1761, %v1763
        %v1765 = vrot.slane %v1757, %v1764
        %v1767 = vunpack.c.l.s4 1934713408
        %v1768 = vunpack.c.0.s8 %v1767
        %v1769 = vlaneseq
        %v1770 = vshrl.u32 %v1769, 7
        %v1771 = vsub.s32 %v1768, %v1770
        %v1772 = vrot.slane %v1758, %v1771
        %v1773 = vcombine.high %v1749, 0.0
        %v1774 = vcombine.high %v1756, 0.0
        %v1775 = vcombine.high %v1765, 0.0
        %v1776 = vcombine.high %v1772, 0.0
        %v1777 = vcombine.low %v1749, %v1756
        %v1779 = vunpack.c.l.s4 1983009808
        %v1780 = vunpack.c.0.s8 %v1779
        %v1781 = vlaneseq
        %v1782 = vshrl.u32 %v1781, 7
        %v1783 = vsub.s32 %v1780, %v1782
        %v1784 = vrot.slane %v1777, %v1783
        %v1785 = vcombine.low %v1773, %v1774
        %v1787 = vunpack.c.l.s4 1983009808
        %v1788 = vunpack.c.0.s8 %v1787
        %v1789 = vlaneseq
        %v1790 = vshrl.u32 %v1789, 7
        %v1791 = vsub.s32 %v1788, %v1790
        %v1792 = vrot.slane %v1785, %v1791
        %v1793 = vcombine.low %v1765, %v1772
        %v1795 = vunpack.c.l.s4 1983009808
        %v1796 = vunpack.c.0.s8 %v1795
        %v1797 = vlaneseq
        %v1798 = vshrl.u32 %v1797, 7
        %v1799 = vsub.s32 %v1796, %v1798
        %v1800 = vrot.slane %v1793, %v1799
        %v1801 = vcombine.low %v1775, %v1776
        %v1803 = vunpack.c.l.s4 1983009808
        %v1804 = vunpack.c.0.s8 %v1803
        %v1805 = vlaneseq
        %v1806 = vshrl.u32 %v1805, 7
        %v1807 = vsub.s32 %v1804, %v1806
        %v1808 = vrot.slane %v1801, %v1807
        %v1809 = vcombine.low %v1784, %v1792
        %v1811 = vunpack.c.l.s4 1934713408
        %v1812 = vunpack.c.0.s8 %v1811
        %v1813 = vlaneseq
        %v1814 = vshrl.u32 %v1813, 7
        %v1815 = vsub.s32 %v1812, %v1814
        %v1816 = vrot.slane %v1809, %v1815
        %v1817 = vcombine.low %v1800, %v1808
        %v1819 = vunpack.c.l.s4 1934713408
        %v1820 = vunpack.c.0.s8 %v1819
        %v1821 = vlaneseq
        %v1822 = vshrl.u32 %v1821, 7
        %v1823 = vsub.s32 %v1820, %v1822
        %v1824 = vrot.slane %v1817, %v1823
        %v1825 = vcombine.low %v1816, %v1824
        %v1826 = vcombine.high %v1816, %v1824
        %v1827 = vpack.c.bf16 %v1825, %v1825
        %v1828 = vpack.c.bf16 %v1826, %v1826
        %v1829 = vld [vmem:[#allocation8] sm:$0xff]
        %v1830 = vld [vmem:[#allocation8 + $0x8] sm:$0xff]
        %v1831 = vld [vmem:[#allocation8 + $0x10] sm:$0xff]
        %v1832 = vld [vmem:[#allocation8 + $0x18] sm:$0xff]
        %v1833 = vld [vmem:[#allocation8 + $0x20] sm:$0xff]
        %v1834 = vld [vmem:[#allocation8 + $0x28] sm:$0xff]
        %v1835 = vld [vmem:[#allocation8 + $0x30] sm:$0xff]
        %v1836 = vld [vmem:[#allocation8 + $0x38] sm:$0xff]
        %v1837 = vld [vmem:[#allocation8 + $0x40] sm:$0xff]
        %v1838 = vld [vmem:[#allocation8 + $0x48] sm:$0xff]
        %v1839 = vld [vmem:[#allocation8 + $0x50] sm:$0xff]
        %v1840 = vld [vmem:[#allocation8 + $0x58] sm:$0xff]
        %v1841 = vld [vmem:[#allocation8 + $0x60] sm:$0xff]
        %v1842 = vld [vmem:[#allocation8 + $0x68] sm:$0xff]
        %v1843 = vld [vmem:[#allocation8 + $0x70] sm:$0xff]
        %v1844 = vld [vmem:[#allocation8 + $0x78] sm:$0xff]
        %v1845 = vld [vmem:[#allocation8 + $0x80] sm:$0xff]
        %v1846 = vld [vmem:[#allocation8 + $0x88] sm:$0xff]
        %v1847 = vld [vmem:[#allocation8 + $0x90] sm:$0xff]
        %v1848 = vld [vmem:[#allocation8 + $0x98] sm:$0xff]
        %v1849 = vld [vmem:[#allocation8 + $0xa0] sm:$0xff]
        %v1850 = vld [vmem:[#allocation8 + $0xa8] sm:$0xff]
        %v1851 = vld [vmem:[#allocation8 + $0xb0] sm:$0xff]
        %v1852 = vld [vmem:[#allocation8 + $0xb8] sm:$0xff]
        %v1853 = vld [vmem:[#allocation8 + $0xc0] sm:$0xff]
        %v1854 = vld [vmem:[#allocation8 + $0xc8] sm:$0xff]
        %v1855 = vld [vmem:[#allocation8 + $0xd0] sm:$0xff]
        %v1856 = vld [vmem:[#allocation8 + $0xd8] sm:$0xff]
        %v1857 = vld [vmem:[#allocation8 + $0xe0] sm:$0xff]
        %v1858 = vld [vmem:[#allocation8 + $0xe8] sm:$0xff]
        %v1859 = vld [vmem:[#allocation8 + $0xf0] sm:$0xff]
        %v1860 = vld [vmem:[#allocation8 + $0xf8] sm:$0xff]
        %v1861 = vld [vmem:[%s4] sm:$0x3]
        %v1863 = vlaneseq
        %v1864 = vshrl.u32 %v1863, 7
        %v1865 = vsub.s32 0, %v1864
        %v1866 = vrot.slane %v1861, %v1865
        %v1867 = vlaneseq
        %v1868 = vshrl.u32 %v1867, 7
        %v1869 = vsub.s32 1, %v1868
        %v1870 = vrot.slane %v1861, %v1869
        %v1905 = vunpack.c.l.b16 %v1829
        %v1906 = vunpack.c.h.b16 %v1829
        %v1907 = vunpack.c.l.b16 %v1830
        %v1908 = vunpack.c.h.b16 %v1830
        %v1909 = vunpack.c.l.b16 %v1831
        %v1910 = vunpack.c.h.b16 %v1831
        %v1911 = vunpack.c.l.b16 %v1832
        %v1912 = vunpack.c.h.b16 %v1832
        %v1913 = vunpack.c.l.b16 %v1833
        %v1914 = vunpack.c.h.b16 %v1833
        %v1915 = vunpack.c.l.b16 %v1834
        %v1916 = vunpack.c.h.b16 %v1834
        %v1917 = vunpack.c.l.b16 %v1835
        %v1918 = vunpack.c.h.b16 %v1835
        %v1919 = vunpack.c.l.b16 %v1836
        %v1920 = vunpack.c.h.b16 %v1836
        %v1921 = vunpack.c.l.b16 %v1837
        %v1922 = vunpack.c.h.b16 %v1837
        %v1923 = vunpack.c.l.b16 %v1838
        %v1924 = vunpack.c.h.b16 %v1838
        %v1925 = vunpack.c.l.b16 %v1839
        %v1926 = vunpack.c.h.b16 %v1839
        %v1927 = vunpack.c.l.b16 %v1840
        %v1928 = vunpack.c.h.b16 %v1840
        %v1929 = vunpack.c.l.b16 %v1841
        %v1930 = vunpack.c.h.b16 %v1841
        %v1931 = vunpack.c.l.b16 %v1842
        %v1932 = vunpack.c.h.b16 %v1842
        %v1933 = vunpack.c.l.b16 %v1843
        %v1934 = vunpack.c.h.b16 %v1843
        %v1935 = vunpack.c.l.b16 %v1844
        %v1936 = vunpack.c.h.b16 %v1844
        %v1937 = vunpack.c.l.b16 %v1845
        %v1938 = vunpack.c.h.b16 %v1845
        %v1939 = vunpack.c.l.b16 %v1846
        %v1940 = vunpack.c.h.b16 %v1846
        %v1941 = vunpack.c.l.b16 %v1847
        %v1942 = vunpack.c.h.b16 %v1847
        %v1943 = vunpack.c.l.b16 %v1848
        %v1944 = vunpack.c.h.b16 %v1848
        %v1945 = vunpack.c.l.b16 %v1849
        %v1946 = vunpack.c.h.b16 %v1849
        %v1947 = vunpack.c.l.b16 %v1850
        %v1948 = vunpack.c.h.b16 %v1850
        %v1949 = vunpack.c.l.b16 %v1851
        %v1950 = vunpack.c.h.b16 %v1851
        %v1951 = vunpack.c.l.b16 %v1852
        %v1952 = vunpack.c.h.b16 %v1852
        %v1953 = vunpack.c.l.b16 %v1853
        %v1954 = vunpack.c.h.b16 %v1853
        %v1955 = vunpack.c.l.b16 %v1854
        %v1956 = vunpack.c.h.b16 %v1854
        %v1957 = vunpack.c.l.b16 %v1855
        %v1958 = vunpack.c.h.b16 %v1855
        %v1959 = vunpack.c.l.b16 %v1856
        %v1960 = vunpack.c.h.b16 %v1856
        %v1961 = vunpack.c.l.b16 %v1857
        %v1962 = vunpack.c.h.b16 %v1857
        %v1963 = vunpack.c.l.b16 %v1858
        %v1964 = vunpack.c.h.b16 %v1858
        %v1965 = vunpack.c.l.b16 %v1859
        %v1966 = vunpack.c.h.b16 %v1859
        %v1967 = vunpack.c.l.b16 %v1860
        %v1968 = vunpack.c.h.b16 %v1860
        %v1969 = vpack.c.b16 %v1907, %v1905
        %v1970 = vpack.c.b16 %v1908, %v1906
        %v1971 = vpack.c.b16 %v1911, %v1909
        %v1972 = vpack.c.b16 %v1912, %v1910
        %v1973 = vpack.c.b16 %v1915, %v1913
        %v1974 = vpack.c.b16 %v1916, %v1914
        %v1975 = vpack.c.b16 %v1919, %v1917
        %v1976 = vpack.c.b16 %v1920, %v1918
        %v1977 = vpack.c.b16 %v1923, %v1921
        %v1978 = vpack.c.b16 %v1924, %v1922
        %v1979 = vpack.c.b16 %v1927, %v1925
        %v1980 = vpack.c.b16 %v1928, %v1926
        %v1981 = vpack.c.b16 %v1931, %v1929
        %v1982 = vpack.c.b16 %v1932, %v1930
        %v1983 = vpack.c.b16 %v1935, %v1933
        %v1984 = vpack.c.b16 %v1936, %v1934
        %v1985 = vpack.c.b16 %v1939, %v1937
        %v1986 = vpack.c.b16 %v1940, %v1938
        %v1987 = vpack.c.b16 %v1943, %v1941
        %v1988 = vpack.c.b16 %v1944, %v1942
        %v1989 = vpack.c.b16 %v1947, %v1945
        %v1990 = vpack.c.b16 %v1948, %v1946
        %v1991 = vpack.c.b16 %v1951, %v1949
        %v1992 = vpack.c.b16 %v1952, %v1950
        %v1993 = vpack.c.b16 %v1955, %v1953
        %v1994 = vpack.c.b16 %v1956, %v1954
        %v1995 = vpack.c.b16 %v1959, %v1957
        %v1996 = vpack.c.b16 %v1960, %v1958
        %v1997 = vpack.c.b16 %v1963, %v1961
        %v1998 = vpack.c.b16 %v1964, %v1962
        %v1999 = vpack.c.b16 %v1967, %v1965
        %v2000 = vpack.c.b16 %v1968, %v1966
        %2033 = vmatprep.subr.bf16.mxu0 %v1984
        %2034 = vmatpush1.bf16.xpose.msra.mxu0 %v1983
        %2035 = vmatprep.subr.bf16.mxu0 %v1982
        %2036 = vmatpush1.bf16.xpose.msra.mxu0 %v1981
        %2037 = vmatprep.subr.bf16.mxu0 %v1980
        %2038 = vmatpush1.bf16.xpose.msra.mxu0 %v1979
        %2039 = vmatprep.subr.bf16.mxu0 %v1978
        %2040 = vmatpush1.bf16.xpose.msra.mxu0 %v1977
        %2041 = vmatprep.subr.bf16.mxu0 %v1976
        %2042 = vmatpush1.bf16.xpose.msra.mxu0 %v1975
        %2043 = vmatprep.subr.bf16.mxu0 %v1974
        %2044 = vmatpush1.bf16.xpose.msra.mxu0 %v1973
        %2045 = vmatprep.subr.bf16.mxu0 %v1972
        %2046 = vmatpush1.bf16.xpose.msra.mxu0 %v1971
        %2047 = vmatprep.subr.bf16.mxu0 %v1970
        %2048 = vmatpush1.bf16.xpose.msra.mxu0 %v1969
        %2049 = vmatprep.subr.bf16.mxu0 %v2000
        %2050 = vmatpush2.bf16.xpose.msra.mxu0 %v1999
        %2051 = vmatprep.subr.bf16.mxu0 %v1998
        %2052 = vmatpush2.bf16.xpose.msra.mxu0 %v1997
        %2053 = vmatprep.subr.bf16.mxu0 %v1996
        %2054 = vmatpush2.bf16.xpose.msra.mxu0 %v1995
        %2055 = vmatprep.subr.bf16.mxu0 %v1994
        %2056 = vmatpush2.bf16.xpose.msra.mxu0 %v1993
        %2057 = vmatprep.subr.bf16.mxu0 %v1992
        %2058 = vmatpush2.bf16.xpose.msra.mxu0 %v1991
        %2059 = vmatprep.subr.bf16.mxu0 %v1990
        %2060 = vmatpush2.bf16.xpose.msra.mxu0 %v1989
        %2061 = vmatprep.subr.bf16.mxu0 %v1988
        %2062 = vmatpush2.bf16.xpose.msra.mxu0 %v1987
        %2063 = vmatprep.subr.bf16.mxu0 %v1986
        %2064 = vmatpush2.bf16.xpose.msra.mxu0 %v1985
        %2065 = vmatprep.mubr.bf16.mxu0 %v1828
        %2066 = vmatmul.mubr.bf16.gmra.mxu0 %v1827
        %v2067 = vpop.f32.mrf.mxu0
        %v2068 = vadd.f32 %v1866, %v2067
        %v2069 = vpop.f32.mrf.mxu0
        %v2070 = vadd.f32 %v1870, %v2069
        %v2071 = vpop.f32.mrf.mxu0
        %v2072 = vpop.f32.mrf.mxu0
        %2073 = vdwg.mxu0
        %v2074 = vadd.f32 %v541, %v2068
        %v2075 = vadd.f32 %v542, %v2070
        %v2076 = vadd.f32 %v2074, %v2075
        %2077 = vadd.xlane.f32.xlu0 %v2076
        %v2078 = vpop.xlane.xlu0 %2077
        %v2079 = vmul.f32 %v2078, %v546
        %v2080 = vsub.f32 %v2074, %v2079
        %v2081 = vsub.f32 %v2075, %v2079
        %v2082 = vmul.f32 %v2080, %v2080
        %v2083 = vmul.f32 %v2081, %v2081
        %v2084 = vadd.f32 %v2082, %v2083
        %2085 = vadd.xlane.f32.xlu0 %v2084
        %v2086 = vpop.xlane.xlu0 %2085
        %v2087 = vmul.f32 %v2086, %v546
        %v2088 = vadd.f32 %v2087, 1e-05
        %v2089 = vrsqrt.pop %v2088
        %v2090 = vmul.f32 %v2080, %v2089
        %v2091 = vmul.f32 %v2081, %v2089
        %v2092 = vld [vmem:[%s7] sm:$0x3]
        %v2094 = vlaneseq
        %v2095 = vshrl.u32 %v2094, 7
        %v2096 = vsub.s32 0, %v2095
        %v2097 = vrot.slane %v2092, %v2096
        %v2098 = vlaneseq
        %v2099 = vshrl.u32 %v2098, 7
        %v2100 = vsub.s32 1, %v2099
        %v2101 = vrot.slane %v2092, %v2100
        %v2104 = vmul.f32 %v2090, %v2097
        %v2105 = vmul.f32 %v2091, %v2101
        %v2106 = vld [vmem:[#allocation10] sm:$0x3]
        %v2108 = vlaneseq
        %v2109 = vshrl.u32 %v2108, 7
        %v2110 = vsub.s32 0, %v2109
        %v2111 = vrot.slane %v2106, %v2110
        %v2112 = vlaneseq
        %v2113 = vshrl.u32 %v2112, 7
        %v2114 = vsub.s32 1, %v2113
        %v2115 = vrot.slane %v2106, %v2114
        %v2118 = vadd.f32 %v2104, %v2111
        %v2119 = vadd.f32 %v2105, %v2115
        %v2120 = vpack.c.bf16 %v2118, %v2118
        %v2121 = vpack.c.bf16 %v2119, %v2119
        %v2122 = vld [vmem:[#allocation11] sm:$0xff]
        %v2123 = vld [vmem:[#allocation11 + $0x8] sm:$0xff]
        %v2124 = vld [vmem:[#allocation11 + $0x10] sm:$0xff]
        %v2125 = vld [vmem:[#allocation11 + $0x18] sm:$0xff]
        %v2126 = vld [vmem:[#allocation11 + $0x20] sm:$0xff]
        %v2127 = vld [vmem:[#allocation11 + $0x28] sm:$0xff]
        %v2128 = vld [vmem:[#allocation11 + $0x30] sm:$0xff]
        %v2129 = vld [vmem:[#allocation11 + $0x38] sm:$0xff]
        %v2130 = vld [vmem:[#allocation11 + $0x40] sm:$0xff]
        %v2131 = vld [vmem:[#allocation11 + $0x48] sm:$0xff]
        %v2132 = vld [vmem:[#allocation11 + $0x50] sm:$0xff]
        %v2133 = vld [vmem:[#allocation11 + $0x58] sm:$0xff]
        %v2134 = vld [vmem:[#allocation11 + $0x60] sm:$0xff]
        %v2135 = vld [vmem:[#allocation11 + $0x68] sm:$0xff]
        %v2136 = vld [vmem:[#allocation11 + $0x70] sm:$0xff]
        %v2137 = vld [vmem:[#allocation11 + $0x78] sm:$0xff]
        %v2138 = vld [vmem:[#allocation11 + $0x80] sm:$0xff]
        %v2139 = vld [vmem:[#allocation11 + $0x88] sm:$0xff]
        %v2140 = vld [vmem:[#allocation11 + $0x90] sm:$0xff]
        %v2141 = vld [vmem:[#allocation11 + $0x98] sm:$0xff]
        %v2142 = vld [vmem:[#allocation11 + $0xa0] sm:$0xff]
        %v2143 = vld [vmem:[#allocation11 + $0xa8] sm:$0xff]
        %v2144 = vld [vmem:[#allocation11 + $0xb0] sm:$0xff]
        %v2145 = vld [vmem:[#allocation11 + $0xb8] sm:$0xff]
        %v2146 = vld [vmem:[#allocation11 + $0xc0] sm:$0xff]
        %v2147 = vld [vmem:[#allocation11 + $0xc8] sm:$0xff]
        %v2148 = vld [vmem:[#allocation11 + $0xd0] sm:$0xff]
        %v2149 = vld [vmem:[#allocation11 + $0xd8] sm:$0xff]
        %v2150 = vld [vmem:[#allocation11 + $0xe0] sm:$0xff]
        %v2151 = vld [vmem:[#allocation11 + $0xe8] sm:$0xff]
        %v2152 = vld [vmem:[#allocation11 + $0xf0] sm:$0xff]
        %v2153 = vld [vmem:[#allocation11 + $0xf8] sm:$0xff]
        %v2154 = vld [vmem:[#allocation11 + $0x100] sm:$0xff]
        %v2155 = vld [vmem:[#allocation11 + $0x108] sm:$0xff]
        %v2156 = vld [vmem:[#allocation11 + $0x110] sm:$0xff]
        %v2157 = vld [vmem:[#allocation11 + $0x118] sm:$0xff]
        %v2158 = vld [vmem:[#allocation11 + $0x120] sm:$0xff]
        %v2159 = vld [vmem:[#allocation11 + $0x128] sm:$0xff]
        %v2160 = vld [vmem:[#allocation11 + $0x130] sm:$0xff]
        %v2161 = vld [vmem:[#allocation11 + $0x138] sm:$0xff]
        %v2162 = vld [vmem:[#allocation11 + $0x140] sm:$0xff]
        %v2163 = vld [vmem:[#allocation11 + $0x148] sm:$0xff]
        %v2164 = vld [vmem:[#allocation11 + $0x150] sm:$0xff]
        %v2165 = vld [vmem:[#allocation11 + $0x158] sm:$0xff]
        %v2166 = vld [vmem:[#allocation11 + $0x160] sm:$0xff]
        %v2167 = vld [vmem:[#allocation11 + $0x168] sm:$0xff]
        %v2168 = vld [vmem:[#allocation11 + $0x170] sm:$0xff]
        %v2169 = vld [vmem:[#allocation11 + $0x178] sm:$0xff]
        %v2170 = vld [vmem:[#allocation11 + $0x180] sm:$0xff]
        %v2171 = vld [vmem:[#allocation11 + $0x188] sm:$0xff]
        %v2172 = vld [vmem:[#allocation11 + $0x190] sm:$0xff]
        %v2173 = vld [vmem:[#allocation11 + $0x198] sm:$0xff]
        %v2174 = vld [vmem:[#allocation11 + $0x1a0] sm:$0xff]
        %v2175 = vld [vmem:[#allocation11 + $0x1a8] sm:$0xff]
        %v2176 = vld [vmem:[#allocation11 + $0x1b0] sm:$0xff]
        %v2177 = vld [vmem:[#allocation11 + $0x1b8] sm:$0xff]
        %v2178 = vld [vmem:[#allocation11 + $0x1c0] sm:$0xff]
        %v2179 = vld [vmem:[#allocation11 + $0x1c8] sm:$0xff]
        %v2180 = vld [vmem:[#allocation11 + $0x1d0] sm:$0xff]
        %v2181 = vld [vmem:[#allocation11 + $0x1d8] sm:$0xff]
        %v2182 = vld [vmem:[#allocation11 + $0x1e0] sm:$0xff]
        %v2183 = vld [vmem:[#allocation11 + $0x1e8] sm:$0xff]
        %v2184 = vld [vmem:[#allocation11 + $0x1f0] sm:$0xff]
        %v2185 = vld [vmem:[#allocation11 + $0x1f8] sm:$0xff]
        %v2186 = vld [vmem:[#allocation11 + $0x200] sm:$0xff]
        %v2187 = vld [vmem:[#allocation11 + $0x208] sm:$0xff]
        %v2188 = vld [vmem:[#allocation11 + $0x210] sm:$0xff]
        %v2189 = vld [vmem:[#allocation11 + $0x218] sm:$0xff]
        %v2190 = vld [vmem:[#allocation11 + $0x220] sm:$0xff]
        %v2191 = vld [vmem:[#allocation11 + $0x228] sm:$0xff]
        %v2192 = vld [vmem:[#allocation11 + $0x230] sm:$0xff]
        %v2193 = vld [vmem:[#allocation11 + $0x238] sm:$0xff]
        %v2194 = vld [vmem:[#allocation11 + $0x240] sm:$0xff]
        %v2195 = vld [vmem:[#allocation11 + $0x248] sm:$0xff]
        %v2196 = vld [vmem:[#allocation11 + $0x250] sm:$0xff]
        %v2197 = vld [vmem:[#allocation11 + $0x258] sm:$0xff]
        %v2198 = vld [vmem:[#allocation11 + $0x260] sm:$0xff]
        %v2199 = vld [vmem:[#allocation11 + $0x268] sm:$0xff]
        %v2200 = vld [vmem:[#allocation11 + $0x270] sm:$0xff]
        %v2201 = vld [vmem:[#allocation11 + $0x278] sm:$0xff]
        %v2202 = vld [vmem:[#allocation11 + $0x280] sm:$0xff]
        %v2203 = vld [vmem:[#allocation11 + $0x288] sm:$0xff]
        %v2204 = vld [vmem:[#allocation11 + $0x290] sm:$0xff]
        %v2205 = vld [vmem:[#allocation11 + $0x298] sm:$0xff]
        %v2206 = vld [vmem:[#allocation11 + $0x2a0] sm:$0xff]
        %v2207 = vld [vmem:[#allocation11 + $0x2a8] sm:$0xff]
        %v2208 = vld [vmem:[#allocation11 + $0x2b0] sm:$0xff]
        %v2209 = vld [vmem:[#allocation11 + $0x2b8] sm:$0xff]
        %v2210 = vld [vmem:[#allocation11 + $0x2c0] sm:$0xff]
        %v2211 = vld [vmem:[#allocation11 + $0x2c8] sm:$0xff]
        %v2212 = vld [vmem:[#allocation11 + $0x2d0] sm:$0xff]
        %v2213 = vld [vmem:[#allocation11 + $0x2d8] sm:$0xff]
        %v2214 = vld [vmem:[#allocation11 + $0x2e0] sm:$0xff]
        %v2215 = vld [vmem:[#allocation11 + $0x2e8] sm:$0xff]
        %v2216 = vld [vmem:[#allocation11 + $0x2f0] sm:$0xff]
        %v2217 = vld [vmem:[#allocation11 + $0x2f8] sm:$0xff]
        %v2218 = vld [vmem:[#allocation11 + $0x300] sm:$0xff]
        %v2219 = vld [vmem:[#allocation11 + $0x308] sm:$0xff]
        %v2220 = vld [vmem:[#allocation11 + $0x310] sm:$0xff]
        %v2221 = vld [vmem:[#allocation11 + $0x318] sm:$0xff]
        %v2222 = vld [vmem:[#allocation11 + $0x320] sm:$0xff]
        %v2223 = vld [vmem:[#allocation11 + $0x328] sm:$0xff]
        %v2224 = vld [vmem:[#allocation11 + $0x330] sm:$0xff]
        %v2225 = vld [vmem:[#allocation11 + $0x338] sm:$0xff]
        %v2226 = vld [vmem:[#allocation11 + $0x340] sm:$0xff]
        %v2227 = vld [vmem:[#allocation11 + $0x348] sm:$0xff]
        %v2228 = vld [vmem:[#allocation11 + $0x350] sm:$0xff]
        %v2229 = vld [vmem:[#allocation11 + $0x358] sm:$0xff]
        %v2230 = vld [vmem:[#allocation11 + $0x360] sm:$0xff]
        %v2231 = vld [vmem:[#allocation11 + $0x368] sm:$0xff]
        %v2232 = vld [vmem:[#allocation11 + $0x370] sm:$0xff]
        %v2233 = vld [vmem:[#allocation11 + $0x378] sm:$0xff]
        %v2234 = vld [vmem:[#allocation11 + $0x380] sm:$0xff]
        %v2235 = vld [vmem:[#allocation11 + $0x388] sm:$0xff]
        %v2236 = vld [vmem:[#allocation11 + $0x390] sm:$0xff]
        %v2237 = vld [vmem:[#allocation11 + $0x398] sm:$0xff]
        %v2238 = vld [vmem:[#allocation11 + $0x3a0] sm:$0xff]
        %v2239 = vld [vmem:[#allocation11 + $0x3a8] sm:$0xff]
        %v2240 = vld [vmem:[#allocation11 + $0x3b0] sm:$0xff]
        %v2241 = vld [vmem:[#allocation11 + $0x3b8] sm:$0xff]
        %v2242 = vld [vmem:[#allocation11 + $0x3c0] sm:$0xff]
        %v2243 = vld [vmem:[#allocation11 + $0x3c8] sm:$0xff]
        %v2244 = vld [vmem:[#allocation11 + $0x3d0] sm:$0xff]
        %v2245 = vld [vmem:[#allocation11 + $0x3d8] sm:$0xff]
        %v2246 = vld [vmem:[#allocation11 + $0x3e0] sm:$0xff]
        %v2247 = vld [vmem:[#allocation11 + $0x3e8] sm:$0xff]
        %v2248 = vld [vmem:[#allocation11 + $0x3f0] sm:$0xff]
        %v2249 = vld [vmem:[#allocation11 + $0x3f8] sm:$0xff]
        %v2250 = vld [vmem:[%s10] sm:$0xff]
        %v2252 = vlaneseq
        %v2253 = vshrl.u32 %v2252, 7
        %v2254 = vsub.s32 0, %v2253
        %v2255 = vrot.slane %v2250, %v2254
        %v2256 = vlaneseq
        %v2257 = vshrl.u32 %v2256, 7
        %v2258 = vsub.s32 1, %v2257
        %v2259 = vrot.slane %v2250, %v2258
        %v2260 = vlaneseq
        %v2261 = vshrl.u32 %v2260, 7
        %v2262 = vsub.s32 2, %v2261
        %v2263 = vrot.slane %v2250, %v2262
        %v2264 = vlaneseq
        %v2265 = vshrl.u32 %v2264, 7
        %v2266 = vsub.s32 3, %v2265
        %v2267 = vrot.slane %v2250, %v2266
        %v2268 = vlaneseq
        %v2269 = vshrl.u32 %v2268, 7
        %v2270 = vsub.s32 4, %v2269
        %v2271 = vrot.slane %v2250, %v2270
        %v2272 = vlaneseq
        %v2273 = vshrl.u32 %v2272, 7
        %v2274 = vsub.s32 5, %v2273
        %v2275 = vrot.slane %v2250, %v2274
        %v2276 = vlaneseq
        %v2277 = vshrl.u32 %v2276, 7
        %v2278 = vsub.s32 6, %v2277
        %v2279 = vrot.slane %v2250, %v2278
        %v2280 = vlaneseq
        %v2281 = vshrl.u32 %v2280, 7
        %v2282 = vsub.s32 7, %v2281
        %v2283 = vrot.slane %v2250, %v2282
        %v2420 = vunpack.c.l.b16 %v2122
        %v2421 = vunpack.c.h.b16 %v2122
        %v2422 = vunpack.c.l.b16 %v2123
        %v2423 = vunpack.c.h.b16 %v2123
        %v2424 = vunpack.c.l.b16 %v2124
        %v2425 = vunpack.c.h.b16 %v2124
        %v2426 = vunpack.c.l.b16 %v2125
        %v2427 = vunpack.c.h.b16 %v2125
        %v2428 = vunpack.c.l.b16 %v2126
        %v2429 = vunpack.c.h.b16 %v2126
        %v2430 = vunpack.c.l.b16 %v2127
        %v2431 = vunpack.c.h.b16 %v2127
        %v2432 = vunpack.c.l.b16 %v2128
        %v2433 = vunpack.c.h.b16 %v2128
        %v2434 = vunpack.c.l.b16 %v2129
        %v2435 = vunpack.c.h.b16 %v2129
        %v2436 = vunpack.c.l.b16 %v2130
        %v2437 = vunpack.c.h.b16 %v2130
        %v2438 = vunpack.c.l.b16 %v2131
        %v2439 = vunpack.c.h.b16 %v2131
        %v2440 = vunpack.c.l.b16 %v2132
        %v2441 = vunpack.c.h.b16 %v2132
        %v2442 = vunpack.c.l.b16 %v2133
        %v2443 = vunpack.c.h.b16 %v2133
        %v2444 = vunpack.c.l.b16 %v2134
        %v2445 = vunpack.c.h.b16 %v2134
        %v2446 = vunpack.c.l.b16 %v2135
        %v2447 = vunpack.c.h.b16 %v2135
        %v2448 = vunpack.c.l.b16 %v2136
        %v2449 = vunpack.c.h.b16 %v2136
        %v2450 = vunpack.c.l.b16 %v2137
        %v2451 = vunpack.c.h.b16 %v2137
        %v2452 = vunpack.c.l.b16 %v2138
        %v2453 = vunpack.c.h.b16 %v2138
        %v2454 = vunpack.c.l.b16 %v2139
        %v2455 = vunpack.c.h.b16 %v2139
        %v2456 = vunpack.c.l.b16 %v2140
        %v2457 = vunpack.c.h.b16 %v2140
        %v2458 = vunpack.c.l.b16 %v2141
        %v2459 = vunpack.c.h.b16 %v2141
        %v2460 = vunpack.c.l.b16 %v2142
        %v2461 = vunpack.c.h.b16 %v2142
        %v2462 = vunpack.c.l.b16 %v2143
        %v2463 = vunpack.c.h.b16 %v2143
        %v2464 = vunpack.c.l.b16 %v2144
        %v2465 = vunpack.c.h.b16 %v2144
        %v2466 = vunpack.c.l.b16 %v2145
        %v2467 = vunpack.c.h.b16 %v2145
        %v2468 = vunpack.c.l.b16 %v2146
        %v2469 = vunpack.c.h.b16 %v2146
        %v2470 = vunpack.c.l.b16 %v2147
        %v2471 = vunpack.c.h.b16 %v2147
        %v2472 = vunpack.c.l.b16 %v2148
        %v2473 = vunpack.c.h.b16 %v2148
        %v2474 = vunpack.c.l.b16 %v2149
        %v2475 = vunpack.c.h.b16 %v2149
        %v2476 = vunpack.c.l.b16 %v2150
        %v2477 = vunpack.c.h.b16 %v2150
        %v2478 = vunpack.c.l.b16 %v2151
        %v2479 = vunpack.c.h.b16 %v2151
        %v2480 = vunpack.c.l.b16 %v2152
        %v2481 = vunpack.c.h.b16 %v2152
        %v2482 = vunpack.c.l.b16 %v2153
        %v2483 = vunpack.c.h.b16 %v2153
        %v2484 = vunpack.c.l.b16 %v2154
        %v2485 = vunpack.c.h.b16 %v2154
        %v2486 = vunpack.c.l.b16 %v2155
        %v2487 = vunpack.c.h.b16 %v2155
        %v2488 = vunpack.c.l.b16 %v2156
        %v2489 = vunpack.c.h.b16 %v2156
        %v2490 = vunpack.c.l.b16 %v2157
        %v2491 = vunpack.c.h.b16 %v2157
        %v2492 = vunpack.c.l.b16 %v2158
        %v2493 = vunpack.c.h.b16 %v2158
        %v2494 = vunpack.c.l.b16 %v2159
        %v2495 = vunpack.c.h.b16 %v2159
        %v2496 = vunpack.c.l.b16 %v2160
        %v2497 = vunpack.c.h.b16 %v2160
        %v2498 = vunpack.c.l.b16 %v2161
        %v2499 = vunpack.c.h.b16 %v2161
        %v2500 = vunpack.c.l.b16 %v2162
        %v2501 = vunpack.c.h.b16 %v2162
        %v2502 = vunpack.c.l.b16 %v2163
        %v2503 = vunpack.c.h.b16 %v2163
        %v2504 = vunpack.c.l.b16 %v2164
        %v2505 = vunpack.c.h.b16 %v2164
        %v2506 = vunpack.c.l.b16 %v2165
        %v2507 = vunpack.c.h.b16 %v2165
        %v2508 = vunpack.c.l.b16 %v2166
        %v2509 = vunpack.c.h.b16 %v2166
        %v2510 = vunpack.c.l.b16 %v2167
        %v2511 = vunpack.c.h.b16 %v2167
        %v2512 = vunpack.c.l.b16 %v2168
        %v2513 = vunpack.c.h.b16 %v2168
        %v2514 = vunpack.c.l.b16 %v2169
        %v2515 = vunpack.c.h.b16 %v2169
        %v2516 = vunpack.c.l.b16 %v2170
        %v2517 = vunpack.c.h.b16 %v2170
        %v2518 = vunpack.c.l.b16 %v2171
        %v2519 = vunpack.c.h.b16 %v2171
        %v2520 = vunpack.c.l.b16 %v2172
        %v2521 = vunpack.c.h.b16 %v2172
        %v2522 = vunpack.c.l.b16 %v2173
        %v2523 = vunpack.c.h.b16 %v2173
        %v2524 = vunpack.c.l.b16 %v2174
        %v2525 = vunpack.c.h.b16 %v2174
        %v2526 = vunpack.c.l.b16 %v2175
        %v2527 = vunpack.c.h.b16 %v2175
        %v2528 = vunpack.c.l.b16 %v2176
        %v2529 = vunpack.c.h.b16 %v2176
        %v2530 = vunpack.c.l.b16 %v2177
        %v2531 = vunpack.c.h.b16 %v2177
        %v2532 = vunpack.c.l.b16 %v2178
        %v2533 = vunpack.c.h.b16 %v2178
        %v2534 = vunpack.c.l.b16 %v2179
        %v2535 = vunpack.c.h.b16 %v2179
        %v2536 = vunpack.c.l.b16 %v2180
        %v2537 = vunpack.c.h.b16 %v2180
        %v2538 = vunpack.c.l.b16 %v2181
        %v2539 = vunpack.c.h.b16 %v2181
        %v2540 = vunpack.c.l.b16 %v2182
        %v2541 = vunpack.c.h.b16 %v2182
        %v2542 = vunpack.c.l.b16 %v2183
        %v2543 = vunpack.c.h.b16 %v2183
        %v2544 = vunpack.c.l.b16 %v2184
        %v2545 = vunpack.c.h.b16 %v2184
        %v2546 = vunpack.c.l.b16 %v2185
        %v2547 = vunpack.c.h.b16 %v2185
        %v2548 = vunpack.c.l.b16 %v2186
        %v2549 = vunpack.c.h.b16 %v2186
        %v2550 = vunpack.c.l.b16 %v2187
        %v2551 = vunpack.c.h.b16 %v2187
        %v2552 = vunpack.c.l.b16 %v2188
        %v2553 = vunpack.c.h.b16 %v2188
        %v2554 = vunpack.c.l.b16 %v2189
        %v2555 = vunpack.c.h.b16 %v2189
        %v2556 = vunpack.c.l.b16 %v2190
        %v2557 = vunpack.c.h.b16 %v2190
        %v2558 = vunpack.c.l.b16 %v2191
        %v2559 = vunpack.c.h.b16 %v2191
        %v2560 = vunpack.c.l.b16 %v2192
        %v2561 = vunpack.c.h.b16 %v2192
        %v2562 = vunpack.c.l.b16 %v2193
        %v2563 = vunpack.c.h.b16 %v2193
        %v2564 = vunpack.c.l.b16 %v2194
        %v2565 = vunpack.c.h.b16 %v2194
        %v2566 = vunpack.c.l.b16 %v2195
        %v2567 = vunpack.c.h.b16 %v2195
        %v2568 = vunpack.c.l.b16 %v2196
        %v2569 = vunpack.c.h.b16 %v2196
        %v2570 = vunpack.c.l.b16 %v2197
        %v2571 = vunpack.c.h.b16 %v2197
        %v2572 = vunpack.c.l.b16 %v2198
        %v2573 = vunpack.c.h.b16 %v2198
        %v2574 = vunpack.c.l.b16 %v2199
        %v2575 = vunpack.c.h.b16 %v2199
        %v2576 = vunpack.c.l.b16 %v2200
        %v2577 = vunpack.c.h.b16 %v2200
        %v2578 = vunpack.c.l.b16 %v2201
        %v2579 = vunpack.c.h.b16 %v2201
        %v2580 = vunpack.c.l.b16 %v2202
        %v2581 = vunpack.c.h.b16 %v2202
        %v2582 = vunpack.c.l.b16 %v2203
        %v2583 = vunpack.c.h.b16 %v2203
        %v2584 = vunpack.c.l.b16 %v2204
        %v2585 = vunpack.c.h.b16 %v2204
        %v2586 = vunpack.c.l.b16 %v2205
        %v2587 = vunpack.c.h.b16 %v2205
        %v2588 = vunpack.c.l.b16 %v2206
        %v2589 = vunpack.c.h.b16 %v2206
        %v2590 = vunpack.c.l.b16 %v2207
        %v2591 = vunpack.c.h.b16 %v2207
        %v2592 = vunpack.c.l.b16 %v2208
        %v2593 = vunpack.c.h.b16 %v2208
        %v2594 = vunpack.c.l.b16 %v2209
        %v2595 = vunpack.c.h.b16 %v2209
        %v2596 = vunpack.c.l.b16 %v2210
        %v2597 = vunpack.c.h.b16 %v2210
        %v2598 = vunpack.c.l.b16 %v2211
        %v2599 = vunpack.c.h.b16 %v2211
        %v2600 = vunpack.c.l.b16 %v2212
        %v2601 = vunpack.c.h.b16 %v2212
        %v2602 = vunpack.c.l.b16 %v2213
        %v2603 = vunpack.c.h.b16 %v2213
        %v2604 = vunpack.c.l.b16 %v2214
        %v2605 = vunpack.c.h.b16 %v2214
        %v2606 = vunpack.c.l.b16 %v2215
        %v2607 = vunpack.c.h.b16 %v2215
        %v2608 = vunpack.c.l.b16 %v2216
        %v2609 = vunpack.c.h.b16 %v2216
        %v2610 = vunpack.c.l.b16 %v2217
        %v2611 = vunpack.c.h.b16 %v2217
        %v2612 = vunpack.c.l.b16 %v2218
        %v2613 = vunpack.c.h.b16 %v2218
        %v2614 = vunpack.c.l.b16 %v2219
        %v2615 = vunpack.c.h.b16 %v2219
        %v2616 = vunpack.c.l.b16 %v2220
        %v2617 = vunpack.c.h.b16 %v2220
        %v2618 = vunpack.c.l.b16 %v2221
        %v2619 = vunpack.c.h.b16 %v2221
        %v2620 = vunpack.c.l.b16 %v2222
        %v2621 = vunpack.c.h.b16 %v2222
        %v2622 = vunpack.c.l.b16 %v2223
        %v2623 = vunpack.c.h.b16 %v2223
        %v2624 = vunpack.c.l.b16 %v2224
        %v2625 = vunpack.c.h.b16 %v2224
        %v2626 = vunpack.c.l.b16 %v2225
        %v2627 = vunpack.c.h.b16 %v2225
        %v2628 = vunpack.c.l.b16 %v2226
        %v2629 = vunpack.c.h.b16 %v2226
        %v2630 = vunpack.c.l.b16 %v2227
        %v2631 = vunpack.c.h.b16 %v2227
        %v2632 = vunpack.c.l.b16 %v2228
        %v2633 = vunpack.c.h.b16 %v2228
        %v2634 = vunpack.c.l.b16 %v2229
        %v2635 = vunpack.c.h.b16 %v2229
        %v2636 = vunpack.c.l.b16 %v2230
        %v2637 = vunpack.c.h.b16 %v2230
        %v2638 = vunpack.c.l.b16 %v2231
        %v2639 = vunpack.c.h.b16 %v2231
        %v2640 = vunpack.c.l.b16 %v2232
        %v2641 = vunpack.c.h.b16 %v2232
        %v2642 = vunpack.c.l.b16 %v2233
        %v2643 = vunpack.c.h.b16 %v2233
        %v2644 = vunpack.c.l.b16 %v2234
        %v2645 = vunpack.c.h.b16 %v2234
        %v2646 = vunpack.c.l.b16 %v2235
        %v2647 = vunpack.c.h.b16 %v2235
        %v2648 = vunpack.c.l.b16 %v2236
        %v2649 = vunpack.c.h.b16 %v2236
        %v2650 = vunpack.c.l.b16 %v2237
        %v2651 = vunpack.c.h.b16 %v2237
        %v2652 = vunpack.c.l.b16 %v2238
        %v2653 = vunpack.c.h.b16 %v2238
        %v2654 = vunpack.c.l.b16 %v2239
        %v2655 = vunpack.c.h.b16 %v2239
        %v2656 = vunpack.c.l.b16 %v2240
        %v2657 = vunpack.c.h.b16 %v2240
        %v2658 = vunpack.c.l.b16 %v2241
        %v2659 = vunpack.c.h.b16 %v2241
        %v2660 = vunpack.c.l.b16 %v2242
        %v2661 = vunpack.c.h.b16 %v2242
        %v2662 = vunpack.c.l.b16 %v2243
        %v2663 = vunpack.c.h.b16 %v2243
        %v2664 = vunpack.c.l.b16 %v2244
        %v2665 = vunpack.c.h.b16 %v2244
        %v2666 = vunpack.c.l.b16 %v2245
        %v2667 = vunpack.c.h.b16 %v2245
        %v2668 = vunpack.c.l.b16 %v2246
        %v2669 = vunpack.c.h.b16 %v2246
        %v2670 = vunpack.c.l.b16 %v2247
        %v2671 = vunpack.c.h.b16 %v2247
        %v2672 = vunpack.c.l.b16 %v2248
        %v2673 = vunpack.c.h.b16 %v2248
        %v2674 = vunpack.c.l.b16 %v2249
        %v2675 = vunpack.c.h.b16 %v2249
        %v2676 = vpack.c.b16 %v2422, %v2420
        %v2677 = vpack.c.b16 %v2423, %v2421
        %v2678 = vpack.c.b16 %v2426, %v2424
        %v2679 = vpack.c.b16 %v2427, %v2425
        %v2680 = vpack.c.b16 %v2430, %v2428
        %v2681 = vpack.c.b16 %v2431, %v2429
        %v2682 = vpack.c.b16 %v2434, %v2432
        %v2683 = vpack.c.b16 %v2435, %v2433
        %v2684 = vpack.c.b16 %v2438, %v2436
        %v2685 = vpack.c.b16 %v2439, %v2437
        %v2686 = vpack.c.b16 %v2442, %v2440
        %v2687 = vpack.c.b16 %v2443, %v2441
        %v2688 = vpack.c.b16 %v2446, %v2444
        %v2689 = vpack.c.b16 %v2447, %v2445
        %v2690 = vpack.c.b16 %v2450, %v2448
        %v2691 = vpack.c.b16 %v2451, %v2449
        %v2692 = vpack.c.b16 %v2454, %v2452
        %v2693 = vpack.c.b16 %v2455, %v2453
        %v2694 = vpack.c.b16 %v2458, %v2456
        %v2695 = vpack.c.b16 %v2459, %v2457
        %v2696 = vpack.c.b16 %v2462, %v2460
        %v2697 = vpack.c.b16 %v2463, %v2461
        %v2698 = vpack.c.b16 %v2466, %v2464
        %v2699 = vpack.c.b16 %v2467, %v2465
        %v2700 = vpack.c.b16 %v2470, %v2468
        %v2701 = vpack.c.b16 %v2471, %v2469
        %v2702 = vpack.c.b16 %v2474, %v2472
        %v2703 = vpack.c.b16 %v2475, %v2473
        %v2704 = vpack.c.b16 %v2478, %v2476
        %v2705 = vpack.c.b16 %v2479, %v2477
        %v2706 = vpack.c.b16 %v2482, %v2480
        %v2707 = vpack.c.b16 %v2483, %v2481
        %v2708 = vpack.c.b16 %v2486, %v2484
        %v2709 = vpack.c.b16 %v2487, %v2485
        %v2710 = vpack.c.b16 %v2490, %v2488
        %v2711 = vpack.c.b16 %v2491, %v2489
        %v2712 = vpack.c.b16 %v2494, %v2492
        %v2713 = vpack.c.b16 %v2495, %v2493
        %v2714 = vpack.c.b16 %v2498, %v2496
        %v2715 = vpack.c.b16 %v2499, %v2497
        %v2716 = vpack.c.b16 %v2502, %v2500
        %v2717 = vpack.c.b16 %v2503, %v2501
        %v2718 = vpack.c.b16 %v2506, %v2504
        %v2719 = vpack.c.b16 %v2507, %v2505
        %v2720 = vpack.c.b16 %v2510, %v2508
        %v2721 = vpack.c.b16 %v2511, %v2509
        %v2722 = vpack.c.b16 %v2514, %v2512
        %v2723 = vpack.c.b16 %v2515, %v2513
        %v2724 = vpack.c.b16 %v2518, %v2516
        %v2725 = vpack.c.b16 %v2519, %v2517
        %v2726 = vpack.c.b16 %v2522, %v2520
        %v2727 = vpack.c.b16 %v2523, %v2521
        %v2728 = vpack.c.b16 %v2526, %v2524
        %v2729 = vpack.c.b16 %v2527, %v2525
        %v2730 = vpack.c.b16 %v2530, %v2528
        %v2731 = vpack.c.b16 %v2531, %v2529
        %v2732 = vpack.c.b16 %v2534, %v2532
        %v2733 = vpack.c.b16 %v2535, %v2533
        %v2734 = vpack.c.b16 %v2538, %v2536
        %v2735 = vpack.c.b16 %v2539, %v2537
        %v2736 = vpack.c.b16 %v2542, %v2540
        %v2737 = vpack.c.b16 %v2543, %v2541
        %v2738 = vpack.c.b16 %v2546, %v2544
        %v2739 = vpack.c.b16 %v2547, %v2545
        %v2740 = vpack.c.b16 %v2550, %v2548
        %v2741 = vpack.c.b16 %v2551, %v2549
        %v2742 = vpack.c.b16 %v2554, %v2552
        %v2743 = vpack.c.b16 %v2555, %v2553
        %v2744 = vpack.c.b16 %v2558, %v2556
        %v2745 = vpack.c.b16 %v2559, %v2557
        %v2746 = vpack.c.b16 %v2562, %v2560
        %v2747 = vpack.c.b16 %v2563, %v2561
        %v2748 = vpack.c.b16 %v2566, %v2564
        %v2749 = vpack.c.b16 %v2567, %v2565
        %v2750 = vpack.c.b16 %v2570, %v2568
        %v2751 = vpack.c.b16 %v2571, %v2569
        %v2752 = vpack.c.b16 %v2574, %v2572
        %v2753 = vpack.c.b16 %v2575, %v2573
        %v2754 = vpack.c.b16 %v2578, %v2576
        %v2755 = vpack.c.b16 %v2579, %v2577
        %v2756 = vpack.c.b16 %v2582, %v2580
        %v2757 = vpack.c.b16 %v2583, %v2581
        %v2758 = vpack.c.b16 %v2586, %v2584
        %v2759 = vpack.c.b16 %v2587, %v2585
        %v2760 = vpack.c.b16 %v2590, %v2588
        %v2761 = vpack.c.b16 %v2591, %v2589
        %v2762 = vpack.c.b16 %v2594, %v2592
        %v2763 = vpack.c.b16 %v2595, %v2593
        %v2764 = vpack.c.b16 %v2598, %v2596
        %v2765 = vpack.c.b16 %v2599, %v2597
        %v2766 = vpack.c.b16 %v2602, %v2600
        %v2767 = vpack.c.b16 %v2603, %v2601
        %v2768 = vpack.c.b16 %v2606, %v2604
        %v2769 = vpack.c.b16 %v2607, %v2605
        %v2770 = vpack.c.b16 %v2610, %v2608
        %v2771 = vpack.c.b16 %v2611, %v2609
        %v2772 = vpack.c.b16 %v2614, %v2612
        %v2773 = vpack.c.b16 %v2615, %v2613
        %v2774 = vpack.c.b16 %v2618, %v2616
        %v2775 = vpack.c.b16 %v2619, %v2617
        %v2776 = vpack.c.b16 %v2622, %v2620
        %v2777 = vpack.c.b16 %v2623, %v2621
        %v2778 = vpack.c.b16 %v2626, %v2624
        %v2779 = vpack.c.b16 %v2627, %v2625
        %v2780 = vpack.c.b16 %v2630, %v2628
        %v2781 = vpack.c.b16 %v2631, %v2629
        %v2782 = vpack.c.b16 %v2634, %v2632
        %v2783 = vpack.c.b16 %v2635, %v2633
        %v2784 = vpack.c.b16 %v2638, %v2636
        %v2785 = vpack.c.b16 %v2639, %v2637
        %v2786 = vpack.c.b16 %v2642, %v2640
        %v2787 = vpack.c.b16 %v2643, %v2641
        %v2788 = vpack.c.b16 %v2646, %v2644
        %v2789 = vpack.c.b16 %v2647, %v2645
        %v2790 = vpack.c.b16 %v2650, %v2648
        %v2791 = vpack.c.b16 %v2651, %v2649
        %v2792 = vpack.c.b16 %v2654, %v2652
        %v2793 = vpack.c.b16 %v2655, %v2653
        %v2794 = vpack.c.b16 %v2658, %v2656
        %v2795 = vpack.c.b16 %v2659, %v2657
        %v2796 = vpack.c.b16 %v2662, %v2660
        %v2797 = vpack.c.b16 %v2663, %v2661
        %v2798 = vpack.c.b16 %v2666, %v2664
        %v2799 = vpack.c.b16 %v2667, %v2665
        %v2800 = vpack.c.b16 %v2670, %v2668
        %v2801 = vpack.c.b16 %v2671, %v2669
        %v2802 = vpack.c.b16 %v2674, %v2672
        %v2803 = vpack.c.b16 %v2675, %v2673
        %2932 = vmatprep.subr.bf16.mxu0 %v2691
        %2933 = vmatpush1.bf16.xpose.msra.mxu0 %v2690
        %2934 = vmatprep.subr.bf16.mxu0 %v2689
        %2935 = vmatpush1.bf16.xpose.msra.mxu0 %v2688
        %2936 = vmatprep.subr.bf16.mxu0 %v2687
        %2937 = vmatpush1.bf16.xpose.msra.mxu0 %v2686
        %2938 = vmatprep.subr.bf16.mxu0 %v2685
        %2939 = vmatpush1.bf16.xpose.msra.mxu0 %v2684
        %2940 = vmatprep.subr.bf16.mxu0 %v2683
        %2941 = vmatpush1.bf16.xpose.msra.mxu0 %v2682
        %2942 = vmatprep.subr.bf16.mxu0 %v2681
        %2943 = vmatpush1.bf16.xpose.msra.mxu0 %v2680
        %2944 = vmatprep.subr.bf16.mxu0 %v2679
        %2945 = vmatpush1.bf16.xpose.msra.mxu0 %v2678
        %2946 = vmatprep.subr.bf16.mxu0 %v2677
        %2947 = vmatpush1.bf16.xpose.msra.mxu0 %v2676
        %2948 = vmatprep.subr.bf16.mxu0 %v2707
        %2949 = vmatpush2.bf16.xpose.msra.mxu0 %v2706
        %2950 = vmatprep.subr.bf16.mxu0 %v2705
        %2951 = vmatpush2.bf16.xpose.msra.mxu0 %v2704
        %2952 = vmatprep.subr.bf16.mxu0 %v2703
        %2953 = vmatpush2.bf16.xpose.msra.mxu0 %v2702
        %2954 = vmatprep.subr.bf16.mxu0 %v2701
        %2955 = vmatpush2.bf16.xpose.msra.mxu0 %v2700
        %2956 = vmatprep.subr.bf16.mxu0 %v2699
        %2957 = vmatpush2.bf16.xpose.msra.mxu0 %v2698
        %2958 = vmatprep.subr.bf16.mxu0 %v2697
        %2959 = vmatpush2.bf16.xpose.msra.mxu0 %v2696
        %2960 = vmatprep.subr.bf16.mxu0 %v2695
        %2961 = vmatpush2.bf16.xpose.msra.mxu0 %v2694
        %2962 = vmatprep.subr.bf16.mxu0 %v2693
        %2963 = vmatpush2.bf16.xpose.msra.mxu0 %v2692
        %2964 = vmatprep.mubr.bf16.mxu0 %v2121
        %2965 = vmatmul.mubr.bf16.gmra.mxu0 %v2120
        %v2966 = vpop.f32.mrf.mxu0
        %v2967 = vadd.f32 %v2255, %v2966
        %v2968 = vpop.f32.mrf.mxu0
        %v2969 = vadd.f32 %v2259, %v2968
        %v2970 = vpop.f32.mrf.mxu0
        %v2971 = vpop.f32.mrf.mxu0
        %2972 = vdwg.mxu0
        %2973 = vmatprep.subr.bf16.mxu0 %v2723
        %2974 = vmatpush1.bf16.xpose.msra.mxu0 %v2722
        %2975 = vmatprep.subr.bf16.mxu0 %v2721
        %2976 = vmatpush1.bf16.xpose.msra.mxu0 %v2720
        %2977 = vmatprep.subr.bf16.mxu0 %v2719
        %2978 = vmatpush1.bf16.xpose.msra.mxu0 %v2718
        %2979 = vmatprep.subr.bf16.mxu0 %v2717
        %2980 = vmatpush1.bf16.xpose.msra.mxu0 %v2716
        %2981 = vmatprep.subr.bf16.mxu0 %v2715
        %2982 = vmatpush1.bf16.xpose.msra.mxu0 %v2714
        %2983 = vmatprep.subr.bf16.mxu0 %v2713
        %2984 = vmatpush1.bf16.xpose.msra.mxu0 %v2712
        %2985 = vmatprep.subr.bf16.mxu0 %v2711
        %2986 = vmatpush1.bf16.xpose.msra.mxu0 %v2710
        %2987 = vmatprep.subr.bf16.mxu0 %v2709
        %2988 = vmatpush1.bf16.xpose.msra.mxu0 %v2708
        %2989 = vmatprep.subr.bf16.mxu0 %v2739
        %2990 = vmatpush2.bf16.xpose.msra.mxu0 %v2738
        %2991 = vmatprep.subr.bf16.mxu0 %v2737
        %2992 = vmatpush2.bf16.xpose.msra.mxu0 %v2736
        %2993 = vmatprep.subr.bf16.mxu0 %v2735
        %2994 = vmatpush2.bf16.xpose.msra.mxu0 %v2734
        %2995 = vmatprep.subr.bf16.mxu0 %v2733
        %2996 = vmatpush2.bf16.xpose.msra.mxu0 %v2732
        %2997 = vmatprep.subr.bf16.mxu0 %v2731
        %2998 = vmatpush2.bf16.xpose.msra.mxu0 %v2730
        %2999 = vmatprep.subr.bf16.mxu0 %v2729
        %3000 = vmatpush2.bf16.xpose.msra.mxu0 %v2728
        %3001 = vmatprep.subr.bf16.mxu0 %v2727
        %3002 = vmatpush2.bf16.xpose.msra.mxu0 %v2726
        %3003 = vmatprep.subr.bf16.mxu0 %v2725
        %3004 = vmatpush2.bf16.xpose.msra.mxu0 %v2724
        %3005 = vmatprep.mubr.bf16.mxu0 %v2121
        %3006 = vmatmul.mubr.bf16.gmra.mxu0 %v2120
        %v3007 = vpop.f32.mrf.mxu0
        %v3008 = vadd.f32 %v2263, %v3007
        %v3009 = vpop.f32.mrf.mxu0
        %v3010 = vadd.f32 %v2267, %v3009
        %v3011 = vpop.f32.mrf.mxu0
        %v3012 = vpop.f32.mrf.mxu0
        %3013 = vdwg.mxu0
        %3014 = vmatprep.subr.bf16.mxu0 %v2755
        %3015 = vmatpush1.bf16.xpose.msra.mxu0 %v2754
        %3016 = vmatprep.subr.bf16.mxu0 %v2753
        %3017 = vmatpush1.bf16.xpose.msra.mxu0 %v2752
        %3018 = vmatprep.subr.bf16.mxu0 %v2751
        %3019 = vmatpush1.bf16.xpose.msra.mxu0 %v2750
        %3020 = vmatprep.subr.bf16.mxu0 %v2749
        %3021 = vmatpush1.bf16.xpose.msra.mxu0 %v2748
        %3022 = vmatprep.subr.bf16.mxu0 %v2747
        %3023 = vmatpush1.bf16.xpose.msra.mxu0 %v2746
        %3024 = vmatprep.subr.bf16.mxu0 %v2745
        %3025 = vmatpush1.bf16.xpose.msra.mxu0 %v2744
        %3026 = vmatprep.subr.bf16.mxu0 %v2743
        %3027 = vmatpush1.bf16.xpose.msra.mxu0 %v2742
        %3028 = vmatprep.subr.bf16.mxu0 %v2741
        %3029 = vmatpush1.bf16.xpose.msra.mxu0 %v2740
        %3030 = vmatprep.subr.bf16.mxu0 %v2771
        %3031 = vmatpush2.bf16.xpose.msra.mxu0 %v2770
        %3032 = vmatprep.subr.bf16.mxu0 %v2769
        %3033 = vmatpush2.bf16.xpose.msra.mxu0 %v2768
        %3034 = vmatprep.subr.bf16.mxu0 %v2767
        %3035 = vmatpush2.bf16.xpose.msra.mxu0 %v2766
        %3036 = vmatprep.subr.bf16.mxu0 %v2765
        %3037 = vmatpush2.bf16.xpose.msra.mxu0 %v2764
        %3038 = vmatprep.subr.bf16.mxu0 %v2763
        %3039 = vmatpush2.bf16.xpose.msra.mxu0 %v2762
        %3040 = vmatprep.subr.bf16.mxu0 %v2761
        %3041 = vmatpush2.bf16.xpose.msra.mxu0 %v2760
        %3042 = vmatprep.subr.bf16.mxu0 %v2759
        %3043 = vmatpush2.bf16.xpose.msra.mxu0 %v2758
        %3044 = vmatprep.subr.bf16.mxu0 %v2757
        %3045 = vmatpush2.bf16.xpose.msra.mxu0 %v2756
        %3046 = vmatprep.mubr.bf16.mxu0 %v2121
        %3047 = vmatmul.mubr.bf16.gmra.mxu0 %v2120
        %v3048 = vpop.f32.mrf.mxu0
        %v3049 = vadd.f32 %v2271, %v3048
        %v3050 = vpop.f32.mrf.mxu0
        %v3051 = vadd.f32 %v2275, %v3050
        %v3052 = vpop.f32.mrf.mxu0
        %v3053 = vpop.f32.mrf.mxu0
        %3054 = vdwg.mxu0
        %3055 = vmatprep.subr.bf16.mxu0 %v2787
        %3056 = vmatpush1.bf16.xpose.msra.mxu0 %v2786
        %3057 = vmatprep.subr.bf16.mxu0 %v2785
        %3058 = vmatpush1.bf16.xpose.msra.mxu0 %v2784
        %3059 = vmatprep.subr.bf16.mxu0 %v2783
        %3060 = vmatpush1.bf16.xpose.msra.mxu0 %v2782
        %3061 = vmatprep.subr.bf16.mxu0 %v2781
        %3062 = vmatpush1.bf16.xpose.msra.mxu0 %v2780
        %3063 = vmatprep.subr.bf16.mxu0 %v2779
        %3064 = vmatpush1.bf16.xpose.msra.mxu0 %v2778
        %3065 = vmatprep.subr.bf16.mxu0 %v2777
        %3066 = vmatpush1.bf16.xpose.msra.mxu0 %v2776
        %3067 = vmatprep.subr.bf16.mxu0 %v2775
        %3068 = vmatpush1.bf16.xpose.msra.mxu0 %v2774
        %3069 = vmatprep.subr.bf16.mxu0 %v2773
        %3070 = vmatpush1.bf16.xpose.msra.mxu0 %v2772
        %3071 = vmatprep.subr.bf16.mxu0 %v2803
        %3072 = vmatpush2.bf16.xpose.msra.mxu0 %v2802
        %3073 = vmatprep.subr.bf16.mxu0 %v2801
        %3074 = vmatpush2.bf16.xpose.msra.mxu0 %v2800
        %3075 = vmatprep.subr.bf16.mxu0 %v2799
        %3076 = vmatpush2.bf16.xpose.msra.mxu0 %v2798
        %3077 = vmatprep.subr.bf16.mxu0 %v2797
        %3078 = vmatpush2.bf16.xpose.msra.mxu0 %v2796
        %3079 = vmatprep.subr.bf16.mxu0 %v2795
        %3080 = vmatpush2.bf16.xpose.msra.mxu0 %v2794
        %3081 = vmatprep.subr.bf16.mxu0 %v2793
        %3082 = vmatpush2.bf16.xpose.msra.mxu0 %v2792
        %3083 = vmatprep.subr.bf16.mxu0 %v2791
        %3084 = vmatpush2.bf16.xpose.msra.mxu0 %v2790
        %3085 = vmatprep.subr.bf16.mxu0 %v2789
        %3086 = vmatpush2.bf16.xpose.msra.mxu0 %v2788
        %3087 = vmatprep.mubr.bf16.mxu0 %v2121
        %3088 = vmatmul.mubr.bf16.gmra.mxu0 %v2120
        %v3089 = vpop.f32.mrf.mxu0
        %v3090 = vadd.f32 %v2279, %v3089
        %v3091 = vpop.f32.mrf.mxu0
        %v3092 = vadd.f32 %v2283, %v3091
        %v3093 = vpop.f32.mrf.mxu0
        %v3094 = vpop.f32.mrf.mxu0
        %3095 = vdwg.mxu0
        %v3096 = vmul.f32 %v2967, 1.702
        %v3097 = vmul.f32 %v2969, 1.702
        %v3098 = vmul.f32 %v3008, 1.702
        %v3099 = vmul.f32 %v3010, 1.702
        %v3100 = vmul.f32 %v3049, 1.702
        %v3101 = vmul.f32 %v3051, 1.702
        %v3102 = vmul.f32 %v3090, 1.702
        %v3103 = vmul.f32 %v3092, 1.702
        %v3104 = vxor.u32 %v3096, 2147483648
        %v3105 = vxor.u32 %v3097, 2147483648
        %v3106 = vxor.u32 %v3098, 2147483648
        %v3107 = vxor.u32 %v3099, 2147483648
        %v3108 = vxor.u32 %v3100, 2147483648
        %v3109 = vxor.u32 %v3101, 2147483648
        %v3110 = vxor.u32 %v3102, 2147483648
        %v3111 = vxor.u32 %v3103, 2147483648
        %v3112 = vmul.f32 %v3104, 1.442695
        %v3113 = vpow.pop %v3112
        %v3114 = vmul.f32 %v3105, 1.442695
        %v3115 = vpow.pop %v3114
        %v3116 = vmul.f32 %v3106, 1.442695
        %v3117 = vpow.pop %v3116
        %v3118 = vmul.f32 %v3107, 1.442695
        %v3119 = vpow.pop %v3118
        %v3120 = vmul.f32 %v3108, 1.442695
        %v3121 = vpow.pop %v3120
        %v3122 = vmul.f32 %v3109, 1.442695
        %v3123 = vpow.pop %v3122
        %v3124 = vmul.f32 %v3110, 1.442695
        %v3125 = vpow.pop %v3124
        %v3126 = vmul.f32 %v3111, 1.442695
        %v3127 = vpow.pop %v3126
        %v3128 = vadd.f32 %v3113, 1.0
        %v3129 = vadd.f32 %v3115, 1.0
        %v3130 = vadd.f32 %v3117, 1.0
        %v3131 = vadd.f32 %v3119, 1.0
        %v3132 = vadd.f32 %v3121, 1.0
        %v3133 = vadd.f32 %v3123, 1.0
        %v3134 = vadd.f32 %v3125, 1.0
        %v3135 = vadd.f32 %v3127, 1.0
        %v3136 = vrcp.pop %v3128
        %v3137 = vmul.f32 1.0, %v3136
        %v3138 = vrcp.pop %v3129
        %v3139 = vmul.f32 1.0, %v3138
        %v3140 = vrcp.pop %v3130
        %v3141 = vmul.f32 1.0, %v3140
        %v3142 = vrcp.pop %v3131
        %v3143 = vmul.f32 1.0, %v3142
        %v3144 = vrcp.pop %v3132
        %v3145 = vmul.f32 1.0, %v3144
        %v3146 = vrcp.pop %v3133
        %v3147 = vmul.f32 1.0, %v3146
        %v3148 = vrcp.pop %v3134
        %v3149 = vmul.f32 1.0, %v3148
        %v3150 = vrcp.pop %v3135
        %v3151 = vmul.f32 1.0, %v3150
        %v3152 = vmul.f32 %v2967, %v3137
        %v3153 = vmul.f32 %v2969, %v3139
        %v3154 = vmul.f32 %v3008, %v3141
        %v3155 = vmul.f32 %v3010, %v3143
        %v3156 = vmul.f32 %v3049, %v3145
        %v3157 = vmul.f32 %v3051, %v3147
        %v3158 = vmul.f32 %v3090, %v3149
        %v3159 = vmul.f32 %v3092, %v3151
        %v3160 = vpack.c.bf16 %v3152, %v3152
        %v3161 = vpack.c.bf16 %v3153, %v3153
        %v3162 = vpack.c.bf16 %v3154, %v3154
        %v3163 = vpack.c.bf16 %v3155, %v3155
        %v3164 = vpack.c.bf16 %v3156, %v3156
        %v3165 = vpack.c.bf16 %v3157, %v3157
        %v3166 = vpack.c.bf16 %v3158, %v3158
        %v3167 = vpack.c.bf16 %v3159, %v3159
        %v3168 = vld [vmem:[#allocation13] sm:$0xff]
        %v3169 = vld [vmem:[#allocation13 + $0x8] sm:$0xff]
        %v3170 = vld [vmem:[#allocation13 + $0x10] sm:$0xff]
        %v3171 = vld [vmem:[#allocation13 + $0x18] sm:$0xff]
        %v3172 = vld [vmem:[#allocation13 + $0x20] sm:$0xff]
        %v3173 = vld [vmem:[#allocation13 + $0x28] sm:$0xff]
        %v3174 = vld [vmem:[#allocation13 + $0x30] sm:$0xff]
        %v3175 = vld [vmem:[#allocation13 + $0x38] sm:$0xff]
        %v3176 = vld [vmem:[#allocation13 + $0x40] sm:$0xff]
        %v3177 = vld [vmem:[#allocation13 + $0x48] sm:$0xff]
        %v3178 = vld [vmem:[#allocation13 + $0x50] sm:$0xff]
        %v3179 = vld [vmem:[#allocation13 + $0x58] sm:$0xff]
        %v3180 = vld [vmem:[#allocation13 + $0x60] sm:$0xff]
        %v3181 = vld [vmem:[#allocation13 + $0x68] sm:$0xff]
        %v3182 = vld [vmem:[#allocation13 + $0x70] sm:$0xff]
        %v3183 = vld [vmem:[#allocation13 + $0x78] sm:$0xff]
        %v3184 = vld [vmem:[#allocation13 + $0x80] sm:$0xff]
        %v3185 = vld [vmem:[#allocation13 + $0x88] sm:$0xff]
        %v3186 = vld [vmem:[#allocation13 + $0x90] sm:$0xff]
        %v3187 = vld [vmem:[#allocation13 + $0x98] sm:$0xff]
        %v3188 = vld [vmem:[#allocation13 + $0xa0] sm:$0xff]
        %v3189 = vld [vmem:[#allocation13 + $0xa8] sm:$0xff]
        %v3190 = vld [vmem:[#allocation13 + $0xb0] sm:$0xff]
        %v3191 = vld [vmem:[#allocation13 + $0xb8] sm:$0xff]
        %v3192 = vld [vmem:[#allocation13 + $0xc0] sm:$0xff]
        %v3193 = vld [vmem:[#allocation13 + $0xc8] sm:$0xff]
        %v3194 = vld [vmem:[#allocation13 + $0xd0] sm:$0xff]
        %v3195 = vld [vmem:[#allocation13 + $0xd8] sm:$0xff]
        %v3196 = vld [vmem:[#allocation13 + $0xe0] sm:$0xff]
        %v3197 = vld [vmem:[#allocation13 + $0xe8] sm:$0xff]
        %v3198 = vld [vmem:[#allocation13 + $0xf0] sm:$0xff]
        %v3199 = vld [vmem:[#allocation13 + $0xf8] sm:$0xff]
        %v3200 = vld [vmem:[#allocation13 + $0x100] sm:$0xff]
        %v3201 = vld [vmem:[#allocation13 + $0x108] sm:$0xff]
        %v3202 = vld [vmem:[#allocation13 + $0x110] sm:$0xff]
        %v3203 = vld [vmem:[#allocation13 + $0x118] sm:$0xff]
        %v3204 = vld [vmem:[#allocation13 + $0x120] sm:$0xff]
        %v3205 = vld [vmem:[#allocation13 + $0x128] sm:$0xff]
        %v3206 = vld [vmem:[#allocation13 + $0x130] sm:$0xff]
        %v3207 = vld [vmem:[#allocation13 + $0x138] sm:$0xff]
        %v3208 = vld [vmem:[#allocation13 + $0x140] sm:$0xff]
        %v3209 = vld [vmem:[#allocation13 + $0x148] sm:$0xff]
        %v3210 = vld [vmem:[#allocation13 + $0x150] sm:$0xff]
        %v3211 = vld [vmem:[#allocation13 + $0x158] sm:$0xff]
        %v3212 = vld [vmem:[#allocation13 + $0x160] sm:$0xff]
        %v3213 = vld [vmem:[#allocation13 + $0x168] sm:$0xff]
        %v3214 = vld [vmem:[#allocation13 + $0x170] sm:$0xff]
        %v3215 = vld [vmem:[#allocation13 + $0x178] sm:$0xff]
        %v3216 = vld [vmem:[#allocation13 + $0x180] sm:$0xff]
        %v3217 = vld [vmem:[#allocation13 + $0x188] sm:$0xff]
        %v3218 = vld [vmem:[#allocation13 + $0x190] sm:$0xff]
        %v3219 = vld [vmem:[#allocation13 + $0x198] sm:$0xff]
        %v3220 = vld [vmem:[#allocation13 + $0x1a0] sm:$0xff]
        %v3221 = vld [vmem:[#allocation13 + $0x1a8] sm:$0xff]
        %v3222 = vld [vmem:[#allocation13 + $0x1b0] sm:$0xff]
        %v3223 = vld [vmem:[#allocation13 + $0x1b8] sm:$0xff]
        %v3224 = vld [vmem:[#allocation13 + $0x1c0] sm:$0xff]
        %v3225 = vld [vmem:[#allocation13 + $0x1c8] sm:$0xff]
        %v3226 = vld [vmem:[#allocation13 + $0x1d0] sm:$0xff]
        %v3227 = vld [vmem:[#allocation13 + $0x1d8] sm:$0xff]
        %v3228 = vld [vmem:[#allocation13 + $0x1e0] sm:$0xff]
        %v3229 = vld [vmem:[#allocation13 + $0x1e8] sm:$0xff]
        %v3230 = vld [vmem:[#allocation13 + $0x1f0] sm:$0xff]
        %v3231 = vld [vmem:[#allocation13 + $0x1f8] sm:$0xff]
        %v3232 = vld [vmem:[#allocation13 + $0x200] sm:$0xff]
        %v3233 = vld [vmem:[#allocation13 + $0x208] sm:$0xff]
        %v3234 = vld [vmem:[#allocation13 + $0x210] sm:$0xff]
        %v3235 = vld [vmem:[#allocation13 + $0x218] sm:$0xff]
        %v3236 = vld [vmem:[#allocation13 + $0x220] sm:$0xff]
        %v3237 = vld [vmem:[#allocation13 + $0x228] sm:$0xff]
        %v3238 = vld [vmem:[#allocation13 + $0x230] sm:$0xff]
        %v3239 = vld [vmem:[#allocation13 + $0x238] sm:$0xff]
        %v3240 = vld [vmem:[#allocation13 + $0x240] sm:$0xff]
        %v3241 = vld [vmem:[#allocation13 + $0x248] sm:$0xff]
        %v3242 = vld [vmem:[#allocation13 + $0x250] sm:$0xff]
        %v3243 = vld [vmem:[#allocation13 + $0x258] sm:$0xff]
        %v3244 = vld [vmem:[#allocation13 + $0x260] sm:$0xff]
        %v3245 = vld [vmem:[#allocation13 + $0x268] sm:$0xff]
        %v3246 = vld [vmem:[#allocation13 + $0x270] sm:$0xff]
        %v3247 = vld [vmem:[#allocation13 + $0x278] sm:$0xff]
        %v3248 = vld [vmem:[#allocation13 + $0x280] sm:$0xff]
        %v3249 = vld [vmem:[#allocation13 + $0x288] sm:$0xff]
        %v3250 = vld [vmem:[#allocation13 + $0x290] sm:$0xff]
        %v3251 = vld [vmem:[#allocation13 + $0x298] sm:$0xff]
        %v3252 = vld [vmem:[#allocation13 + $0x2a0] sm:$0xff]
        %v3253 = vld [vmem:[#allocation13 + $0x2a8] sm:$0xff]
        %v3254 = vld [vmem:[#allocation13 + $0x2b0] sm:$0xff]
        %v3255 = vld [vmem:[#allocation13 + $0x2b8] sm:$0xff]
        %v3256 = vld [vmem:[#allocation13 + $0x2c0] sm:$0xff]
        %v3257 = vld [vmem:[#allocation13 + $0x2c8] sm:$0xff]
        %v3258 = vld [vmem:[#allocation13 + $0x2d0] sm:$0xff]
        %v3259 = vld [vmem:[#allocation13 + $0x2d8] sm:$0xff]
        %v3260 = vld [vmem:[#allocation13 + $0x2e0] sm:$0xff]
        %v3261 = vld [vmem:[#allocation13 + $0x2e8] sm:$0xff]
        %v3262 = vld [vmem:[#allocation13 + $0x2f0] sm:$0xff]
        %v3263 = vld [vmem:[#allocation13 + $0x2f8] sm:$0xff]
        %v3264 = vld [vmem:[#allocation13 + $0x300] sm:$0xff]
        %v3265 = vld [vmem:[#allocation13 + $0x308] sm:$0xff]
        %v3266 = vld [vmem:[#allocation13 + $0x310] sm:$0xff]
        %v3267 = vld [vmem:[#allocation13 + $0x318] sm:$0xff]
        %v3268 = vld [vmem:[#allocation13 + $0x320] sm:$0xff]
        %v3269 = vld [vmem:[#allocation13 + $0x328] sm:$0xff]
        %v3270 = vld [vmem:[#allocation13 + $0x330] sm:$0xff]
        %v3271 = vld [vmem:[#allocation13 + $0x338] sm:$0xff]
        %v3272 = vld [vmem:[#allocation13 + $0x340] sm:$0xff]
        %v3273 = vld [vmem:[#allocation13 + $0x348] sm:$0xff]
        %v3274 = vld [vmem:[#allocation13 + $0x350] sm:$0xff]
        %v3275 = vld [vmem:[#allocation13 + $0x358] sm:$0xff]
        %v3276 = vld [vmem:[#allocation13 + $0x360] sm:$0xff]
        %v3277 = vld [vmem:[#allocation13 + $0x368] sm:$0xff]
        %v3278 = vld [vmem:[#allocation13 + $0x370] sm:$0xff]
        %v3279 = vld [vmem:[#allocation13 + $0x378] sm:$0xff]
        %v3280 = vld [vmem:[#allocation13 + $0x380] sm:$0xff]
        %v3281 = vld [vmem:[#allocation13 + $0x388] sm:$0xff]
        %v3282 = vld [vmem:[#allocation13 + $0x390] sm:$0xff]
        %v3283 = vld [vmem:[#allocation13 + $0x398] sm:$0xff]
        %v3284 = vld [vmem:[#allocation13 + $0x3a0] sm:$0xff]
        %v3285 = vld [vmem:[#allocation13 + $0x3a8] sm:$0xff]
        %v3286 = vld [vmem:[#allocation13 + $0x3b0] sm:$0xff]
        %v3287 = vld [vmem:[#allocation13 + $0x3b8] sm:$0xff]
        %v3288 = vld [vmem:[#allocation13 + $0x3c0] sm:$0xff]
        %v3289 = vld [vmem:[#allocation13 + $0x3c8] sm:$0xff]
        %v3290 = vld [vmem:[#allocation13 + $0x3d0] sm:$0xff]
        %v3291 = vld [vmem:[#allocation13 + $0x3d8] sm:$0xff]
        %v3292 = vld [vmem:[#allocation13 + $0x3e0] sm:$0xff]
        %v3293 = vld [vmem:[#allocation13 + $0x3e8] sm:$0xff]
        %v3294 = vld [vmem:[#allocation13 + $0x3f0] sm:$0xff]
        %v3295 = vld [vmem:[#allocation13 + $0x3f8] sm:$0xff]
        %v3296 = vld [vmem:[%s12] sm:$0x3]
        %v3298 = vlaneseq
        %v3299 = vshrl.u32 %v3298, 7
        %v3300 = vsub.s32 0, %v3299
        %v3301 = vrot.slane %v3296, %v3300
        %v3302 = vlaneseq
        %v3303 = vshrl.u32 %v3302, 7
        %v3304 = vsub.s32 1, %v3303
        %v3305 = vrot.slane %v3296, %v3304
        %v3436 = vunpack.c.l.b16 %v3168
        %v3437 = vunpack.c.h.b16 %v3168
        %v3438 = vunpack.c.l.b16 %v3169
        %v3439 = vunpack.c.h.b16 %v3169
        %v3440 = vunpack.c.l.b16 %v3170
        %v3441 = vunpack.c.h.b16 %v3170
        %v3442 = vunpack.c.l.b16 %v3171
        %v3443 = vunpack.c.h.b16 %v3171
        %v3444 = vunpack.c.l.b16 %v3172
        %v3445 = vunpack.c.h.b16 %v3172
        %v3446 = vunpack.c.l.b16 %v3173
        %v3447 = vunpack.c.h.b16 %v3173
        %v3448 = vunpack.c.l.b16 %v3174
        %v3449 = vunpack.c.h.b16 %v3174
        %v3450 = vunpack.c.l.b16 %v3175
        %v3451 = vunpack.c.h.b16 %v3175
        %v3452 = vunpack.c.l.b16 %v3176
        %v3453 = vunpack.c.h.b16 %v3176
        %v3454 = vunpack.c.l.b16 %v3177
        %v3455 = vunpack.c.h.b16 %v3177
        %v3456 = vunpack.c.l.b16 %v3178
        %v3457 = vunpack.c.h.b16 %v3178
        %v3458 = vunpack.c.l.b16 %v3179
        %v3459 = vunpack.c.h.b16 %v3179
        %v3460 = vunpack.c.l.b16 %v3180
        %v3461 = vunpack.c.h.b16 %v3180
        %v3462 = vunpack.c.l.b16 %v3181
        %v3463 = vunpack.c.h.b16 %v3181
        %v3464 = vunpack.c.l.b16 %v3182
        %v3465 = vunpack.c.h.b16 %v3182
        %v3466 = vunpack.c.l.b16 %v3183
        %v3467 = vunpack.c.h.b16 %v3183
        %v3468 = vunpack.c.l.b16 %v3184
        %v3469 = vunpack.c.h.b16 %v3184
        %v3470 = vunpack.c.l.b16 %v3185
        %v3471 = vunpack.c.h.b16 %v3185
        %v3472 = vunpack.c.l.b16 %v3186
        %v3473 = vunpack.c.h.b16 %v3186
        %v3474 = vunpack.c.l.b16 %v3187
        %v3475 = vunpack.c.h.b16 %v3187
        %v3476 = vunpack.c.l.b16 %v3188
        %v3477 = vunpack.c.h.b16 %v3188
        %v3478 = vunpack.c.l.b16 %v3189
        %v3479 = vunpack.c.h.b16 %v3189
        %v3480 = vunpack.c.l.b16 %v3190
        %v3481 = vunpack.c.h.b16 %v3190
        %v3482 = vunpack.c.l.b16 %v3191
        %v3483 = vunpack.c.h.b16 %v3191
        %v3484 = vunpack.c.l.b16 %v3192
        %v3485 = vunpack.c.h.b16 %v3192
        %v3486 = vunpack.c.l.b16 %v3193
        %v3487 = vunpack.c.h.b16 %v3193
        %v3488 = vunpack.c.l.b16 %v3194
        %v3489 = vunpack.c.h.b16 %v3194
        %v3490 = vunpack.c.l.b16 %v3195
        %v3491 = vunpack.c.h.b16 %v3195
        %v3492 = vunpack.c.l.b16 %v3196
        %v3493 = vunpack.c.h.b16 %v3196
        %v3494 = vunpack.c.l.b16 %v3197
        %v3495 = vunpack.c.h.b16 %v3197
        %v3496 = vunpack.c.l.b16 %v3198
        %v3497 = vunpack.c.h.b16 %v3198
        %v3498 = vunpack.c.l.b16 %v3199
        %v3499 = vunpack.c.h.b16 %v3199
        %v3500 = vunpack.c.l.b16 %v3200
        %v3501 = vunpack.c.h.b16 %v3200
        %v3502 = vunpack.c.l.b16 %v3201
        %v3503 = vunpack.c.h.b16 %v3201
        %v3504 = vunpack.c.l.b16 %v3202
        %v3505 = vunpack.c.h.b16 %v3202
        %v3506 = vunpack.c.l.b16 %v3203
        %v3507 = vunpack.c.h.b16 %v3203
        %v3508 = vunpack.c.l.b16 %v3204
        %v3509 = vunpack.c.h.b16 %v3204
        %v3510 = vunpack.c.l.b16 %v3205
        %v3511 = vunpack.c.h.b16 %v3205
        %v3512 = vunpack.c.l.b16 %v3206
        %v3513 = vunpack.c.h.b16 %v3206
        %v3514 = vunpack.c.l.b16 %v3207
        %v3515 = vunpack.c.h.b16 %v3207
        %v3516 = vunpack.c.l.b16 %v3208
        %v3517 = vunpack.c.h.b16 %v3208
        %v3518 = vunpack.c.l.b16 %v3209
        %v3519 = vunpack.c.h.b16 %v3209
        %v3520 = vunpack.c.l.b16 %v3210
        %v3521 = vunpack.c.h.b16 %v3210
        %v3522 = vunpack.c.l.b16 %v3211
        %v3523 = vunpack.c.h.b16 %v3211
        %v3524 = vunpack.c.l.b16 %v3212
        %v3525 = vunpack.c.h.b16 %v3212
        %v3526 = vunpack.c.l.b16 %v3213
        %v3527 = vunpack.c.h.b16 %v3213
        %v3528 = vunpack.c.l.b16 %v3214
        %v3529 = vunpack.c.h.b16 %v3214
        %v3530 = vunpack.c.l.b16 %v3215
        %v3531 = vunpack.c.h.b16 %v3215
        %v3532 = vunpack.c.l.b16 %v3216
        %v3533 = vunpack.c.h.b16 %v3216
        %v3534 = vunpack.c.l.b16 %v3217
        %v3535 = vunpack.c.h.b16 %v3217
        %v3536 = vunpack.c.l.b16 %v3218
        %v3537 = vunpack.c.h.b16 %v3218
        %v3538 = vunpack.c.l.b16 %v3219
        %v3539 = vunpack.c.h.b16 %v3219
        %v3540 = vunpack.c.l.b16 %v3220
        %v3541 = vunpack.c.h.b16 %v3220
        %v3542 = vunpack.c.l.b16 %v3221
        %v3543 = vunpack.c.h.b16 %v3221
        %v3544 = vunpack.c.l.b16 %v3222
        %v3545 = vunpack.c.h.b16 %v3222
        %v3546 = vunpack.c.l.b16 %v3223
        %v3547 = vunpack.c.h.b16 %v3223
        %v3548 = vunpack.c.l.b16 %v3224
        %v3549 = vunpack.c.h.b16 %v3224
        %v3550 = vunpack.c.l.b16 %v3225
        %v3551 = vunpack.c.h.b16 %v3225
        %v3552 = vunpack.c.l.b16 %v3226
        %v3553 = vunpack.c.h.b16 %v3226
        %v3554 = vunpack.c.l.b16 %v3227
        %v3555 = vunpack.c.h.b16 %v3227
        %v3556 = vunpack.c.l.b16 %v3228
        %v3557 = vunpack.c.h.b16 %v3228
        %v3558 = vunpack.c.l.b16 %v3229
        %v3559 = vunpack.c.h.b16 %v3229
        %v3560 = vunpack.c.l.b16 %v3230
        %v3561 = vunpack.c.h.b16 %v3230
        %v3562 = vunpack.c.l.b16 %v3231
        %v3563 = vunpack.c.h.b16 %v3231
        %v3564 = vunpack.c.l.b16 %v3232
        %v3565 = vunpack.c.h.b16 %v3232
        %v3566 = vunpack.c.l.b16 %v3233
        %v3567 = vunpack.c.h.b16 %v3233
        %v3568 = vunpack.c.l.b16 %v3234
        %v3569 = vunpack.c.h.b16 %v3234
        %v3570 = vunpack.c.l.b16 %v3235
        %v3571 = vunpack.c.h.b16 %v3235
        %v3572 = vunpack.c.l.b16 %v3236
        %v3573 = vunpack.c.h.b16 %v3236
        %v3574 = vunpack.c.l.b16 %v3237
        %v3575 = vunpack.c.h.b16 %v3237
        %v3576 = vunpack.c.l.b16 %v3238
        %v3577 = vunpack.c.h.b16 %v3238
        %v3578 = vunpack.c.l.b16 %v3239
        %v3579 = vunpack.c.h.b16 %v3239
        %v3580 = vunpack.c.l.b16 %v3240
        %v3581 = vunpack.c.h.b16 %v3240
        %v3582 = vunpack.c.l.b16 %v3241
        %v3583 = vunpack.c.h.b16 %v3241
        %v3584 = vunpack.c.l.b16 %v3242
        %v3585 = vunpack.c.h.b16 %v3242
        %v3586 = vunpack.c.l.b16 %v3243
        %v3587 = vunpack.c.h.b16 %v3243
        %v3588 = vunpack.c.l.b16 %v3244
        %v3589 = vunpack.c.h.b16 %v3244
        %v3590 = vunpack.c.l.b16 %v3245
        %v3591 = vunpack.c.h.b16 %v3245
        %v3592 = vunpack.c.l.b16 %v3246
        %v3593 = vunpack.c.h.b16 %v3246
        %v3594 = vunpack.c.l.b16 %v3247
        %v3595 = vunpack.c.h.b16 %v3247
        %v3596 = vunpack.c.l.b16 %v3248
        %v3597 = vunpack.c.h.b16 %v3248
        %v3598 = vunpack.c.l.b16 %v3249
        %v3599 = vunpack.c.h.b16 %v3249
        %v3600 = vunpack.c.l.b16 %v3250
        %v3601 = vunpack.c.h.b16 %v3250
        %v3602 = vunpack.c.l.b16 %v3251
        %v3603 = vunpack.c.h.b16 %v3251
        %v3604 = vunpack.c.l.b16 %v3252
        %v3605 = vunpack.c.h.b16 %v3252
        %v3606 = vunpack.c.l.b16 %v3253
        %v3607 = vunpack.c.h.b16 %v3253
        %v3608 = vunpack.c.l.b16 %v3254
        %v3609 = vunpack.c.h.b16 %v3254
        %v3610 = vunpack.c.l.b16 %v3255
        %v3611 = vunpack.c.h.b16 %v3255
        %v3612 = vunpack.c.l.b16 %v3256
        %v3613 = vunpack.c.h.b16 %v3256
        %v3614 = vunpack.c.l.b16 %v3257
        %v3615 = vunpack.c.h.b16 %v3257
        %v3616 = vunpack.c.l.b16 %v3258
        %v3617 = vunpack.c.h.b16 %v3258
        %v3618 = vunpack.c.l.b16 %v3259
        %v3619 = vunpack.c.h.b16 %v3259
        %v3620 = vunpack.c.l.b16 %v3260
        %v3621 = vunpack.c.h.b16 %v3260
        %v3622 = vunpack.c.l.b16 %v3261
        %v3623 = vunpack.c.h.b16 %v3261
        %v3624 = vunpack.c.l.b16 %v3262
        %v3625 = vunpack.c.h.b16 %v3262
        %v3626 = vunpack.c.l.b16 %v3263
        %v3627 = vunpack.c.h.b16 %v3263
        %v3628 = vunpack.c.l.b16 %v3264
        %v3629 = vunpack.c.h.b16 %v3264
        %v3630 = vunpack.c.l.b16 %v3265
        %v3631 = vunpack.c.h.b16 %v3265
        %v3632 = vunpack.c.l.b16 %v3266
        %v3633 = vunpack.c.h.b16 %v3266
        %v3634 = vunpack.c.l.b16 %v3267
        %v3635 = vunpack.c.h.b16 %v3267
        %v3636 = vunpack.c.l.b16 %v3268
        %v3637 = vunpack.c.h.b16 %v3268
        %v3638 = vunpack.c.l.b16 %v3269
        %v3639 = vunpack.c.h.b16 %v3269
        %v3640 = vunpack.c.l.b16 %v3270
        %v3641 = vunpack.c.h.b16 %v3270
        %v3642 = vunpack.c.l.b16 %v3271
        %v3643 = vunpack.c.h.b16 %v3271
        %v3644 = vunpack.c.l.b16 %v3272
        %v3645 = vunpack.c.h.b16 %v3272
        %v3646 = vunpack.c.l.b16 %v3273
        %v3647 = vunpack.c.h.b16 %v3273
        %v3648 = vunpack.c.l.b16 %v3274
        %v3649 = vunpack.c.h.b16 %v3274
        %v3650 = vunpack.c.l.b16 %v3275
        %v3651 = vunpack.c.h.b16 %v3275
        %v3652 = vunpack.c.l.b16 %v3276
        %v3653 = vunpack.c.h.b16 %v3276
        %v3654 = vunpack.c.l.b16 %v3277
        %v3655 = vunpack.c.h.b16 %v3277
        %v3656 = vunpack.c.l.b16 %v3278
        %v3657 = vunpack.c.h.b16 %v3278
        %v3658 = vunpack.c.l.b16 %v3279
        %v3659 = vunpack.c.h.b16 %v3279
        %v3660 = vunpack.c.l.b16 %v3280
        %v3661 = vunpack.c.h.b16 %v3280
        %v3662 = vunpack.c.l.b16 %v3281
        %v3663 = vunpack.c.h.b16 %v3281
        %v3664 = vunpack.c.l.b16 %v3282
        %v3665 = vunpack.c.h.b16 %v3282
        %v3666 = vunpack.c.l.b16 %v3283
        %v3667 = vunpack.c.h.b16 %v3283
        %v3668 = vunpack.c.l.b16 %v3284
        %v3669 = vunpack.c.h.b16 %v3284
        %v3670 = vunpack.c.l.b16 %v3285
        %v3671 = vunpack.c.h.b16 %v3285
        %v3672 = vunpack.c.l.b16 %v3286
        %v3673 = vunpack.c.h.b16 %v3286
        %v3674 = vunpack.c.l.b16 %v3287
        %v3675 = vunpack.c.h.b16 %v3287
        %v3676 = vunpack.c.l.b16 %v3288
        %v3677 = vunpack.c.h.b16 %v3288
        %v3678 = vunpack.c.l.b16 %v3289
        %v3679 = vunpack.c.h.b16 %v3289
        %v3680 = vunpack.c.l.b16 %v3290
        %v3681 = vunpack.c.h.b16 %v3290
        %v3682 = vunpack.c.l.b16 %v3291
        %v3683 = vunpack.c.h.b16 %v3291
        %v3684 = vunpack.c.l.b16 %v3292
        %v3685 = vunpack.c.h.b16 %v3292
        %v3686 = vunpack.c.l.b16 %v3293
        %v3687 = vunpack.c.h.b16 %v3293
        %v3688 = vunpack.c.l.b16 %v3294
        %v3689 = vunpack.c.h.b16 %v3294
        %v3690 = vunpack.c.l.b16 %v3295
        %v3691 = vunpack.c.h.b16 %v3295
        %v3692 = vpack.c.b16 %v3444, %v3436
        %v3693 = vpack.c.b16 %v3445, %v3437
        %v3694 = vpack.c.b16 %v3446, %v3438
        %v3695 = vpack.c.b16 %v3447, %v3439
        %v3696 = vpack.c.b16 %v3448, %v3440
        %v3697 = vpack.c.b16 %v3449, %v3441
        %v3698 = vpack.c.b16 %v3450, %v3442
        %v3699 = vpack.c.b16 %v3451, %v3443
        %v3700 = vpack.c.b16 %v3460, %v3452
        %v3701 = vpack.c.b16 %v3461, %v3453
        %v3702 = vpack.c.b16 %v3462, %v3454
        %v3703 = vpack.c.b16 %v3463, %v3455
        %v3704 = vpack.c.b16 %v3464, %v3456
        %v3705 = vpack.c.b16 %v3465, %v3457
        %v3706 = vpack.c.b16 %v3466, %v3458
        %v3707 = vpack.c.b16 %v3467, %v3459
        %v3708 = vpack.c.b16 %v3476, %v3468
        %v3709 = vpack.c.b16 %v3477, %v3469
        %v3710 = vpack.c.b16 %v3478, %v3470
        %v3711 = vpack.c.b16 %v3479, %v3471
        %v3712 = vpack.c.b16 %v3480, %v3472
        %v3713 = vpack.c.b16 %v3481, %v3473
        %v3714 = vpack.c.b16 %v3482, %v3474
        %v3715 = vpack.c.b16 %v3483, %v3475
        %v3716 = vpack.c.b16 %v3492, %v3484
        %v3717 = vpack.c.b16 %v3493, %v3485
        %v3718 = vpack.c.b16 %v3494, %v3486
        %v3719 = vpack.c.b16 %v3495, %v3487
        %v3720 = vpack.c.b16 %v3496, %v3488
        %v3721 = vpack.c.b16 %v3497, %v3489
        %v3722 = vpack.c.b16 %v3498, %v3490
        %v3723 = vpack.c.b16 %v3499, %v3491
        %v3724 = vpack.c.b16 %v3508, %v3500
        %v3725 = vpack.c.b16 %v3509, %v3501
        %v3726 = vpack.c.b16 %v3510, %v3502
        %v3727 = vpack.c.b16 %v3511, %v3503
        %v3728 = vpack.c.b16 %v3512, %v3504
        %v3729 = vpack.c.b16 %v3513, %v3505
        %v3730 = vpack.c.b16 %v3514, %v3506
        %v3731 = vpack.c.b16 %v3515, %v3507
        %v3732 = vpack.c.b16 %v3524, %v3516
        %v3733 = vpack.c.b16 %v3525, %v3517
        %v3734 = vpack.c.b16 %v3526, %v3518
        %v3735 = vpack.c.b16 %v3527, %v3519
        %v3736 = vpack.c.b16 %v3528, %v3520
        %v3737 = vpack.c.b16 %v3529, %v3521
        %v3738 = vpack.c.b16 %v3530, %v3522
        %v3739 = vpack.c.b16 %v3531, %v3523
        %v3740 = vpack.c.b16 %v3540, %v3532
        %v3741 = vpack.c.b16 %v3541, %v3533
        %v3742 = vpack.c.b16 %v3542, %v3534
        %v3743 = vpack.c.b16 %v3543, %v3535
        %v3744 = vpack.c.b16 %v3544, %v3536
        %v3745 = vpack.c.b16 %v3545, %v3537
        %v3746 = vpack.c.b16 %v3546, %v3538
        %v3747 = vpack.c.b16 %v3547, %v3539
        %v3748 = vpack.c.b16 %v3556, %v3548
        %v3749 = vpack.c.b16 %v3557, %v3549
        %v3750 = vpack.c.b16 %v3558, %v3550
        %v3751 = vpack.c.b16 %v3559, %v3551
        %v3752 = vpack.c.b16 %v3560, %v3552
        %v3753 = vpack.c.b16 %v3561, %v3553
        %v3754 = vpack.c.b16 %v3562, %v3554
        %v3755 = vpack.c.b16 %v3563, %v3555
        %v3756 = vpack.c.b16 %v3572, %v3564
        %v3757 = vpack.c.b16 %v3573, %v3565
        %v3758 = vpack.c.b16 %v3574, %v3566
        %v3759 = vpack.c.b16 %v3575, %v3567
        %v3760 = vpack.c.b16 %v3576, %v3568
        %v3761 = vpack.c.b16 %v3577, %v3569
        %v3762 = vpack.c.b16 %v3578, %v3570
        %v3763 = vpack.c.b16 %v3579, %v3571
        %v3764 = vpack.c.b16 %v3588, %v3580
        %v3765 = vpack.c.b16 %v3589, %v3581
        %v3766 = vpack.c.b16 %v3590, %v3582
        %v3767 = vpack.c.b16 %v3591, %v3583
        %v3768 = vpack.c.b16 %v3592, %v3584
        %v3769 = vpack.c.b16 %v3593, %v3585
        %v3770 = vpack.c.b16 %v3594, %v3586
        %v3771 = vpack.c.b16 %v3595, %v3587
        %v3772 = vpack.c.b16 %v3604, %v3596
        %v3773 = vpack.c.b16 %v3605, %v3597
        %v3774 = vpack.c.b16 %v3606, %v3598
        %v3775 = vpack.c.b16 %v3607, %v3599
        %v3776 = vpack.c.b16 %v3608, %v3600
        %v3777 = vpack.c.b16 %v3609, %v3601
        %v3778 = vpack.c.b16 %v3610, %v3602
        %v3779 = vpack.c.b16 %v3611, %v3603
        %v3780 = vpack.c.b16 %v3620, %v3612
        %v3781 = vpack.c.b16 %v3621, %v3613
        %v3782 = vpack.c.b16 %v3622, %v3614
        %v3783 = vpack.c.b16 %v3623, %v3615
        %v3784 = vpack.c.b16 %v3624, %v3616
        %v3785 = vpack.c.b16 %v3625, %v3617
        %v3786 = vpack.c.b16 %v3626, %v3618
        %v3787 = vpack.c.b16 %v3627, %v3619
        %v3788 = vpack.c.b16 %v3636, %v3628
        %v3789 = vpack.c.b16 %v3637, %v3629
        %v3790 = vpack.c.b16 %v3638, %v3630
        %v3791 = vpack.c.b16 %v3639, %v3631
        %v3792 = vpack.c.b16 %v3640, %v3632
        %v3793 = vpack.c.b16 %v3641, %v3633
        %v3794 = vpack.c.b16 %v3642, %v3634
        %v3795 = vpack.c.b16 %v3643, %v3635
        %v3796 = vpack.c.b16 %v3652, %v3644
        %v3797 = vpack.c.b16 %v3653, %v3645
        %v3798 = vpack.c.b16 %v3654, %v3646
        %v3799 = vpack.c.b16 %v3655, %v3647
        %v3800 = vpack.c.b16 %v3656, %v3648
        %v3801 = vpack.c.b16 %v3657, %v3649
        %v3802 = vpack.c.b16 %v3658, %v3650
        %v3803 = vpack.c.b16 %v3659, %v3651
        %v3804 = vpack.c.b16 %v3668, %v3660
        %v3805 = vpack.c.b16 %v3669, %v3661
        %v3806 = vpack.c.b16 %v3670, %v3662
        %v3807 = vpack.c.b16 %v3671, %v3663
        %v3808 = vpack.c.b16 %v3672, %v3664
        %v3809 = vpack.c.b16 %v3673, %v3665
        %v3810 = vpack.c.b16 %v3674, %v3666
        %v3811 = vpack.c.b16 %v3675, %v3667
        %v3812 = vpack.c.b16 %v3684, %v3676
        %v3813 = vpack.c.b16 %v3685, %v3677
        %v3814 = vpack.c.b16 %v3686, %v3678
        %v3815 = vpack.c.b16 %v3687, %v3679
        %v3816 = vpack.c.b16 %v3688, %v3680
        %v3817 = vpack.c.b16 %v3689, %v3681
        %v3818 = vpack.c.b16 %v3690, %v3682
        %v3819 = vpack.c.b16 %v3691, %v3683
        %3948 = vmatprep.subr.bf16.mxu0 %v3749
        %3949 = vmatpush1.bf16.xpose.msra.mxu0 %v3748
        %3950 = vmatprep.subr.bf16.mxu0 %v3741
        %3951 = vmatpush1.bf16.xpose.msra.mxu0 %v3740
        %3952 = vmatprep.subr.bf16.mxu0 %v3733
        %3953 = vmatpush1.bf16.xpose.msra.mxu0 %v3732
        %3954 = vmatprep.subr.bf16.mxu0 %v3725
        %3955 = vmatpush1.bf16.xpose.msra.mxu0 %v3724
        %3956 = vmatprep.subr.bf16.mxu0 %v3717
        %3957 = vmatpush1.bf16.xpose.msra.mxu0 %v3716
        %3958 = vmatprep.subr.bf16.mxu0 %v3709
        %3959 = vmatpush1.bf16.xpose.msra.mxu0 %v3708
        %3960 = vmatprep.subr.bf16.mxu0 %v3701
        %3961 = vmatpush1.bf16.xpose.msra.mxu0 %v3700
        %3962 = vmatprep.subr.bf16.mxu0 %v3693
        %3963 = vmatpush1.bf16.xpose.msra.mxu0 %v3692
        %3964 = vmatprep.subr.bf16.mxu0 %v3813
        %3965 = vmatpush2.bf16.xpose.msra.mxu0 %v3812
        %3966 = vmatprep.subr.bf16.mxu0 %v3805
        %3967 = vmatpush2.bf16.xpose.msra.mxu0 %v3804
        %3968 = vmatprep.subr.bf16.mxu0 %v3797
        %3969 = vmatpush2.bf16.xpose.msra.mxu0 %v3796
        %3970 = vmatprep.subr.bf16.mxu0 %v3789
        %3971 = vmatpush2.bf16.xpose.msra.mxu0 %v3788
        %3972 = vmatprep.subr.bf16.mxu0 %v3781
        %3973 = vmatpush2.bf16.xpose.msra.mxu0 %v3780
        %3974 = vmatprep.subr.bf16.mxu0 %v3773
        %3975 = vmatpush2.bf16.xpose.msra.mxu0 %v3772
        %3976 = vmatprep.subr.bf16.mxu0 %v3765
        %3977 = vmatpush2.bf16.xpose.msra.mxu0 %v3764
        %3978 = vmatprep.subr.bf16.mxu0 %v3757
        %3979 = vmatpush2.bf16.xpose.msra.mxu0 %v3756
        %3980 = vmatprep.mubr.bf16.mxu0 %v3161
        %3981 = vmatmul.mubr.bf16.gmra.mxu0 %v3160
        %v3982 = vpop.f32.mrf.mxu0
        %v3983 = vadd.f32 %v3301, %v3982
        %v3984 = vpop.f32.mrf.mxu0
        %v3985 = vadd.f32 %v3305, %v3984
        %v3986 = vpop.f32.mrf.mxu0
        %v3987 = vpop.f32.mrf.mxu0
        %3988 = vdwg.mxu0
        %3989 = vmatprep.subr.bf16.mxu0 %v3751
        %3990 = vmatpush1.bf16.xpose.msra.mxu0 %v3750
        %3991 = vmatprep.subr.bf16.mxu0 %v3743
        %3992 = vmatpush1.bf16.xpose.msra.mxu0 %v3742
        %3993 = vmatprep.subr.bf16.mxu0 %v3735
        %3994 = vmatpush1.bf16.xpose.msra.mxu0 %v3734
        %3995 = vmatprep.subr.bf16.mxu0 %v3727
        %3996 = vmatpush1.bf16.xpose.msra.mxu0 %v3726
        %3997 = vmatprep.subr.bf16.mxu0 %v3719
        %3998 = vmatpush1.bf16.xpose.msra.mxu0 %v3718
        %3999 = vmatprep.subr.bf16.mxu0 %v3711
        %4000 = vmatpush1.bf16.xpose.msra.mxu0 %v3710
        %4001 = vmatprep.subr.bf16.mxu0 %v3703
        %4002 = vmatpush1.bf16.xpose.msra.mxu0 %v3702
        %4003 = vmatprep.subr.bf16.mxu0 %v3695
        %4004 = vmatpush1.bf16.xpose.msra.mxu0 %v3694
        %4005 = vmatprep.subr.bf16.mxu0 %v3815
        %4006 = vmatpush2.bf16.xpose.msra.mxu0 %v3814
        %4007 = vmatprep.subr.bf16.mxu0 %v3807
        %4008 = vmatpush2.bf16.xpose.msra.mxu0 %v3806
        %4009 = vmatprep.subr.bf16.mxu0 %v3799
        %4010 = vmatpush2.bf16.xpose.msra.mxu0 %v3798
        %4011 = vmatprep.subr.bf16.mxu0 %v3791
        %4012 = vmatpush2.bf16.xpose.msra.mxu0 %v3790
        %4013 = vmatprep.subr.bf16.mxu0 %v3783
        %4014 = vmatpush2.bf16.xpose.msra.mxu0 %v3782
        %4015 = vmatprep.subr.bf16.mxu0 %v3775
        %4016 = vmatpush2.bf16.xpose.msra.mxu0 %v3774
        %4017 = vmatprep.subr.bf16.mxu0 %v3767
        %4018 = vmatpush2.bf16.xpose.msra.mxu0 %v3766
        %4019 = vmatprep.subr.bf16.mxu0 %v3759
        %4020 = vmatpush2.bf16.xpose.msra.mxu0 %v3758
        %4021 = vmatprep.mubr.bf16.mxu0 %v3163
        %4022 = vmatmul.mubr.bf16.gmra.mxu0 %v3162
        %v4023 = vpop.f32.mrf.mxu0
        %v4024 = vadd.f32 %v3983, %v4023
        %v4025 = vpop.f32.mrf.mxu0
        %v4026 = vadd.f32 %v3985, %v4025
        %v4027 = vpop.f32.mrf.mxu0
        %v4028 = vpop.f32.mrf.mxu0
        %4029 = vdwg.mxu0
        %4030 = vmatprep.subr.bf16.mxu0 %v3753
        %4031 = vmatpush1.bf16.xpose.msra.mxu0 %v3752
        %4032 = vmatprep.subr.bf16.mxu0 %v3745
        %4033 = vmatpush1.bf16.xpose.msra.mxu0 %v3744
        %4034 = vmatprep.subr.bf16.mxu0 %v3737
        %4035 = vmatpush1.bf16.xpose.msra.mxu0 %v3736
        %4036 = vmatprep.subr.bf16.mxu0 %v3729
        %4037 = vmatpush1.bf16.xpose.msra.mxu0 %v3728
        %4038 = vmatprep.subr.bf16.mxu0 %v3721
        %4039 = vmatpush1.bf16.xpose.msra.mxu0 %v3720
        %4040 = vmatprep.subr.bf16.mxu0 %v3713
        %4041 = vmatpush1.bf16.xpose.msra.mxu0 %v3712
        %4042 = vmatprep.subr.bf16.mxu0 %v3705
        %4043 = vmatpush1.bf16.xpose.msra.mxu0 %v3704
        %4044 = vmatprep.subr.bf16.mxu0 %v3697
        %4045 = vmatpush1.bf16.xpose.msra.mxu0 %v3696
        %4046 = vmatprep.subr.bf16.mxu0 %v3817
        %4047 = vmatpush2.bf16.xpose.msra.mxu0 %v3816
        %4048 = vmatprep.subr.bf16.mxu0 %v3809
        %4049 = vmatpush2.bf16.xpose.msra.mxu0 %v3808
        %4050 = vmatprep.subr.bf16.mxu0 %v3801
        %4051 = vmatpush2.bf16.xpose.msra.mxu0 %v3800
        %4052 = vmatprep.subr.bf16.mxu0 %v3793
        %4053 = vmatpush2.bf16.xpose.msra.mxu0 %v3792
        %4054 = vmatprep.subr.bf16.mxu0 %v3785
        %4055 = vmatpush2.bf16.xpose.msra.mxu0 %v3784
        %4056 = vmatprep.subr.bf16.mxu0 %v3777
        %4057 = vmatpush2.bf16.xpose.msra.mxu0 %v3776
        %4058 = vmatprep.subr.bf16.mxu0 %v3769
        %4059 = vmatpush2.bf16.xpose.msra.mxu0 %v3768
        %4060 = vmatprep.subr.bf16.mxu0 %v3761
        %4061 = vmatpush2.bf16.xpose.msra.mxu0 %v3760
        %4062 = vmatprep.mubr.bf16.mxu0 %v3165
        %4063 = vmatmul.mubr.bf16.gmra.mxu0 %v3164
        %v4064 = vpop.f32.mrf.mxu0
        %v4065 = vadd.f32 %v4024, %v4064
        %v4066 = vpop.f32.mrf.mxu0
        %v4067 = vadd.f32 %v4026, %v4066
        %v4068 = vpop.f32.mrf.mxu0
        %v4069 = vpop.f32.mrf.mxu0
        %4070 = vdwg.mxu0
        %4071 = vmatprep.subr.bf16.mxu0 %v3755
        %4072 = vmatpush1.bf16.xpose.msra.mxu0 %v3754
        %4073 = vmatprep.subr.bf16.mxu0 %v3747
        %4074 = vmatpush1.bf16.xpose.msra.mxu0 %v3746
        %4075 = vmatprep.subr.bf16.mxu0 %v3739
        %4076 = vmatpush1.bf16.xpose.msra.mxu0 %v3738
        %4077 = vmatprep.subr.bf16.mxu0 %v3731
        %4078 = vmatpush1.bf16.xpose.msra.mxu0 %v3730
        %4079 = vmatprep.subr.bf16.mxu0 %v3723
        %4080 = vmatpush1.bf16.xpose.msra.mxu0 %v3722
        %4081 = vmatprep.subr.bf16.mxu0 %v3715
        %4082 = vmatpush1.bf16.xpose.msra.mxu0 %v3714
        %4083 = vmatprep.subr.bf16.mxu0 %v3707
        %4084 = vmatpush1.bf16.xpose.msra.mxu0 %v3706
        %4085 = vmatprep.subr.bf16.mxu0 %v3699
        %4086 = vmatpush1.bf16.xpose.msra.mxu0 %v3698
        %4087 = vmatprep.subr.bf16.mxu0 %v3819
        %4088 = vmatpush2.bf16.xpose.msra.mxu0 %v3818
        %4089 = vmatprep.subr.bf16.mxu0 %v3811
        %4090 = vmatpush2.bf16.xpose.msra.mxu0 %v3810
        %4091 = vmatprep.subr.bf16.mxu0 %v3803
        %4092 = vmatpush2.bf16.xpose.msra.mxu0 %v3802
        %4093 = vmatprep.subr.bf16.mxu0 %v3795
        %4094 = vmatpush2.bf16.xpose.msra.mxu0 %v3794
        %4095 = vmatprep.subr.bf16.mxu0 %v3787
        %4096 = vmatpush2.bf16.xpose.msra.mxu0 %v3786
        %4097 = vmatprep.subr.bf16.mxu0 %v3779
        %4098 = vmatpush2.bf16.xpose.msra.mxu0 %v3778
        %4099 = vmatprep.subr.bf16.mxu0 %v3771
        %4100 = vmatpush2.bf16.xpose.msra.mxu0 %v3770
        %4101 = vmatprep.subr.bf16.mxu0 %v3763
        %4102 = vmatpush2.bf16.xpose.msra.mxu0 %v3762
        %4103 = vmatprep.mubr.bf16.mxu0 %v3167
        %4104 = vmatmul.mubr.bf16.gmra.mxu0 %v3166
        %v4105 = vpop.f32.mrf.mxu0
        %v4106 = vadd.f32 %v4065, %v4105
        %v4107 = vpop.f32.mrf.mxu0
        %v4108 = vadd.f32 %v4067, %v4107
        %v4109 = vpop.f32.mrf.mxu0
        %v4110 = vpop.f32.mrf.mxu0
        %4111 = vdwg.mxu0
        %v4112 = vadd.f32 %v2074, %v4106
        %v4113 = vadd.f32 %v2075, %v4108
        %4114 = vst [vmem:[%s539] sm:$0xff] %v4112
        %4115 = vst [vmem:[%s539 + $0x8] sm:$0xff] %v4113
        %s4116 = sand.u32 %s319, 1
        %s4117 = scalar_lea.sflag [#allocation4], %s4116
        %s4118 = sand.u32 %s319, 1
        %s4119 = smul.addr %s4118, 16
        %s4120 = scalar_lea.vmem [#allocation14], %s4119
        // Predicated region
        $region101: #{tpu_custom_call.1} parent=71 // pred_check
          %p4121 = pneg %p329
        $region102: #{tpu_custom_call.1} parent=71 // pred_check_branch
          %4123 = sbr.rel (%p4121) target = $region104
        $region103: #{tpu_custom_call.1} parent=71 // pred_region
          %s4125 = ssub.s32 256, 256
          %4126 = vsyncadd %s4117, %s4125
          %s4127 = smul.addr %s33, 2
          %s4128 = smul.addr %s4127, 128
          %s4129 = scalar_lea.hbm %s13, %s4128
          %s4131 = sshll.u32 %s4120, 4
          %s4132 = int_to_ptr.vmem [resolvable:$true] %s4131
          %4134 = dma.vmem_to_hbm [thread:$0]  %s4132, 256, %s4129, %s4117
        $region104: #{tpu_custom_call.1} parent=71 // pred_fallthru
          _
      $region72: #{tpu_custom_call.1} parent=5 // pred_fallthru
        _
      %p4135 = scmp.le.s32.totalorder 2, %s28
      // Predicated region
      $region105: #{tpu_custom_call.1} parent=5 // pred_check
        %p4136 = pneg %p4135
      $region106: #{tpu_custom_call.1} parent=5 // pred_check_branch
        %4138 = sbr.rel (%p4136) target = $region108
      $region107: #{tpu_custom_call.1} parent=5 // pred_region
        %s4139 = ssub.s32 %s28, 2
        // Predicated region
        $region109: #{tpu_custom_call.1} parent=107 // pred_check
          %p4140 = pneg %p335
        $region110: #{tpu_custom_call.1} parent=107 // pred_check_branch
          %4142 = sbr.rel (%p4140) target = $region112
        $region111: #{tpu_custom_call.1} parent=107 // pred_region
          %s4143 = sand.u32 %s320, 1
          %s4144 = scalar_lea.sflag [#allocation4], %s4143
          %s4145 = sand.u32 %s320, 1
          %s4146 = smul.addr %s4145, 16
          %s4147 = scalar_lea.vmem [#allocation14], %s4146
          %4148 = dma.done %s4144, 256
        $region112: #{tpu_custom_call.1} parent=107 // pred_fallthru
          _
      $region108: #{tpu_custom_call.1} parent=5 // pred_fallthru
        _
    $region6: #{tpu_custom_call.1} parent=1 // loop_footer
      %s32 = sadd.s32 1, %s28
    $region7: #{tpu_custom_call.1} parent=1 // loop_footer_branch
      %27 = sbr.rel target = $region3
    $region8: #{tpu_custom_call.1} parent=1 // loop_exit
      _
    %4149 = vsyncpa [#allocation3], 1
    %s4150 = scalar_lea.sflag [#allocation3], 1
    %4151 = vsyncpa %s4150, 1
    %4152 = vsyncpa [#allocation6], 1
    %4153 = vsyncpa [#allocation9], 1
    %4154 = vsyncpa [#allocation12], 1
    %4155 = vsyncpa [#allocation4], 1
    %s4156 = scalar_lea.sflag [#allocation4], 1
    %4157 = vsyncpa %s4156, 1

</llo_original>
